<compile_context>
chip_gen: v7x
topology: tpu7x:2x2x1
jax: 0.10.0
libtpu: 0.0.40
codegen_flags: <defaults>
</compile_context>

<pallas_src>
import functools

import jax
import jax.numpy as jnp
from jax.experimental import pallas as pl
from jax.experimental.pallas import tpu as pltpu

_LANE = 128
_SUBLANE = 8


def _round_up(x, m):
    return ((x + m - 1) // m) * m


def make_qnetwork_kernel(num_hidden_layers: int):
    """Kernel: input_layer -> ReLU -> (hidden -> ReLU)*k -> final linear."""

    def kernel(*refs):
        # refs: x, W_in, b_in, [W_h0, b_h0, ...], W_out, b_out, out
        x_ref = refs[0]
        w_in_ref, b_in_ref = refs[1], refs[2]
        idx = 3

        # input layer + ReLU (MXU matmul, f32 accumulate; VPU max)
        h = jnp.dot(x_ref[...], w_in_ref[...], preferred_element_type=jnp.float32)
        h = jnp.maximum(h + b_in_ref[...], 0.0)

        # hidden layers + ReLU (static Python loop -> fully unrolled; fine for 1-2 layers)
        for _ in range(num_hidden_layers):
            w_ref, b_ref = refs[idx], refs[idx + 1]
            idx += 2
            h = jnp.dot(h, w_ref[...], preferred_element_type=jnp.float32)
            h = jnp.maximum(h + b_ref[...], 0.0)

        # final linear
        w_out_ref, b_out_ref = refs[idx], refs[idx + 1]
        o_ref = refs[idx + 2]
        q = jnp.dot(h, w_out_ref[...], preferred_element_type=jnp.float32) + b_out_ref[...]
        o_ref[...] = q.astype(o_ref.dtype)

    return kernel


def init_qnetwork_params(key, state_size, action_size, num_layers=1, hidden_size=64,
                         dtype=jnp.float32):
    """Deterministic init mimicking PyTorch nn.Linear default (U[-1/sqrt(fan_in), +])."""
    params = []

    def linear(key, fan_in, fan_out):
        kw, kb = jax.random.split(key)
        bound = 1.0 / jnp.sqrt(fan_in)
        w = jax.random.uniform(kw, (fan_in, fan_out), dtype, -bound, bound)
        b = jax.random.uniform(kb, (1, fan_out), dtype, -bound, bound)
        return w, b

    keys = jax.random.split(key, num_layers + 1)
    params.extend(linear(keys[0], state_size, hidden_size))            # input layer
    for i in range(num_layers - 1):                                    # hidden layers
        params.extend(linear(keys[1 + i], hidden_size, hidden_size))
    params.extend(linear(keys[num_layers], hidden_size, action_size))  # final
    return params


def qnetwork_forward(state, params, num_layers, *, block_batch=1024, lane_pad_output=None):
    """Whole MLP in one Pallas call: batch-tiled grid, weights VMEM-resident."""
    batch, state_size = state.shape
    hidden_size = params[0].shape[-1]
    action_size = params[-1].shape[-1]
    num_hidden = num_layers - 1

    # --- output layout: lane-padded (unmasked stores) for moderate batches, exact width
    #     (masked stores, far fewer HBM write bytes) for very large batches. ---
    if lane_pad_output is None:
        lane_pad_output = batch < 16384
    out_cols = _round_up(action_size, _LANE) if lane_pad_output else action_size

    # --- pad hidden dim to a full 128-lane register; math is unchanged. ---
    hidden_pad = _round_up(hidden_size, _LANE)
    dh = hidden_pad - hidden_size
    dout = out_cols - action_size

    padded_params = []
    w_in, b_in = params[0], params[1]
    if dh:
        w_in = jnp.pad(w_in, ((0, 0), (0, dh)))
        b_in = jnp.pad(b_in, ((0, 0), (0, dh)))
    padded_params += [w_in, b_in]
    for i in range(num_hidden):
        w, b = params[2 + 2 * i], params[3 + 2 * i]
        if dh:
            w = jnp.pad(w, ((0, dh), (0, dh)))
            b = jnp.pad(b, ((0, 0), (0, dh)))
        padded_params += [w, b]
    w_out, b_out = params[-2], params[-1]
    if dh or dout:
        w_out = jnp.pad(w_out, ((0, dh), (0, dout)))
        b_out = jnp.pad(b_out, ((0, 0), (0, dout)))
    padded_params += [w_out, b_out]

    # --- batch tiling: pad only to the 8-row sublane; let Pallas edge-mask the last
    #     partial block instead of padding the batch to a multiple of TB. ---
    padded_batch = _round_up(max(batch, 1), _SUBLANE)
    if padded_batch != batch:
        state = jnp.pad(state, ((0, padded_batch - batch), (0, 0)))

    tb = block_batch
    if padded_batch >= 16 * block_batch:       # very large batches: amortize per-step overhead
        tb = 2 * block_batch
    # Guarantee >=2 grid steps whenever the batch allows it (v7x megacore sharding).
    tb = min(tb, _round_up(pl.cdiv(padded_batch, 2), _SUBLANE))
    tb = max(_SUBLANE, _round_up(tb, _SUBLANE))
    num_blocks = pl.cdiv(padded_batch, tb)
    grid = (num_blocks,)

    kernel = make_qnetwork_kernel(num_hidden)

    # Activation tile streams per step; weights/biases pinned via constant index_map
    # (Pallas skips re-issuing their DMAs since the block index never changes).
    x_spec = pl.BlockSpec((tb, state_size), lambda i: (i, 0))
    param_specs = [pl.BlockSpec(p.shape, lambda i: (0, 0)) for p in padded_params]
    out_spec = pl.BlockSpec((tb, out_cols), lambda i: (i, 0))

    itemsize = jnp.dtype(state.dtype).itemsize
    flops = 2 * num_blocks * tb * (
        state_size * hidden_pad
        + num_hidden * hidden_pad * hidden_pad
        + hidden_pad * out_cols
    )
    bytes_accessed = (
        padded_batch * state_size * itemsize
        + sum(int(p.size) * jnp.dtype(p.dtype).itemsize for p in padded_params)
        + padded_batch * out_cols * itemsize
    )

    out = pl.pallas_call(
        kernel,
        out_shape=jax.ShapeDtypeStruct((padded_batch, out_cols), state.dtype),
        grid=grid,
        in_specs=[x_spec] + param_specs,
        out_specs=out_spec,
        compiler_params=pltpu.CompilerParams(
            dimension_semantics=("parallel",),  # v7x: shard the batch grid across both TCs
        ),
        cost_estimate=pl.CostEstimate(
            flops=flops, bytes_accessed=bytes_accessed, transcendentals=0
        ),
    )(state, *padded_params)

    return out[:batch, :action_size]


def qnetwork_forward_ref(state, params):
    """Pure-JAX reference matching the PyTorch forward."""
    w_in, b_in = params[0], params[1]
    x = jnp.maximum(state @ w_in + b_in, 0.0)
    for i in range(2, len(params) - 2, 2):
        x = jnp.maximum(x @ params[i] + params[i + 1], 0.0)
    return x @ params[-2] + params[-1]


if __name__ == "__main__":
    # Forward-implied shapes: state (B, state_size) -> q-values (B, action_size).
    state_size = 8
    action_size = 4
    hidden_size = 64
    num_layers = 2  # input layer + 1 hidden layer + final

    key = jax.random.PRNGKey(0)
    k_params, k_state_big, k_state_small = jax.random.split(key, 3)

    params = init_qnetwork_params(k_params, state_size, action_size,
                                  num_layers=num_layers, hidden_size=hidden_size)

    fwd = jax.jit(functools.partial(qnetwork_forward, num_layers=num_layers))

    # Batched case: batch not a multiple of 8 or the tile -> exercises the sublane pad,
    # the 3-step grid (TB=1024), and the masked partial last block.
    batch_big = 2500
    state_big = jax.random.normal(k_state_big, (batch_big, state_size), dtype=jnp.float32)
    q_big = fwd(state_big, params)
    jax.block_until_ready(q_big)
    q_big_ref = qnetwork_forward_ref(state_big, params)
    assert q_big.shape == (batch_big, action_size)
    assert jnp.allclose(q_big, q_big_ref, atol=1e-4, rtol=1e-4), "mismatch (batched)"

    # Small single-agent-style case with the exact-width (masked-store) output path.
    batch_small = 5
    fwd_small = jax.jit(functools.partial(qnetwork_forward, num_layers=num_layers,
                                          lane_pad_output=False))
    state_small = jax.random.normal(k_state_small, (batch_small, state_size), dtype=jnp.float32)
    q_small = fwd_small(state_small, params)
    jax.block_until_ready(q_small)
    q_small_ref = qnetwork_forward_ref(state_small, params)
    assert q_small.shape == (batch_small, action_size)
    assert jnp.allclose(q_small, q_small_ref, atol=1e-4, rtol=1e-4), "mismatch (small)"

    print("KERNEL_OK")
</pallas_src>

<mosaic_0001>
module attributes {stable_mosaic.version = 11 : i64} {
  func.func @kernel(%arg0: i32, %arg1: memref<1024x8xf32, #tpu.memory_space<vmem>>, %arg2: memref<8x128xf32, #tpu.memory_space<vmem>>, %arg3: memref<1x128xf32, #tpu.memory_space<vmem>>, %arg4: memref<128x128xf32, #tpu.memory_space<vmem>>, %arg5: memref<1x128xf32, #tpu.memory_space<vmem>>, %arg6: memref<128x128xf32, #tpu.memory_space<vmem>>, %arg7: memref<1x128xf32, #tpu.memory_space<vmem>>, %arg8: memref<1024x128xf32, #tpu.memory_space<vmem>>) attributes {dimension_semantics = [#tpu.dimension_semantics<parallel>], iteration_bounds = array<i64: 3>, scalar_prefetch = 0 : i64, scratch_operands = 0 : i64, tpu.core_type = #tpu.core_type<tc>, window_params = [{transform_indices = @transform_0, window_bounds = array<i64: 1024, 8>}, {pipeline_mode = #tpu.pipeline_mode<synchronous>, transform_indices = @transform_1, window_bounds = array<i64: 8, 128>}, {pipeline_mode = #tpu.pipeline_mode<synchronous>, transform_indices = @transform_2, window_bounds = array<i64: 1, 128>}, {pipeline_mode = #tpu.pipeline_mode<synchronous>, transform_indices = @transform_3, window_bounds = array<i64: 128, 128>}, {pipeline_mode = #tpu.pipeline_mode<synchronous>, transform_indices = @transform_4, window_bounds = array<i64: 1, 128>}, {pipeline_mode = #tpu.pipeline_mode<synchronous>, transform_indices = @transform_5, window_bounds = array<i64: 128, 128>}, {pipeline_mode = #tpu.pipeline_mode<synchronous>, transform_indices = @transform_6, window_bounds = array<i64: 1, 128>}, {transform_indices = @transform_7, window_bounds = array<i64: 1024, 128>}]} {
    %c0 = arith.constant 0 : index
    %c0_0 = arith.constant 0 : index
    %0 = vector.load %arg1[%c0, %c0_0] : memref<1024x8xf32, #tpu.memory_space<vmem>>, vector<1024x8xf32>
    %c0_1 = arith.constant 0 : index
    %c0_2 = arith.constant 0 : index
    %1 = vector.load %arg2[%c0_1, %c0_2] : memref<8x128xf32, #tpu.memory_space<vmem>>, vector<8x128xf32>
    %cst = arith.constant dense<0.000000e+00> : vector<1024x128xf32>
    %2 = tpu.matmul %0, %1, %cst {dimension_numbers = #tpu.dot_dimension_numbers<[1], [0], [0], [1], [0, 0, 1, 1], [], []>} : vector<1024x8xf32>, vector<8x128xf32>, vector<1024x128xf32> -> vector<1024x128xf32>
    %c0_3 = arith.constant 0 : index
    %c0_4 = arith.constant 0 : index
    %3 = vector.load %arg3[%c0_3, %c0_4] : memref<1x128xf32, #tpu.memory_space<vmem>>, vector<1x128xf32>
    %4 = vector.broadcast %3 : vector<1x128xf32> to vector<1024x128xf32>
    %5 = arith.addf %2, %4 : vector<1024x128xf32>
    %cst_5 = arith.constant 0.000000e+00 : f32
    %6 = vector.broadcast %cst_5 : f32 to vector<1024x128xf32>
    %7 = arith.maximumf %5, %6 : vector<1024x128xf32>
    %c0_6 = arith.constant 0 : index
    %c0_7 = arith.constant 0 : index
    %8 = vector.load %arg4[%c0_6, %c0_7] : memref<128x128xf32, #tpu.memory_space<vmem>>, vector<128x128xf32>
    %cst_8 = arith.constant dense<0.000000e+00> : vector<1024x128xf32>
    %9 = tpu.matmul %7, %8, %cst_8 {dimension_numbers = #tpu.dot_dimension_numbers<[1], [0], [0], [1], [0, 0, 1, 1], [], []>} : vector<1024x128xf32>, vector<128x128xf32>, vector<1024x128xf32> -> vector<1024x128xf32>
    %c0_9 = arith.constant 0 : index
    %c0_10 = arith.constant 0 : index
    %10 = vector.load %arg5[%c0_9, %c0_10] : memref<1x128xf32, #tpu.memory_space<vmem>>, vector<1x128xf32>
    %11 = vector.broadcast %10 : vector<1x128xf32> to vector<1024x128xf32>
    %12 = arith.addf %9, %11 : vector<1024x128xf32>
    %cst_11 = arith.constant 0.000000e+00 : f32
    %13 = vector.broadcast %cst_11 : f32 to vector<1024x128xf32>
    %14 = arith.maximumf %12, %13 : vector<1024x128xf32>
    %c0_12 = arith.constant 0 : index
    %c0_13 = arith.constant 0 : index
    %15 = vector.load %arg6[%c0_12, %c0_13] : memref<128x128xf32, #tpu.memory_space<vmem>>, vector<128x128xf32>
    %cst_14 = arith.constant dense<0.000000e+00> : vector<1024x128xf32>
    %16 = tpu.matmul %14, %15, %cst_14 {dimension_numbers = #tpu.dot_dimension_numbers<[1], [0], [0], [1], [0, 0, 1, 1], [], []>} : vector<1024x128xf32>, vector<128x128xf32>, vector<1024x128xf32> -> vector<1024x128xf32>
    %c0_15 = arith.constant 0 : index
    %c0_16 = arith.constant 0 : index
    %17 = vector.load %arg7[%c0_15, %c0_16] : memref<1x128xf32, #tpu.memory_space<vmem>>, vector<1x128xf32>
    %18 = vector.broadcast %17 : vector<1x128xf32> to vector<1024x128xf32>
    %19 = arith.addf %16, %18 : vector<1024x128xf32>
    %c0_17 = arith.constant 0 : index
    %c0_18 = arith.constant 0 : index
    %20 = vector.load %arg8[%c0_17, %c0_18] : memref<1024x128xf32, #tpu.memory_space<vmem>>, vector<1024x128xf32>
    tpu.vector_store %arg8[%c0_17, %c0_18], %19 {strides = array<i32>} : memref<1024x128xf32, #tpu.memory_space<vmem>>, vector<1024x128xf32>,
    return
  }
  func.func @transform_0(%arg0: i32) -> (i32, i32) {
    %c0_i32 = arith.constant 0 : i32
    %c0_i32_0 = arith.constant 0 : i32
    return %arg0, %c0_i32 : i32, i32
  }
  func.func @transform_1(%arg0: i32) -> (i32, i32) {
    %c0_i32 = arith.constant 0 : i32
    %c0_i32_0 = arith.constant 0 : i32
    %c0_i32_1 = arith.constant 0 : i32
    return %c0_i32, %c0_i32_0 : i32, i32
  }
  func.func @transform_2(%arg0: i32) -> (i32, i32) {
    %c0_i32 = arith.constant 0 : i32
    %c0_i32_0 = arith.constant 0 : i32
    %c0_i32_1 = arith.constant 0 : i32
    return %c0_i32, %c0_i32_0 : i32, i32
  }
  func.func @transform_3(%arg0: i32) -> (i32, i32) {
    %c0_i32 = arith.constant 0 : i32
    %c0_i32_0 = arith.constant 0 : i32
    %c0_i32_1 = arith.constant 0 : i32
    return %c0_i32, %c0_i32_0 : i32, i32
  }
  func.func @transform_4(%arg0: i32) -> (i32, i32) {
    %c0_i32 = arith.constant 0 : i32
    %c0_i32_0 = arith.constant 0 : i32
    %c0_i32_1 = arith.constant 0 : i32
    return %c0_i32, %c0_i32_0 : i32, i32
  }
  func.func @transform_5(%arg0: i32) -> (i32, i32) {
    %c0_i32 = arith.constant 0 : i32
    %c0_i32_0 = arith.constant 0 : i32
    %c0_i32_1 = arith.constant 0 : i32
    return %c0_i32, %c0_i32_0 : i32, i32
  }
  func.func @transform_6(%arg0: i32) -> (i32, i32) {
    %c0_i32 = arith.constant 0 : i32
    %c0_i32_0 = arith.constant 0 : i32
    %c0_i32_1 = arith.constant 0 : i32
    return %c0_i32, %c0_i32_0 : i32, i32
  }
  func.func @transform_7(%arg0: i32) -> (i32, i32) {
    %c0_i32 = arith.constant 0 : i32
    %c0_i32_0 = arith.constant 0 : i32
    return %arg0, %c0_i32 : i32, i32
  }
}

</mosaic_0001>

<llo_original>
// kernel: qnetwork_forward.1
$region0: #{qnetwork_forward.1}
  #allocation0 [shape = 'u32[]', space=smem, size = 0x4, offset = 0x4, fixed_abs, tag = 'smem constant byte address 0x4 - core index']
  #allocation1 [shape = 'u32[144,128]{1,0:T(1,128)}', space=vmem, size = 0x12000, scoped, tag = 'internal scratch']
  %s0 = inlined_call_operand.vmem [shape: f32[2504,8], index: 0, kind: input, shape index: {}]
  %s1 = inlined_call_operand.vmem [shape: f32[8,128], index: 1, kind: input, shape index: {}]
  %s2 = inlined_call_operand.vmem [shape: f32[1,128], index: 2, kind: input, shape index: {}]
  %s3 = inlined_call_operand.vmem [shape: f32[128,128], index: 3, kind: input, shape index: {}]
  %s4 = inlined_call_operand.vmem [shape: f32[1,128], index: 4, kind: input, shape index: {}]
  %s5 = inlined_call_operand.vmem [shape: f32[128,128], index: 5, kind: input, shape index: {}]
  %s6 = inlined_call_operand.vmem [shape: f32[1,128], index: 6, kind: input, shape index: {}]
  %s7 = inlined_call_operand.vmem [shape: f32[2504,128], index: 7, kind: output, shape index: {}]
  %s8 = sld [smem:[#allocation0]]
  $region109: #{qnetwork_forward.1} parent=0
    _
  %s10 = ssub.s32 1, %s8
  %s11 = scalar_select 0, %s10, %s8
  $region1: #{qnetwork_forward.1} parent=0
    #allocation2 [shape = 'u8[1048576]{0}', space=vmem, size = 0x100000, scoped, tag = 'output window, operand 0']
    loop: start=0, step=1, limit=5
    $region2: #{qnetwork_forward.1} parent=1 // loop_pre_header
      _
    $region3: #{qnetwork_forward.1} parent=1 // loop_header
      %s13 = sphi 0, %s17
      %p14 = scmp.ge.s32.totalorder %s13, 5
      %s23 = sphi 0, %s25
      %s26 = sphi 0, %s23
      %s27 = sphi 0, %s26
      %s43 = sphi 0, %s27
      %s47 = sphi 0, %s47
      %s49 = sphi 0, %s47
      %s50 = sphi 0, %s49
      %s64 = sphi 0, %s50
      %s68 = sphi 0, %s68
      %s70 = sphi 0, %s68
      %s71 = sphi 0, %s70
      %s85 = sphi 0, %s71
      %s89 = sphi 0, %s89
      %s91 = sphi 0, %s89
      %s92 = sphi 0, %s91
      %s106 = sphi 0, %s92
      %s110 = sphi 0, %s110
      %s112 = sphi 0, %s110
      %s113 = sphi 0, %s112
      %s127 = sphi 0, %s113
      %s131 = sphi 0, %s131
      %s133 = sphi 0, %s131
      %s134 = sphi 0, %s133
      %s148 = sphi 0, %s134
      %s152 = sphi 0, %s152
      %s154 = sphi 0, %s152
      %s155 = sphi 0, %s154
      %s169 = sphi 0, %s155
      %s175 = sphi 0, %s177
      %s178 = sphi 0, %s175
      %s179 = sphi 0, %s178
      %s195 = sphi 0, %s179
    $region4: #{qnetwork_forward.1} parent=1 // loop_header_branch
      %16 = sbr.rel (%p14) target = $region8
    $region5: #{qnetwork_forward.1} parent=1 // loop_body
      %s18 = ssub.s32 %s13, 1
      %s19 = ssub.s32 %s13, 2
      %s20 = sadd.s32 %s13, 1
      %s21 = ssub.s32 %s13, %s20
      %p22 = scmp.eq.s32.totalorder %s21, 0
      %s24 = sadd.s32 %s23, 1
      %s25 = scalar_select %p22, %s23, %s24
      %p28 = pneg %p22
      %p29 = scmp.eq.s32.totalorder %s13, 2
      %p30 = por %p28, %p29
      %p31 = scmp.ne.s32.totalorder %s23, %s26
      %p32 = scmp.eq.s32.totalorder %s13, 0
      %p33 = por %p31, %p32
      %p34 = scmp.ne.s32.totalorder %s23, %s26
      %p35 = scmp.eq.s32.totalorder %s18, 2
      %p36 = por %p34, %p35
      %p37 = scmp.ne.s32.totalorder %s26, %s27
      %p38 = scmp.eq.s32.totalorder %s18, 0
      %p39 = por %p37, %p38
      %p40 = scmp.ne.s32.totalorder %s26, %s27
      %p41 = scmp.eq.s32.totalorder %s19, 2
      %p42 = por %p40, %p41
      %p44 = scmp.ne.s32.totalorder %s27, %s43
      %p45 = scmp.eq.s32.totalorder %s19, 0
      %p46 = por %p44, %p45
      %s48 = sadd.s32 %s47, 1
      %p51 = scmp.eq.s32.totalorder %s13, 2
      %p52 = scmp.ne.s32.totalorder %s47, %s49
      %p53 = scmp.eq.s32.totalorder %s13, 0
      %p54 = por %p52, %p53
      %p55 = scmp.ne.s32.totalorder %s47, %s49
      %p56 = scmp.eq.s32.totalorder %s18, 2
      %p57 = por %p55, %p56
      %p58 = scmp.ne.s32.totalorder %s49, %s50
      %p59 = scmp.eq.s32.totalorder %s18, 0
      %p60 = por %p58, %p59
      %p61 = scmp.ne.s32.totalorder %s49, %s50
      %p62 = scmp.eq.s32.totalorder %s19, 2
      %p63 = por %p61, %p62
      %p65 = scmp.ne.s32.totalorder %s50, %s64
      %p66 = scmp.eq.s32.totalorder %s19, 0
      %p67 = por %p65, %p66
      %s69 = sadd.s32 %s68, 1
      %p72 = scmp.eq.s32.totalorder %s13, 2
      %p73 = scmp.ne.s32.totalorder %s68, %s70
      %p74 = scmp.eq.s32.totalorder %s13, 0
      %p75 = por %p73, %p74
      %p76 = scmp.ne.s32.totalorder %s68, %s70
      %p77 = scmp.eq.s32.totalorder %s18, 2
      %p78 = por %p76, %p77
      %p79 = scmp.ne.s32.totalorder %s70, %s71
      %p80 = scmp.eq.s32.totalorder %s18, 0
      %p81 = por %p79, %p80
      %p82 = scmp.ne.s32.totalorder %s70, %s71
      %p83 = scmp.eq.s32.totalorder %s19, 2
      %p84 = por %p82, %p83
      %p86 = scmp.ne.s32.totalorder %s71, %s85
      %p87 = scmp.eq.s32.totalorder %s19, 0
      %p88 = por %p86, %p87
      %s90 = sadd.s32 %s89, 1
      %p93 = scmp.eq.s32.totalorder %s13, 2
      %p94 = scmp.ne.s32.totalorder %s89, %s91
      %p95 = scmp.eq.s32.totalorder %s13, 0
      %p96 = por %p94, %p95
      %p97 = scmp.ne.s32.totalorder %s89, %s91
      %p98 = scmp.eq.s32.totalorder %s18, 2
      %p99 = por %p97, %p98
      %p100 = scmp.ne.s32.totalorder %s91, %s92
      %p101 = scmp.eq.s32.totalorder %s18, 0
      %p102 = por %p100, %p101
      %p103 = scmp.ne.s32.totalorder %s91, %s92
      %p104 = scmp.eq.s32.totalorder %s19, 2
      %p105 = por %p103, %p104
      %p107 = scmp.ne.s32.totalorder %s92, %s106
      %p108 = scmp.eq.s32.totalorder %s19, 0
      %p109 = por %p107, %p108
      %s111 = sadd.s32 %s110, 1
      %p114 = scmp.eq.s32.totalorder %s13, 2
      %p115 = scmp.ne.s32.totalorder %s110, %s112
      %p116 = scmp.eq.s32.totalorder %s13, 0
      %p117 = por %p115, %p116
      %p118 = scmp.ne.s32.totalorder %s110, %s112
      %p119 = scmp.eq.s32.totalorder %s18, 2
      %p120 = por %p118, %p119
      %p121 = scmp.ne.s32.totalorder %s112, %s113
      %p122 = scmp.eq.s32.totalorder %s18, 0
      %p123 = por %p121, %p122
      %p124 = scmp.ne.s32.totalorder %s112, %s113
      %p125 = scmp.eq.s32.totalorder %s19, 2
      %p126 = por %p124, %p125
      %p128 = scmp.ne.s32.totalorder %s113, %s127
      %p129 = scmp.eq.s32.totalorder %s19, 0
      %p130 = por %p128, %p129
      %s132 = sadd.s32 %s131, 1
      %p135 = scmp.eq.s32.totalorder %s13, 2
      %p136 = scmp.ne.s32.totalorder %s131, %s133
      %p137 = scmp.eq.s32.totalorder %s13, 0
      %p138 = por %p136, %p137
      %p139 = scmp.ne.s32.totalorder %s131, %s133
      %p140 = scmp.eq.s32.totalorder %s18, 2
      %p141 = por %p139, %p140
      %p142 = scmp.ne.s32.totalorder %s133, %s134
      %p143 = scmp.eq.s32.totalorder %s18, 0
      %p144 = por %p142, %p143
      %p145 = scmp.ne.s32.totalorder %s133, %s134
      %p146 = scmp.eq.s32.totalorder %s19, 2
      %p147 = por %p145, %p146
      %p149 = scmp.ne.s32.totalorder %s134, %s148
      %p150 = scmp.eq.s32.totalorder %s19, 0
      %p151 = por %p149, %p150
      %s153 = sadd.s32 %s152, 1
      %p156 = scmp.eq.s32.totalorder %s13, 2
      %p157 = scmp.ne.s32.totalorder %s152, %s154
      %p158 = scmp.eq.s32.totalorder %s13, 0
      %p159 = por %p157, %p158
      %p160 = scmp.ne.s32.totalorder %s152, %s154
      %p161 = scmp.eq.s32.totalorder %s18, 2
      %p162 = por %p160, %p161
      %p163 = scmp.ne.s32.totalorder %s154, %s155
      %p164 = scmp.eq.s32.totalorder %s18, 0
      %p165 = por %p163, %p164
      %p166 = scmp.ne.s32.totalorder %s154, %s155
      %p167 = scmp.eq.s32.totalorder %s19, 2
      %p168 = por %p166, %p167
      %p170 = scmp.ne.s32.totalorder %s155, %s169
      %p171 = scmp.eq.s32.totalorder %s19, 0
      %p172 = por %p170, %p171
      %s173 = ssub.s32 %s13, %s20
      %p174 = scmp.eq.s32.totalorder %s173, 0
      %s176 = sadd.s32 %s175, 1
      %s177 = scalar_select %p174, %s175, %s176
      %p180 = pneg %p174
      %p181 = scmp.eq.s32.totalorder %s13, 2
      %p182 = por %p180, %p181
      %p183 = scmp.ne.s32.totalorder %s175, %s178
      %p184 = scmp.eq.s32.totalorder %s13, 0
      %p185 = por %p183, %p184
      %p186 = scmp.ne.s32.totalorder %s175, %s178
      %p187 = scmp.eq.s32.totalorder %s18, 2
      %p188 = por %p186, %p187
      %p189 = scmp.ne.s32.totalorder %s178, %s179
      %p190 = scmp.eq.s32.totalorder %s18, 0
      %p191 = por %p189, %p190
      %p192 = scmp.ne.s32.totalorder %s178, %s179
      %p193 = scmp.eq.s32.totalorder %s19, 2
      %p194 = por %p192, %p193
      %p196 = scmp.ne.s32.totalorder %s179, %s195
      %p197 = scmp.eq.s32.totalorder %s19, 0
      %p198 = por %p196, %p197
      %p199 = scmp.le.s32.totalorder 1, %s13
      %p200 = scmp.lt.s32.totalorder %s13, 4
      %p201 = pnand %p199, %p200
      %p202 = pneg %p201
      // Predicated region
      $region9: #{qnetwork_forward.1} parent=5 // pred_check
        _
      $region10: #{qnetwork_forward.1} parent=5 // pred_check_branch
        %204 = sbr.rel (%p201) target = $region12
      $region11: #{qnetwork_forward.1} parent=5 // pred_region
        %s205 = ssub.s32 %s13, 1
        // Predicated region
        $region13: #{qnetwork_forward.1} parent=11 // pred_check
          %p206 = pneg %p60
        $region14: #{qnetwork_forward.1} parent=11 // pred_check_branch
          %208 = sbr.rel (%p206) target = $region16
        $region15: #{qnetwork_forward.1} parent=11 // pred_region
          _
        $region16: #{qnetwork_forward.1} parent=11 // pred_fallthru
          _
        // Predicated region
        $region17: #{qnetwork_forward.1} parent=11 // pred_check
          %p209 = pneg %p81
        $region18: #{qnetwork_forward.1} parent=11 // pred_check_branch
          %211 = sbr.rel (%p209) target = $region20
        $region19: #{qnetwork_forward.1} parent=11 // pred_region
          _
        $region20: #{qnetwork_forward.1} parent=11 // pred_fallthru
          _
        // Predicated region
        $region21: #{qnetwork_forward.1} parent=11 // pred_check
          %p212 = pneg %p102
        $region22: #{qnetwork_forward.1} parent=11 // pred_check_branch
          %214 = sbr.rel (%p212) target = $region24
        $region23: #{qnetwork_forward.1} parent=11 // pred_region
          _
        $region24: #{qnetwork_forward.1} parent=11 // pred_fallthru
          _
        // Predicated region
        $region25: #{qnetwork_forward.1} parent=11 // pred_check
          %p215 = pneg %p123
        $region26: #{qnetwork_forward.1} parent=11 // pred_check_branch
          %217 = sbr.rel (%p215) target = $region28
        $region27: #{qnetwork_forward.1} parent=11 // pred_region
          _
        $region28: #{qnetwork_forward.1} parent=11 // pred_fallthru
          _
        // Predicated region
        $region29: #{qnetwork_forward.1} parent=11 // pred_check
          %p218 = pneg %p144
        $region30: #{qnetwork_forward.1} parent=11 // pred_check_branch
          %220 = sbr.rel (%p218) target = $region32
        $region31: #{qnetwork_forward.1} parent=11 // pred_region
          _
        $region32: #{qnetwork_forward.1} parent=11 // pred_fallthru
          _
        // Predicated region
        $region33: #{qnetwork_forward.1} parent=11 // pred_check
          %p221 = pneg %p165
        $region34: #{qnetwork_forward.1} parent=11 // pred_check_branch
          %223 = sbr.rel (%p221) target = $region36
        $region35: #{qnetwork_forward.1} parent=11 // pred_region
          _
        $region36: #{qnetwork_forward.1} parent=11 // pred_fallthru
          _
      $region12: #{qnetwork_forward.1} parent=5 // pred_fallthru
        _
      %p224 = scmp.lt.s32.totalorder %s13, 3
      // Predicated region
      $region37: #{qnetwork_forward.1} parent=5 // pred_check
        %p225 = pneg %p224
      $region38: #{qnetwork_forward.1} parent=5 // pred_check_branch
        %227 = sbr.rel (%p225) target = $region40
      $region39: #{qnetwork_forward.1} parent=5 // pred_region
        // Predicated region
        $region41: #{qnetwork_forward.1} parent=39 // pred_check
          %p228 = pneg %p33
        $region42: #{qnetwork_forward.1} parent=39 // pred_check_branch
          %230 = sbr.rel (%p228) target = $region44
        $region43: #{qnetwork_forward.1} parent=39 // pred_region
          %s231 = smul.u32 128, %s13
          %s232 = ssub.s32 313, %s231
          %p233 = scmp.lt.s32.totalorder %s232, 128
          %s234 = scalar_select %p233, %s232, 128
          %s235 = smul.u32 128, %s234
          %p236 = scmp.lt.s32.totalorder %s231, 312
          %s237 = scalar_select %p236, %s231, 312
          %s238 = smul.addr %s237, 8
          %s239 = scalar_lea.vmem %s0, %s238
          %s240 = smul.u32 128, %s13
          %s241 = ssub.s32 313, %s240
          %p242 = scmp.lt.s32.totalorder %s241, 128
          %s243 = scalar_select %p242, %s241, 128
          %s244 = smul.u32 128, %s243
        $region44: #{qnetwork_forward.1} parent=39 // pred_fallthru
          _
      $region40: #{qnetwork_forward.1} parent=5 // pred_fallthru
        _
      %p245 = scmp.le.s32.totalorder 1, %s13
      %p246 = scmp.lt.s32.totalorder %s13, 4
      %p247 = pnand %p245, %p246
      %p248 = pneg %p247
      // Predicated region
      $region45: #{qnetwork_forward.1} parent=5 // pred_check
        _
      $region46: #{qnetwork_forward.1} parent=5 // pred_check_branch
        %250 = sbr.rel (%p247) target = $region48
      $region47: #{qnetwork_forward.1} parent=5 // pred_region
        %s251 = ssub.s32 %s13, 1
        %s252 = smul.u32 128, %s18
        %s253 = ssub.s32 313, %s252
        %p254 = scmp.lt.s32.totalorder %s253, 128
        %s255 = scalar_select %p254, %s253, 128
        %s256 = smul.u32 128, %s255
        %p257 = scmp.lt.s32.totalorder %s252, 312
        %s258 = scalar_select %p257, %s252, 312
        %s259 = smul.addr %s258, 8
        %s260 = scalar_lea.vmem %s0, %s259
        %p261 = pneg %p39
        %p262 = pneg %p36
        %p263 = pneg %p60
        %p264 = pneg %p57
        %p265 = pneg %p81
        %p266 = pneg %p78
        %p267 = pneg %p102
        %p268 = pneg %p99
        %p269 = pneg %p123
        %p270 = pneg %p120
        %p271 = pneg %p144
        %p272 = pneg %p141
        %p273 = pneg %p165
        %p274 = pneg %p162
        %p275 = pneg %p191
        %p276 = pneg %p188
        %s277 = sand.u32 %s178, 1
        %s278 = sand.u32 %s178, 1
        %s279 = smul.addr %s278, 1024
        %s280 = scalar_lea.vmem [#allocation2], %s279
        %s281 = smul.u32 128, %s18
        %s282 = ssub.s32 313, %s281
        %p283 = scmp.lt.s32.totalorder %s282, 128
        %s284 = scalar_select %p283, %s282, 128
        %s285 = smul.u32 128, %s284
        %p286 = scmp.lt.s32.totalorder %s281, 312
        %s287 = scalar_select %p286, %s281, 312
        %s288 = smul.addr %s287, 8
        %s289 = scalar_lea.vmem %s0, %s288
        %s290 = smul.u32 128, %s18
        %s291 = ssub.s32 313, %s290
        %p292 = scmp.lt.s32.totalorder %s291, 128
        %s293 = scalar_select %p292, %s291, 128
        %s294 = smul.u32 128, %s293
        %s295 = smul.u32 128, %s18
        %s296 = ssub.s32 313, %s295
        %p297 = scmp.lt.s32.totalorder %s296, 128
        %s298 = scalar_select %p297, %s296, 128
        %s299 = smul.u32 128, %s298
        %v300 = vld [vmem:[%s289] sm:$0xff]
        %v301 = vld [vmem:[%s289 + $0x8] sm:$0xff]
        %v302 = vld [vmem:[%s289 + $0x10] sm:$0xff]
        %v303 = vld [vmem:[%s289 + $0x18] sm:$0xff]
        %v304 = vld [vmem:[%s289 + $0x20] sm:$0xff]
        %v305 = vld [vmem:[%s289 + $0x28] sm:$0xff]
        %v306 = vld [vmem:[%s289 + $0x30] sm:$0xff]
        %v307 = vld [vmem:[%s289 + $0x38] sm:$0xff]
        %v308 = vld [vmem:[%s289 + $0x40] sm:$0xff]
        %v309 = vld [vmem:[%s289 + $0x48] sm:$0xff]
        %v310 = vld [vmem:[%s289 + $0x50] sm:$0xff]
        %v311 = vld [vmem:[%s289 + $0x58] sm:$0xff]
        %v312 = vld [vmem:[%s289 + $0x60] sm:$0xff]
        %v313 = vld [vmem:[%s289 + $0x68] sm:$0xff]
        %v314 = vld [vmem:[%s289 + $0x70] sm:$0xff]
        %v315 = vld [vmem:[%s289 + $0x78] sm:$0xff]
        %v316 = vld [vmem:[%s289 + $0x80] sm:$0xff]
        %v317 = vld [vmem:[%s289 + $0x88] sm:$0xff]
        %v318 = vld [vmem:[%s289 + $0x90] sm:$0xff]
        %v319 = vld [vmem:[%s289 + $0x98] sm:$0xff]
        %v320 = vld [vmem:[%s289 + $0xa0] sm:$0xff]
        %v321 = vld [vmem:[%s289 + $0xa8] sm:$0xff]
        %v322 = vld [vmem:[%s289 + $0xb0] sm:$0xff]
        %v323 = vld [vmem:[%s289 + $0xb8] sm:$0xff]
        %v324 = vld [vmem:[%s289 + $0xc0] sm:$0xff]
        %v325 = vld [vmem:[%s289 + $0xc8] sm:$0xff]
        %v326 = vld [vmem:[%s289 + $0xd0] sm:$0xff]
        %v327 = vld [vmem:[%s289 + $0xd8] sm:$0xff]
        %v328 = vld [vmem:[%s289 + $0xe0] sm:$0xff]
        %v329 = vld [vmem:[%s289 + $0xe8] sm:$0xff]
        %v330 = vld [vmem:[%s289 + $0xf0] sm:$0xff]
        %v331 = vld [vmem:[%s289 + $0xf8] sm:$0xff]
        %v332 = vld [vmem:[%s289 + $0x100] sm:$0xff]
        %v333 = vld [vmem:[%s289 + $0x108] sm:$0xff]
        %v334 = vld [vmem:[%s289 + $0x110] sm:$0xff]
        %v335 = vld [vmem:[%s289 + $0x118] sm:$0xff]
        %v336 = vld [vmem:[%s289 + $0x120] sm:$0xff]
        %v337 = vld [vmem:[%s289 + $0x128] sm:$0xff]
        %v338 = vld [vmem:[%s289 + $0x130] sm:$0xff]
        %v339 = vld [vmem:[%s289 + $0x138] sm:$0xff]
        %v340 = vld [vmem:[%s289 + $0x140] sm:$0xff]
        %v341 = vld [vmem:[%s289 + $0x148] sm:$0xff]
        %v342 = vld [vmem:[%s289 + $0x150] sm:$0xff]
        %v343 = vld [vmem:[%s289 + $0x158] sm:$0xff]
        %v344 = vld [vmem:[%s289 + $0x160] sm:$0xff]
        %v345 = vld [vmem:[%s289 + $0x168] sm:$0xff]
        %v346 = vld [vmem:[%s289 + $0x170] sm:$0xff]
        %v347 = vld [vmem:[%s289 + $0x178] sm:$0xff]
        %v348 = vld [vmem:[%s289 + $0x180] sm:$0xff]
        %v349 = vld [vmem:[%s289 + $0x188] sm:$0xff]
        %v350 = vld [vmem:[%s289 + $0x190] sm:$0xff]
        %v351 = vld [vmem:[%s289 + $0x198] sm:$0xff]
        %v352 = vld [vmem:[%s289 + $0x1a0] sm:$0xff]
        %v353 = vld [vmem:[%s289 + $0x1a8] sm:$0xff]
        %v354 = vld [vmem:[%s289 + $0x1b0] sm:$0xff]
        %v355 = vld [vmem:[%s289 + $0x1b8] sm:$0xff]
        %v356 = vld [vmem:[%s289 + $0x1c0] sm:$0xff]
        %v357 = vld [vmem:[%s289 + $0x1c8] sm:$0xff]
        %v358 = vld [vmem:[%s289 + $0x1d0] sm:$0xff]
        %v359 = vld [vmem:[%s289 + $0x1d8] sm:$0xff]
        %v360 = vld [vmem:[%s289 + $0x1e0] sm:$0xff]
        %v361 = vld [vmem:[%s289 + $0x1e8] sm:$0xff]
        %v362 = vld [vmem:[%s289 + $0x1f0] sm:$0xff]
        %v363 = vld [vmem:[%s289 + $0x1f8] sm:$0xff]
        %v364 = vld [vmem:[%s289 + $0x200] sm:$0xff]
        %v365 = vld [vmem:[%s289 + $0x208] sm:$0xff]
        %v366 = vld [vmem:[%s289 + $0x210] sm:$0xff]
        %v367 = vld [vmem:[%s289 + $0x218] sm:$0xff]
        %v368 = vld [vmem:[%s289 + $0x220] sm:$0xff]
        %v369 = vld [vmem:[%s289 + $0x228] sm:$0xff]
        %v370 = vld [vmem:[%s289 + $0x230] sm:$0xff]
        %v371 = vld [vmem:[%s289 + $0x238] sm:$0xff]
        %v372 = vld [vmem:[%s289 + $0x240] sm:$0xff]
        %v373 = vld [vmem:[%s289 + $0x248] sm:$0xff]
        %v374 = vld [vmem:[%s289 + $0x250] sm:$0xff]
        %v375 = vld [vmem:[%s289 + $0x258] sm:$0xff]
        %v376 = vld [vmem:[%s289 + $0x260] sm:$0xff]
        %v377 = vld [vmem:[%s289 + $0x268] sm:$0xff]
        %v378 = vld [vmem:[%s289 + $0x270] sm:$0xff]
        %v379 = vld [vmem:[%s289 + $0x278] sm:$0xff]
        %v380 = vld [vmem:[%s289 + $0x280] sm:$0xff]
        %v381 = vld [vmem:[%s289 + $0x288] sm:$0xff]
        %v382 = vld [vmem:[%s289 + $0x290] sm:$0xff]
        %v383 = vld [vmem:[%s289 + $0x298] sm:$0xff]
        %v384 = vld [vmem:[%s289 + $0x2a0] sm:$0xff]
        %v385 = vld [vmem:[%s289 + $0x2a8] sm:$0xff]
        %v386 = vld [vmem:[%s289 + $0x2b0] sm:$0xff]
        %v387 = vld [vmem:[%s289 + $0x2b8] sm:$0xff]
        %v388 = vld [vmem:[%s289 + $0x2c0] sm:$0xff]
        %v389 = vld [vmem:[%s289 + $0x2c8] sm:$0xff]
        %v390 = vld [vmem:[%s289 + $0x2d0] sm:$0xff]
        %v391 = vld [vmem:[%s289 + $0x2d8] sm:$0xff]
        %v392 = vld [vmem:[%s289 + $0x2e0] sm:$0xff]
        %v393 = vld [vmem:[%s289 + $0x2e8] sm:$0xff]
        %v394 = vld [vmem:[%s289 + $0x2f0] sm:$0xff]
        %v395 = vld [vmem:[%s289 + $0x2f8] sm:$0xff]
        %v396 = vld [vmem:[%s289 + $0x300] sm:$0xff]
        %v397 = vld [vmem:[%s289 + $0x308] sm:$0xff]
        %v398 = vld [vmem:[%s289 + $0x310] sm:$0xff]
        %v399 = vld [vmem:[%s289 + $0x318] sm:$0xff]
        %v400 = vld [vmem:[%s289 + $0x320] sm:$0xff]
        %v401 = vld [vmem:[%s289 + $0x328] sm:$0xff]
        %v402 = vld [vmem:[%s289 + $0x330] sm:$0xff]
        %v403 = vld [vmem:[%s289 + $0x338] sm:$0xff]
        %v404 = vld [vmem:[%s289 + $0x340] sm:$0xff]
        %v405 = vld [vmem:[%s289 + $0x348] sm:$0xff]
        %v406 = vld [vmem:[%s289 + $0x350] sm:$0xff]
        %v407 = vld [vmem:[%s289 + $0x358] sm:$0xff]
        %v408 = vld [vmem:[%s289 + $0x360] sm:$0xff]
        %v409 = vld [vmem:[%s289 + $0x368] sm:$0xff]
        %v410 = vld [vmem:[%s289 + $0x370] sm:$0xff]
        %v411 = vld [vmem:[%s289 + $0x378] sm:$0xff]
        %v412 = vld [vmem:[%s289 + $0x380] sm:$0xff]
        %v413 = vld [vmem:[%s289 + $0x388] sm:$0xff]
        %v414 = vld [vmem:[%s289 + $0x390] sm:$0xff]
        %v415 = vld [vmem:[%s289 + $0x398] sm:$0xff]
        %v416 = vld [vmem:[%s289 + $0x3a0] sm:$0xff]
        %v417 = vld [vmem:[%s289 + $0x3a8] sm:$0xff]
        %v418 = vld [vmem:[%s289 + $0x3b0] sm:$0xff]
        %v419 = vld [vmem:[%s289 + $0x3b8] sm:$0xff]
        %v420 = vld [vmem:[%s289 + $0x3c0] sm:$0xff]
        %v421 = vld [vmem:[%s289 + $0x3c8] sm:$0xff]
        %v422 = vld [vmem:[%s289 + $0x3d0] sm:$0xff]
        %v423 = vld [vmem:[%s289 + $0x3d8] sm:$0xff]
        %v424 = vld [vmem:[%s289 + $0x3e0] sm:$0xff]
        %v425 = vld [vmem:[%s289 + $0x3e8] sm:$0xff]
        %v426 = vld [vmem:[%s289 + $0x3f0] sm:$0xff]
        %v427 = vld [vmem:[%s289 + $0x3f8] sm:$0xff]
        %v428 = vld [vmem:[%s1] sm:$0xff]
        %v429 = vld [vmem:[%s2] sm:$0x1]
        %v431 = vlaneseq
        %v432 = vshrl.u32 %v431, 7
        %v433 = vsub.s32 0, %v432
        %v434 = vrot.slane %v429, %v433
        %vm436 = vcmask 64512
        %v438 = vsel %vm436, %v300, 0
        %v441 = vsel %vm436, %v301, 0
        %v444 = vsel %vm436, %v302, 0
        %v447 = vsel %vm436, %v303, 0
        %v450 = vsel %vm436, %v304, 0
        %v453 = vsel %vm436, %v305, 0
        %v456 = vsel %vm436, %v306, 0
        %v459 = vsel %vm436, %v307, 0
        %v462 = vsel %vm436, %v308, 0
        %v465 = vsel %vm436, %v309, 0
        %v468 = vsel %vm436, %v310, 0
        %v471 = vsel %vm436, %v311, 0
        %v474 = vsel %vm436, %v312, 0
        %v477 = vsel %vm436, %v313, 0
        %v480 = vsel %vm436, %v314, 0
        %v483 = vsel %vm436, %v315, 0
        %v486 = vsel %vm436, %v316, 0
        %v489 = vsel %vm436, %v317, 0
        %v492 = vsel %vm436, %v318, 0
        %v495 = vsel %vm436, %v319, 0
        %v498 = vsel %vm436, %v320, 0
        %v501 = vsel %vm436, %v321, 0
        %v504 = vsel %vm436, %v322, 0
        %v507 = vsel %vm436, %v323, 0
        %v510 = vsel %vm436, %v324, 0
        %v513 = vsel %vm436, %v325, 0
        %v516 = vsel %vm436, %v326, 0
        %v519 = vsel %vm436, %v327, 0
        %v522 = vsel %vm436, %v328, 0
        %v525 = vsel %vm436, %v329, 0
        %v528 = vsel %vm436, %v330, 0
        %v531 = vsel %vm436, %v331, 0
        %v534 = vsel %vm436, %v332, 0
        %v537 = vsel %vm436, %v333, 0
        %v540 = vsel %vm436, %v334, 0
        %v543 = vsel %vm436, %v335, 0
        %v546 = vsel %vm436, %v336, 0
        %v549 = vsel %vm436, %v337, 0
        %v552 = vsel %vm436, %v338, 0
        %v555 = vsel %vm436, %v339, 0
        %v558 = vsel %vm436, %v340, 0
        %v561 = vsel %vm436, %v341, 0
        %v564 = vsel %vm436, %v342, 0
        %v567 = vsel %vm436, %v343, 0
        %v570 = vsel %vm436, %v344, 0
        %v573 = vsel %vm436, %v345, 0
        %v576 = vsel %vm436, %v346, 0
        %v579 = vsel %vm436, %v347, 0
        %v582 = vsel %vm436, %v348, 0
        %v585 = vsel %vm436, %v349, 0
        %v588 = vsel %vm436, %v350, 0
        %v591 = vsel %vm436, %v351, 0
        %v594 = vsel %vm436, %v352, 0
        %v597 = vsel %vm436, %v353, 0
        %v600 = vsel %vm436, %v354, 0
        %v603 = vsel %vm436, %v355, 0
        %v606 = vsel %vm436, %v356, 0
        %v609 = vsel %vm436, %v357, 0
        %v612 = vsel %vm436, %v358, 0
        %v615 = vsel %vm436, %v359, 0
        %v618 = vsel %vm436, %v360, 0
        %v621 = vsel %vm436, %v361, 0
        %v624 = vsel %vm436, %v362, 0
        %v627 = vsel %vm436, %v363, 0
        %v630 = vsel %vm436, %v364, 0
        %v633 = vsel %vm436, %v365, 0
        %v636 = vsel %vm436, %v366, 0
        %v639 = vsel %vm436, %v367, 0
        %v642 = vsel %vm436, %v368, 0
        %v645 = vsel %vm436, %v369, 0
        %v648 = vsel %vm436, %v370, 0
        %v651 = vsel %vm436, %v371, 0
        %v654 = vsel %vm436, %v372, 0
        %v657 = vsel %vm436, %v373, 0
        %v660 = vsel %vm436, %v374, 0
        %v663 = vsel %vm436, %v375, 0
        %v666 = vsel %vm436, %v376, 0
        %v669 = vsel %vm436, %v377, 0
        %v672 = vsel %vm436, %v378, 0
        %v675 = vsel %vm436, %v379, 0
        %v678 = vsel %vm436, %v380, 0
        %v681 = vsel %vm436, %v381, 0
        %v684 = vsel %vm436, %v382, 0
        %v687 = vsel %vm436, %v383, 0
        %v690 = vsel %vm436, %v384, 0
        %v693 = vsel %vm436, %v385, 0
        %v696 = vsel %vm436, %v386, 0
        %v699 = vsel %vm436, %v387, 0
        %v702 = vsel %vm436, %v388, 0
        %v705 = vsel %vm436, %v389, 0
        %v708 = vsel %vm436, %v390, 0
        %v711 = vsel %vm436, %v391, 0
        %v714 = vsel %vm436, %v392, 0
        %v717 = vsel %vm436, %v393, 0
        %v720 = vsel %vm436, %v394, 0
        %v723 = vsel %vm436, %v395, 0
        %v726 = vsel %vm436, %v396, 0
        %v729 = vsel %vm436, %v397, 0
        %v732 = vsel %vm436, %v398, 0
        %v735 = vsel %vm436, %v399, 0
        %v738 = vsel %vm436, %v400, 0
        %v741 = vsel %vm436, %v401, 0
        %v744 = vsel %vm436, %v402, 0
        %v747 = vsel %vm436, %v403, 0
        %v750 = vsel %vm436, %v404, 0
        %v753 = vsel %vm436, %v405, 0
        %v756 = vsel %vm436, %v406, 0
        %v759 = vsel %vm436, %v407, 0
        %v762 = vsel %vm436, %v408, 0
        %v765 = vsel %vm436, %v409, 0
        %v768 = vsel %vm436, %v410, 0
        %v771 = vsel %vm436, %v411, 0
        %v774 = vsel %vm436, %v412, 0
        %v777 = vsel %vm436, %v413, 0
        %v780 = vsel %vm436, %v414, 0
        %v783 = vsel %vm436, %v415, 0
        %v786 = vsel %vm436, %v416, 0
        %v789 = vsel %vm436, %v417, 0
        %v792 = vsel %vm436, %v418, 0
        %v795 = vsel %vm436, %v419, 0
        %v798 = vsel %vm436, %v420, 0
        %v801 = vsel %vm436, %v421, 0
        %v804 = vsel %vm436, %v422, 0
        %v807 = vsel %vm436, %v423, 0
        %v810 = vsel %vm436, %v424, 0
        %v813 = vsel %vm436, %v425, 0
        %v816 = vsel %vm436, %v426, 0
        %v819 = vsel %vm436, %v427, 0
        %821 = vmatprep.subr.mxu0 0.0
        %822 = vmatpush1.msra.mxu0 %v428
        %823 = vmatprep.subr.mxu0 0.0
        %824 = vmatpush1.msra.mxu0 0.0
        %825 = vmatprep.subr.mxu0 0.0
        %826 = vmatpush1.msra.mxu0 0.0
        %827 = vmatprep.subr.mxu0 0.0
        %828 = vmatpush1.msra.mxu0 0.0
        %829 = vmatprep.subr.mxu0 0.0
        %830 = vmatpush1.msra.mxu0 0.0
        %831 = vmatprep.subr.mxu0 0.0
        %832 = vmatpush1.msra.mxu0 0.0
        %833 = vmatprep.subr.mxu0 0.0
        %834 = vmatpush1.msra.mxu0 0.0
        %835 = vmatprep.subr.mxu0 0.0
        %836 = vmatpush1.msra.mxu0 0.0
        %837 = vmatprep.subr.mxu0 0.0
        %838 = vmatpush1.msra.mxu0 0.0
        %839 = vmatprep.subr.mxu0 0.0
        %840 = vmatpush1.msra.mxu0 0.0
        %841 = vmatprep.subr.mxu0 0.0
        %842 = vmatpush1.msra.mxu0 0.0
        %843 = vmatprep.subr.mxu0 0.0
        %844 = vmatpush1.msra.mxu0 0.0
        %845 = vmatprep.subr.mxu0 0.0
        %846 = vmatpush1.msra.mxu0 0.0
        %847 = vmatprep.subr.mxu0 0.0
        %848 = vmatpush1.msra.mxu0 0.0
        %849 = vmatprep.subr.mxu0 0.0
        %850 = vmatpush1.msra.mxu0 0.0
        %851 = vmatprep.subr.mxu0 0.0
        %852 = vmatpush1.msra.mxu0 0.0
        %853 = vmatprep.subr.mxu0 0.0
        %854 = vmatpush1.msra.mxu0 0.0
        %855 = vmatprep.subr.mxu0 0.0
        %856 = vmatpush1.msra.mxu0 0.0
        %857 = vmatprep.subr.mxu0 0.0
        %858 = vmatpush1.msra.mxu0 0.0
        %859 = vmatprep.subr.mxu0 0.0
        %860 = vmatpush1.msra.mxu0 0.0
        %861 = vmatprep.subr.mxu0 0.0
        %862 = vmatpush1.msra.mxu0 0.0
        %863 = vmatprep.subr.mxu0 0.0
        %864 = vmatpush1.msra.mxu0 0.0
        %865 = vmatprep.subr.mxu0 0.0
        %866 = vmatpush1.msra.mxu0 0.0
        %867 = vmatprep.subr.mxu0 0.0
        %868 = vmatpush1.msra.mxu0 0.0
        %869 = vmatprep.subr.mxu0 0.0
        %870 = vmatpush1.msra.mxu0 0.0
        %871 = vmatprep.subr.mxu0 0.0
        %872 = vmatpush1.msra.mxu0 0.0
        %873 = vmatprep.subr.mxu0 0.0
        %874 = vmatpush1.msra.mxu0 0.0
        %875 = vmatprep.subr.mxu0 0.0
        %876 = vmatpush1.msra.mxu0 0.0
        %877 = vmatprep.subr.mxu0 0.0
        %878 = vmatpush1.msra.mxu0 0.0
        %879 = vmatprep.subr.mxu0 0.0
        %880 = vmatpush1.msra.mxu0 0.0
        %881 = vmatprep.subr.mxu0 0.0
        %882 = vmatpush1.msra.mxu0 0.0
        %883 = vmatprep.subr.mxu0 0.0
        %884 = vmatpush1.msra.mxu0 0.0
        %885 = vmatprep.mubr.f32.mxu0 0.0
        %886 = vmatmul.mubr.f32.gmra.mrb[0].mxu0 %v438
        %v887 = vpop.f32.mrb[0].mxu0
        %v888 = vadd.f32 %v434, %v887
        %v889 = vpop.f32.mrb[0].mxu0
        %890 = vmatprep.mubr.f32.mxu0 0.0
        %891 = vmatmul.mubr.f32.gmra.mrb[0].mxu0 %v441
        %v892 = vpop.f32.mrb[0].mxu0
        %v893 = vadd.f32 %v434, %v892
        %v894 = vpop.f32.mrb[0].mxu0
        %895 = vmatprep.mubr.f32.mxu0 0.0
        %896 = vmatmul.mubr.f32.gmra.mrb[0].mxu0 %v444
        %v897 = vpop.f32.mrb[0].mxu0
        %v898 = vadd.f32 %v434, %v897
        %v899 = vpop.f32.mrb[0].mxu0
        %900 = vmatprep.mubr.f32.mxu0 0.0
        %901 = vmatmul.mubr.f32.gmra.mrb[0].mxu0 %v447
        %v902 = vpop.f32.mrb[0].mxu0
        %v903 = vadd.f32 %v434, %v902
        %v904 = vpop.f32.mrb[0].mxu0
        %905 = vmatprep.mubr.f32.mxu0 0.0
        %906 = vmatmul.mubr.f32.gmra.mrb[0].mxu0 %v450
        %v907 = vpop.f32.mrb[0].mxu0
        %v908 = vadd.f32 %v434, %v907
        %v909 = vpop.f32.mrb[0].mxu0
        %910 = vmatprep.mubr.f32.mxu0 0.0
        %911 = vmatmul.mubr.f32.gmra.mrb[0].mxu0 %v453
        %v912 = vpop.f32.mrb[0].mxu0
        %v913 = vadd.f32 %v434, %v912
        %v914 = vpop.f32.mrb[0].mxu0
        %915 = vmatprep.mubr.f32.mxu0 0.0
        %916 = vmatmul.mubr.f32.gmra.mrb[0].mxu0 %v456
        %v917 = vpop.f32.mrb[0].mxu0
        %v918 = vadd.f32 %v434, %v917
        %v919 = vpop.f32.mrb[0].mxu0
        %920 = vmatprep.mubr.f32.mxu0 0.0
        %921 = vmatmul.mubr.f32.gmra.mrb[0].mxu0 %v459
        %v922 = vpop.f32.mrb[0].mxu0
        %v923 = vadd.f32 %v434, %v922
        %v924 = vpop.f32.mrb[0].mxu0
        %925 = vmatprep.mubr.f32.mxu0 0.0
        %926 = vmatmul.mubr.f32.gmra.mrb[0].mxu0 %v462
        %v927 = vpop.f32.mrb[0].mxu0
        %v928 = vadd.f32 %v434, %v927
        %v929 = vpop.f32.mrb[0].mxu0
        %930 = vmatprep.mubr.f32.mxu0 0.0
        %931 = vmatmul.mubr.f32.gmra.mrb[0].mxu0 %v465
        %v932 = vpop.f32.mrb[0].mxu0
        %v933 = vadd.f32 %v434, %v932
        %v934 = vpop.f32.mrb[0].mxu0
        %935 = vmatprep.mubr.f32.mxu0 0.0
        %936 = vmatmul.mubr.f32.gmra.mrb[0].mxu0 %v468
        %v937 = vpop.f32.mrb[0].mxu0
        %v938 = vadd.f32 %v434, %v937
        %v939 = vpop.f32.mrb[0].mxu0
        %940 = vmatprep.mubr.f32.mxu0 0.0
        %941 = vmatmul.mubr.f32.gmra.mrb[0].mxu0 %v471
        %v942 = vpop.f32.mrb[0].mxu0
        %v943 = vadd.f32 %v434, %v942
        %v944 = vpop.f32.mrb[0].mxu0
        %945 = vmatprep.mubr.f32.mxu0 0.0
        %946 = vmatmul.mubr.f32.gmra.mrb[0].mxu0 %v474
        %v947 = vpop.f32.mrb[0].mxu0
        %v948 = vadd.f32 %v434, %v947
        %v949 = vpop.f32.mrb[0].mxu0
        %950 = vmatprep.mubr.f32.mxu0 0.0
        %951 = vmatmul.mubr.f32.gmra.mrb[0].mxu0 %v477
        %v952 = vpop.f32.mrb[0].mxu0
        %v953 = vadd.f32 %v434, %v952
        %v954 = vpop.f32.mrb[0].mxu0
        %955 = vmatprep.mubr.f32.mxu0 0.0
        %956 = vmatmul.mubr.f32.gmra.mrb[0].mxu0 %v480
        %v957 = vpop.f32.mrb[0].mxu0
        %v958 = vadd.f32 %v434, %v957
        %v959 = vpop.f32.mrb[0].mxu0
        %960 = vmatprep.mubr.f32.mxu0 0.0
        %961 = vmatmul.mubr.f32.gmra.mrb[0].mxu0 %v483
        %v962 = vpop.f32.mrb[0].mxu0
        %v963 = vadd.f32 %v434, %v962
        %v964 = vpop.f32.mrb[0].mxu0
        %965 = vmatprep.mubr.f32.mxu0 0.0
        %966 = vmatmul.mubr.f32.gmra.mrb[0].mxu0 %v486
        %v967 = vpop.f32.mrb[0].mxu0
        %v968 = vadd.f32 %v434, %v967
        %v969 = vpop.f32.mrb[0].mxu0
        %970 = vmatprep.mubr.f32.mxu0 0.0
        %971 = vmatmul.mubr.f32.gmra.mrb[0].mxu0 %v489
        %v972 = vpop.f32.mrb[0].mxu0
        %v973 = vadd.f32 %v434, %v972
        %v974 = vpop.f32.mrb[0].mxu0
        %975 = vmatprep.mubr.f32.mxu0 0.0
        %976 = vmatmul.mubr.f32.gmra.mrb[0].mxu0 %v492
        %v977 = vpop.f32.mrb[0].mxu0
        %v978 = vadd.f32 %v434, %v977
        %v979 = vpop.f32.mrb[0].mxu0
        %980 = vmatprep.mubr.f32.mxu0 0.0
        %981 = vmatmul.mubr.f32.gmra.mrb[0].mxu0 %v495
        %v982 = vpop.f32.mrb[0].mxu0
        %v983 = vadd.f32 %v434, %v982
        %v984 = vpop.f32.mrb[0].mxu0
        %985 = vmatprep.mubr.f32.mxu0 0.0
        %986 = vmatmul.mubr.f32.gmra.mrb[0].mxu0 %v498
        %v987 = vpop.f32.mrb[0].mxu0
        %v988 = vadd.f32 %v434, %v987
        %v989 = vpop.f32.mrb[0].mxu0
        %990 = vmatprep.mubr.f32.mxu0 0.0
        %991 = vmatmul.mubr.f32.gmra.mrb[0].mxu0 %v501
        %v992 = vpop.f32.mrb[0].mxu0
        %v993 = vadd.f32 %v434, %v992
        %v994 = vpop.f32.mrb[0].mxu0
        %995 = vmatprep.mubr.f32.mxu0 0.0
        %996 = vmatmul.mubr.f32.gmra.mrb[0].mxu0 %v504
        %v997 = vpop.f32.mrb[0].mxu0
        %v998 = vadd.f32 %v434, %v997
        %v999 = vpop.f32.mrb[0].mxu0
        %1000 = vmatprep.mubr.f32.mxu0 0.0
        %1001 = vmatmul.mubr.f32.gmra.mrb[0].mxu0 %v507
        %v1002 = vpop.f32.mrb[0].mxu0
        %v1003 = vadd.f32 %v434, %v1002
        %v1004 = vpop.f32.mrb[0].mxu0
        %1005 = vmatprep.mubr.f32.mxu0 0.0
        %1006 = vmatmul.mubr.f32.gmra.mrb[0].mxu0 %v510
        %v1007 = vpop.f32.mrb[0].mxu0
        %v1008 = vadd.f32 %v434, %v1007
        %v1009 = vpop.f32.mrb[0].mxu0
        %1010 = vmatprep.mubr.f32.mxu0 0.0
        %1011 = vmatmul.mubr.f32.gmra.mrb[0].mxu0 %v513
        %v1012 = vpop.f32.mrb[0].mxu0
        %v1013 = vadd.f32 %v434, %v1012
        %v1014 = vpop.f32.mrb[0].mxu0
        %1015 = vmatprep.mubr.f32.mxu0 0.0
        %1016 = vmatmul.mubr.f32.gmra.mrb[0].mxu0 %v516
        %v1017 = vpop.f32.mrb[0].mxu0
        %v1018 = vadd.f32 %v434, %v1017
        %v1019 = vpop.f32.mrb[0].mxu0
        %1020 = vmatprep.mubr.f32.mxu0 0.0
        %1021 = vmatmul.mubr.f32.gmra.mrb[0].mxu0 %v519
        %v1022 = vpop.f32.mrb[0].mxu0
        %v1023 = vadd.f32 %v434, %v1022
        %v1024 = vpop.f32.mrb[0].mxu0
        %1025 = vmatprep.mubr.f32.mxu0 0.0
        %1026 = vmatmul.mubr.f32.gmra.mrb[0].mxu0 %v522
        %v1027 = vpop.f32.mrb[0].mxu0
        %v1028 = vadd.f32 %v434, %v1027
        %v1029 = vpop.f32.mrb[0].mxu0
        %1030 = vmatprep.mubr.f32.mxu0 0.0
        %1031 = vmatmul.mubr.f32.gmra.mrb[0].mxu0 %v525
        %v1032 = vpop.f32.mrb[0].mxu0
        %v1033 = vadd.f32 %v434, %v1032
        %v1034 = vpop.f32.mrb[0].mxu0
        %1035 = vmatprep.mubr.f32.mxu0 0.0
        %1036 = vmatmul.mubr.f32.gmra.mrb[0].mxu0 %v528
        %v1037 = vpop.f32.mrb[0].mxu0
        %v1038 = vadd.f32 %v434, %v1037
        %v1039 = vpop.f32.mrb[0].mxu0
        %1040 = vmatprep.mubr.f32.mxu0 0.0
        %1041 = vmatmul.mubr.f32.gmra.mrb[0].mxu0 %v531
        %v1042 = vpop.f32.mrb[0].mxu0
        %v1043 = vadd.f32 %v434, %v1042
        %v1044 = vpop.f32.mrb[0].mxu0
        %1045 = vmatprep.mubr.f32.mxu0 0.0
        %1046 = vmatmul.mubr.f32.gmra.mrb[0].mxu0 %v534
        %v1047 = vpop.f32.mrb[0].mxu0
        %v1048 = vadd.f32 %v434, %v1047
        %v1049 = vpop.f32.mrb[0].mxu0
        %1050 = vmatprep.mubr.f32.mxu0 0.0
        %1051 = vmatmul.mubr.f32.gmra.mrb[0].mxu0 %v537
        %v1052 = vpop.f32.mrb[0].mxu0
        %v1053 = vadd.f32 %v434, %v1052
        %v1054 = vpop.f32.mrb[0].mxu0
        %1055 = vmatprep.mubr.f32.mxu0 0.0
        %1056 = vmatmul.mubr.f32.gmra.mrb[0].mxu0 %v540
        %v1057 = vpop.f32.mrb[0].mxu0
        %v1058 = vadd.f32 %v434, %v1057
        %v1059 = vpop.f32.mrb[0].mxu0
        %1060 = vmatprep.mubr.f32.mxu0 0.0
        %1061 = vmatmul.mubr.f32.gmra.mrb[0].mxu0 %v543
        %v1062 = vpop.f32.mrb[0].mxu0
        %v1063 = vadd.f32 %v434, %v1062
        %v1064 = vpop.f32.mrb[0].mxu0
        %1065 = vmatprep.mubr.f32.mxu0 0.0
        %1066 = vmatmul.mubr.f32.gmra.mrb[0].mxu0 %v546
        %v1067 = vpop.f32.mrb[0].mxu0
        %v1068 = vadd.f32 %v434, %v1067
        %v1069 = vpop.f32.mrb[0].mxu0
        %1070 = vmatprep.mubr.f32.mxu0 0.0
        %1071 = vmatmul.mubr.f32.gmra.mrb[0].mxu0 %v549
        %v1072 = vpop.f32.mrb[0].mxu0
        %v1073 = vadd.f32 %v434, %v1072
        %v1074 = vpop.f32.mrb[0].mxu0
        %1075 = vmatprep.mubr.f32.mxu0 0.0
        %1076 = vmatmul.mubr.f32.gmra.mrb[0].mxu0 %v552
        %v1077 = vpop.f32.mrb[0].mxu0
        %v1078 = vadd.f32 %v434, %v1077
        %v1079 = vpop.f32.mrb[0].mxu0
        %1080 = vmatprep.mubr.f32.mxu0 0.0
        %1081 = vmatmul.mubr.f32.gmra.mrb[0].mxu0 %v555
        %v1082 = vpop.f32.mrb[0].mxu0
        %v1083 = vadd.f32 %v434, %v1082
        %v1084 = vpop.f32.mrb[0].mxu0
        %1085 = vmatprep.mubr.f32.mxu0 0.0
        %1086 = vmatmul.mubr.f32.gmra.mrb[0].mxu0 %v558
        %v1087 = vpop.f32.mrb[0].mxu0
        %v1088 = vadd.f32 %v434, %v1087
        %v1089 = vpop.f32.mrb[0].mxu0
        %1090 = vmatprep.mubr.f32.mxu0 0.0
        %1091 = vmatmul.mubr.f32.gmra.mrb[0].mxu0 %v561
        %v1092 = vpop.f32.mrb[0].mxu0
        %v1093 = vadd.f32 %v434, %v1092
        %v1094 = vpop.f32.mrb[0].mxu0
        %1095 = vmatprep.mubr.f32.mxu0 0.0
        %1096 = vmatmul.mubr.f32.gmra.mrb[0].mxu0 %v564
        %v1097 = vpop.f32.mrb[0].mxu0
        %v1098 = vadd.f32 %v434, %v1097
        %v1099 = vpop.f32.mrb[0].mxu0
        %1100 = vmatprep.mubr.f32.mxu0 0.0
        %1101 = vmatmul.mubr.f32.gmra.mrb[0].mxu0 %v567
        %v1102 = vpop.f32.mrb[0].mxu0
        %v1103 = vadd.f32 %v434, %v1102
        %v1104 = vpop.f32.mrb[0].mxu0
        %1105 = vmatprep.mubr.f32.mxu0 0.0
        %1106 = vmatmul.mubr.f32.gmra.mrb[0].mxu0 %v570
        %v1107 = vpop.f32.mrb[0].mxu0
        %v1108 = vadd.f32 %v434, %v1107
        %v1109 = vpop.f32.mrb[0].mxu0
        %1110 = vmatprep.mubr.f32.mxu0 0.0
        %1111 = vmatmul.mubr.f32.gmra.mrb[0].mxu0 %v573
        %v1112 = vpop.f32.mrb[0].mxu0
        %v1113 = vadd.f32 %v434, %v1112
        %v1114 = vpop.f32.mrb[0].mxu0
        %1115 = vmatprep.mubr.f32.mxu0 0.0
        %1116 = vmatmul.mubr.f32.gmra.mrb[0].mxu0 %v576
        %v1117 = vpop.f32.mrb[0].mxu0
        %v1118 = vadd.f32 %v434, %v1117
        %v1119 = vpop.f32.mrb[0].mxu0
        %1120 = vmatprep.mubr.f32.mxu0 0.0
        %1121 = vmatmul.mubr.f32.gmra.mrb[0].mxu0 %v579
        %v1122 = vpop.f32.mrb[0].mxu0
        %v1123 = vadd.f32 %v434, %v1122
        %v1124 = vpop.f32.mrb[0].mxu0
        %1125 = vmatprep.mubr.f32.mxu0 0.0
        %1126 = vmatmul.mubr.f32.gmra.mrb[0].mxu0 %v582
        %v1127 = vpop.f32.mrb[0].mxu0
        %v1128 = vadd.f32 %v434, %v1127
        %v1129 = vpop.f32.mrb[0].mxu0
        %1130 = vmatprep.mubr.f32.mxu0 0.0
        %1131 = vmatmul.mubr.f32.gmra.mrb[0].mxu0 %v585
        %v1132 = vpop.f32.mrb[0].mxu0
        %v1133 = vadd.f32 %v434, %v1132
        %v1134 = vpop.f32.mrb[0].mxu0
        %1135 = vmatprep.mubr.f32.mxu0 0.0
        %1136 = vmatmul.mubr.f32.gmra.mrb[0].mxu0 %v588
        %v1137 = vpop.f32.mrb[0].mxu0
        %v1138 = vadd.f32 %v434, %v1137
        %v1139 = vpop.f32.mrb[0].mxu0
        %1140 = vmatprep.mubr.f32.mxu0 0.0
        %1141 = vmatmul.mubr.f32.gmra.mrb[0].mxu0 %v591
        %v1142 = vpop.f32.mrb[0].mxu0
        %v1143 = vadd.f32 %v434, %v1142
        %v1144 = vpop.f32.mrb[0].mxu0
        %1145 = vmatprep.mubr.f32.mxu0 0.0
        %1146 = vmatmul.mubr.f32.gmra.mrb[0].mxu0 %v594
        %v1147 = vpop.f32.mrb[0].mxu0
        %v1148 = vadd.f32 %v434, %v1147
        %v1149 = vpop.f32.mrb[0].mxu0
        %1150 = vmatprep.mubr.f32.mxu0 0.0
        %1151 = vmatmul.mubr.f32.gmra.mrb[0].mxu0 %v597
        %v1152 = vpop.f32.mrb[0].mxu0
        %v1153 = vadd.f32 %v434, %v1152
        %v1154 = vpop.f32.mrb[0].mxu0
        %1155 = vmatprep.mubr.f32.mxu0 0.0
        %1156 = vmatmul.mubr.f32.gmra.mrb[0].mxu0 %v600
        %v1157 = vpop.f32.mrb[0].mxu0
        %v1158 = vadd.f32 %v434, %v1157
        %v1159 = vpop.f32.mrb[0].mxu0
        %1160 = vmatprep.mubr.f32.mxu0 0.0
        %1161 = vmatmul.mubr.f32.gmra.mrb[0].mxu0 %v603
        %v1162 = vpop.f32.mrb[0].mxu0
        %v1163 = vadd.f32 %v434, %v1162
        %v1164 = vpop.f32.mrb[0].mxu0
        %1165 = vmatprep.mubr.f32.mxu0 0.0
        %1166 = vmatmul.mubr.f32.gmra.mrb[0].mxu0 %v606
        %v1167 = vpop.f32.mrb[0].mxu0
        %v1168 = vadd.f32 %v434, %v1167
        %v1169 = vpop.f32.mrb[0].mxu0
        %1170 = vmatprep.mubr.f32.mxu0 0.0
        %1171 = vmatmul.mubr.f32.gmra.mrb[0].mxu0 %v609
        %v1172 = vpop.f32.mrb[0].mxu0
        %v1173 = vadd.f32 %v434, %v1172
        %v1174 = vpop.f32.mrb[0].mxu0
        %1175 = vmatprep.mubr.f32.mxu0 0.0
        %1176 = vmatmul.mubr.f32.gmra.mrb[0].mxu0 %v612
        %v1177 = vpop.f32.mrb[0].mxu0
        %v1178 = vadd.f32 %v434, %v1177
        %v1179 = vpop.f32.mrb[0].mxu0
        %1180 = vmatprep.mubr.f32.mxu0 0.0
        %1181 = vmatmul.mubr.f32.gmra.mrb[0].mxu0 %v615
        %v1182 = vpop.f32.mrb[0].mxu0
        %v1183 = vadd.f32 %v434, %v1182
        %v1184 = vpop.f32.mrb[0].mxu0
        %1185 = vmatprep.mubr.f32.mxu0 0.0
        %1186 = vmatmul.mubr.f32.gmra.mrb[0].mxu0 %v618
        %v1187 = vpop.f32.mrb[0].mxu0
        %v1188 = vadd.f32 %v434, %v1187
        %v1189 = vpop.f32.mrb[0].mxu0
        %1190 = vmatprep.mubr.f32.mxu0 0.0
        %1191 = vmatmul.mubr.f32.gmra.mrb[0].mxu0 %v621
        %v1192 = vpop.f32.mrb[0].mxu0
        %v1193 = vadd.f32 %v434, %v1192
        %v1194 = vpop.f32.mrb[0].mxu0
        %1195 = vmatprep.mubr.f32.mxu0 0.0
        %1196 = vmatmul.mubr.f32.gmra.mrb[0].mxu0 %v624
        %v1197 = vpop.f32.mrb[0].mxu0
        %v1198 = vadd.f32 %v434, %v1197
        %v1199 = vpop.f32.mrb[0].mxu0
        %1200 = vmatprep.mubr.f32.mxu0 0.0
        %1201 = vmatmul.mubr.f32.gmra.mrb[0].mxu0 %v627
        %v1202 = vpop.f32.mrb[0].mxu0
        %v1203 = vadd.f32 %v434, %v1202
        %v1204 = vpop.f32.mrb[0].mxu0
        %1205 = vmatprep.mubr.f32.mxu0 0.0
        %1206 = vmatmul.mubr.f32.gmra.mrb[0].mxu0 %v630
        %v1207 = vpop.f32.mrb[0].mxu0
        %v1208 = vadd.f32 %v434, %v1207
        %v1209 = vpop.f32.mrb[0].mxu0
        %1210 = vmatprep.mubr.f32.mxu0 0.0
        %1211 = vmatmul.mubr.f32.gmra.mrb[0].mxu0 %v633
        %v1212 = vpop.f32.mrb[0].mxu0
        %v1213 = vadd.f32 %v434, %v1212
        %v1214 = vpop.f32.mrb[0].mxu0
        %1215 = vmatprep.mubr.f32.mxu0 0.0
        %1216 = vmatmul.mubr.f32.gmra.mrb[0].mxu0 %v636
        %v1217 = vpop.f32.mrb[0].mxu0
        %v1218 = vadd.f32 %v434, %v1217
        %v1219 = vpop.f32.mrb[0].mxu0
        %1220 = vmatprep.mubr.f32.mxu0 0.0
        %1221 = vmatmul.mubr.f32.gmra.mrb[0].mxu0 %v639
        %v1222 = vpop.f32.mrb[0].mxu0
        %v1223 = vadd.f32 %v434, %v1222
        %v1224 = vpop.f32.mrb[0].mxu0
        %1225 = vmatprep.mubr.f32.mxu0 0.0
        %1226 = vmatmul.mubr.f32.gmra.mrb[0].mxu0 %v642
        %v1227 = vpop.f32.mrb[0].mxu0
        %v1228 = vadd.f32 %v434, %v1227
        %v1229 = vpop.f32.mrb[0].mxu0
        %1230 = vmatprep.mubr.f32.mxu0 0.0
        %1231 = vmatmul.mubr.f32.gmra.mrb[0].mxu0 %v645
        %v1232 = vpop.f32.mrb[0].mxu0
        %v1233 = vadd.f32 %v434, %v1232
        %v1234 = vpop.f32.mrb[0].mxu0
        %1235 = vmatprep.mubr.f32.mxu0 0.0
        %1236 = vmatmul.mubr.f32.gmra.mrb[0].mxu0 %v648
        %v1237 = vpop.f32.mrb[0].mxu0
        %v1238 = vadd.f32 %v434, %v1237
        %v1239 = vpop.f32.mrb[0].mxu0
        %1240 = vmatprep.mubr.f32.mxu0 0.0
        %1241 = vmatmul.mubr.f32.gmra.mrb[0].mxu0 %v651
        %v1242 = vpop.f32.mrb[0].mxu0
        %v1243 = vadd.f32 %v434, %v1242
        %v1244 = vpop.f32.mrb[0].mxu0
        %1245 = vmatprep.mubr.f32.mxu0 0.0
        %1246 = vmatmul.mubr.f32.gmra.mrb[0].mxu0 %v654
        %v1247 = vpop.f32.mrb[0].mxu0
        %v1248 = vadd.f32 %v434, %v1247
        %v1249 = vpop.f32.mrb[0].mxu0
        %1250 = vmatprep.mubr.f32.mxu0 0.0
        %1251 = vmatmul.mubr.f32.gmra.mrb[0].mxu0 %v657
        %v1252 = vpop.f32.mrb[0].mxu0
        %v1253 = vadd.f32 %v434, %v1252
        %v1254 = vpop.f32.mrb[0].mxu0
        %1255 = vmatprep.mubr.f32.mxu0 0.0
        %1256 = vmatmul.mubr.f32.gmra.mrb[0].mxu0 %v660
        %v1257 = vpop.f32.mrb[0].mxu0
        %v1258 = vadd.f32 %v434, %v1257
        %v1259 = vpop.f32.mrb[0].mxu0
        %1260 = vmatprep.mubr.f32.mxu0 0.0
        %1261 = vmatmul.mubr.f32.gmra.mrb[0].mxu0 %v663
        %v1262 = vpop.f32.mrb[0].mxu0
        %v1263 = vadd.f32 %v434, %v1262
        %v1264 = vpop.f32.mrb[0].mxu0
        %1265 = vmatprep.mubr.f32.mxu0 0.0
        %1266 = vmatmul.mubr.f32.gmra.mrb[0].mxu0 %v666
        %v1267 = vpop.f32.mrb[0].mxu0
        %v1268 = vadd.f32 %v434, %v1267
        %v1269 = vpop.f32.mrb[0].mxu0
        %1270 = vmatprep.mubr.f32.mxu0 0.0
        %1271 = vmatmul.mubr.f32.gmra.mrb[0].mxu0 %v669
        %v1272 = vpop.f32.mrb[0].mxu0
        %v1273 = vadd.f32 %v434, %v1272
        %v1274 = vpop.f32.mrb[0].mxu0
        %1275 = vmatprep.mubr.f32.mxu0 0.0
        %1276 = vmatmul.mubr.f32.gmra.mrb[0].mxu0 %v672
        %v1277 = vpop.f32.mrb[0].mxu0
        %v1278 = vadd.f32 %v434, %v1277
        %v1279 = vpop.f32.mrb[0].mxu0
        %1280 = vmatprep.mubr.f32.mxu0 0.0
        %1281 = vmatmul.mubr.f32.gmra.mrb[0].mxu0 %v675
        %v1282 = vpop.f32.mrb[0].mxu0
        %v1283 = vadd.f32 %v434, %v1282
        %v1284 = vpop.f32.mrb[0].mxu0
        %1285 = vmatprep.mubr.f32.mxu0 0.0
        %1286 = vmatmul.mubr.f32.gmra.mrb[0].mxu0 %v678
        %v1287 = vpop.f32.mrb[0].mxu0
        %v1288 = vadd.f32 %v434, %v1287
        %v1289 = vpop.f32.mrb[0].mxu0
        %1290 = vmatprep.mubr.f32.mxu0 0.0
        %1291 = vmatmul.mubr.f32.gmra.mrb[0].mxu0 %v681
        %v1292 = vpop.f32.mrb[0].mxu0
        %v1293 = vadd.f32 %v434, %v1292
        %v1294 = vpop.f32.mrb[0].mxu0
        %1295 = vmatprep.mubr.f32.mxu0 0.0
        %1296 = vmatmul.mubr.f32.gmra.mrb[0].mxu0 %v684
        %v1297 = vpop.f32.mrb[0].mxu0
        %v1298 = vadd.f32 %v434, %v1297
        %v1299 = vpop.f32.mrb[0].mxu0
        %1300 = vmatprep.mubr.f32.mxu0 0.0
        %1301 = vmatmul.mubr.f32.gmra.mrb[0].mxu0 %v687
        %v1302 = vpop.f32.mrb[0].mxu0
        %v1303 = vadd.f32 %v434, %v1302
        %v1304 = vpop.f32.mrb[0].mxu0
        %1305 = vmatprep.mubr.f32.mxu0 0.0
        %1306 = vmatmul.mubr.f32.gmra.mrb[0].mxu0 %v690
        %v1307 = vpop.f32.mrb[0].mxu0
        %v1308 = vadd.f32 %v434, %v1307
        %v1309 = vpop.f32.mrb[0].mxu0
        %1310 = vmatprep.mubr.f32.mxu0 0.0
        %1311 = vmatmul.mubr.f32.gmra.mrb[0].mxu0 %v693
        %v1312 = vpop.f32.mrb[0].mxu0
        %v1313 = vadd.f32 %v434, %v1312
        %v1314 = vpop.f32.mrb[0].mxu0
        %1315 = vmatprep.mubr.f32.mxu0 0.0
        %1316 = vmatmul.mubr.f32.gmra.mrb[0].mxu0 %v696
        %v1317 = vpop.f32.mrb[0].mxu0
        %v1318 = vadd.f32 %v434, %v1317
        %v1319 = vpop.f32.mrb[0].mxu0
        %1320 = vmatprep.mubr.f32.mxu0 0.0
        %1321 = vmatmul.mubr.f32.gmra.mrb[0].mxu0 %v699
        %v1322 = vpop.f32.mrb[0].mxu0
        %v1323 = vadd.f32 %v434, %v1322
        %v1324 = vpop.f32.mrb[0].mxu0
        %1325 = vmatprep.mubr.f32.mxu0 0.0
        %1326 = vmatmul.mubr.f32.gmra.mrb[0].mxu0 %v702
        %v1327 = vpop.f32.mrb[0].mxu0
        %v1328 = vadd.f32 %v434, %v1327
        %v1329 = vpop.f32.mrb[0].mxu0
        %1330 = vmatprep.mubr.f32.mxu0 0.0
        %1331 = vmatmul.mubr.f32.gmra.mrb[0].mxu0 %v705
        %v1332 = vpop.f32.mrb[0].mxu0
        %v1333 = vadd.f32 %v434, %v1332
        %v1334 = vpop.f32.mrb[0].mxu0
        %1335 = vmatprep.mubr.f32.mxu0 0.0
        %1336 = vmatmul.mubr.f32.gmra.mrb[0].mxu0 %v708
        %v1337 = vpop.f32.mrb[0].mxu0
        %v1338 = vadd.f32 %v434, %v1337
        %v1339 = vpop.f32.mrb[0].mxu0
        %1340 = vmatprep.mubr.f32.mxu0 0.0
        %1341 = vmatmul.mubr.f32.gmra.mrb[0].mxu0 %v711
        %v1342 = vpop.f32.mrb[0].mxu0
        %v1343 = vadd.f32 %v434, %v1342
        %v1344 = vpop.f32.mrb[0].mxu0
        %1345 = vmatprep.mubr.f32.mxu0 0.0
        %1346 = vmatmul.mubr.f32.gmra.mrb[0].mxu0 %v714
        %v1347 = vpop.f32.mrb[0].mxu0
        %v1348 = vadd.f32 %v434, %v1347
        %v1349 = vpop.f32.mrb[0].mxu0
        %1350 = vmatprep.mubr.f32.mxu0 0.0
        %1351 = vmatmul.mubr.f32.gmra.mrb[0].mxu0 %v717
        %v1352 = vpop.f32.mrb[0].mxu0
        %v1353 = vadd.f32 %v434, %v1352
        %v1354 = vpop.f32.mrb[0].mxu0
        %1355 = vmatprep.mubr.f32.mxu0 0.0
        %1356 = vmatmul.mubr.f32.gmra.mrb[0].mxu0 %v720
        %v1357 = vpop.f32.mrb[0].mxu0
        %v1358 = vadd.f32 %v434, %v1357
        %v1359 = vpop.f32.mrb[0].mxu0
        %1360 = vmatprep.mubr.f32.mxu0 0.0
        %1361 = vmatmul.mubr.f32.gmra.mrb[0].mxu0 %v723
        %v1362 = vpop.f32.mrb[0].mxu0
        %v1363 = vadd.f32 %v434, %v1362
        %v1364 = vpop.f32.mrb[0].mxu0
        %1365 = vmatprep.mubr.f32.mxu0 0.0
        %1366 = vmatmul.mubr.f32.gmra.mrb[0].mxu0 %v726
        %v1367 = vpop.f32.mrb[0].mxu0
        %v1368 = vadd.f32 %v434, %v1367
        %v1369 = vpop.f32.mrb[0].mxu0
        %1370 = vmatprep.mubr.f32.mxu0 0.0
        %1371 = vmatmul.mubr.f32.gmra.mrb[0].mxu0 %v729
        %v1372 = vpop.f32.mrb[0].mxu0
        %v1373 = vadd.f32 %v434, %v1372
        %v1374 = vpop.f32.mrb[0].mxu0
        %1375 = vmatprep.mubr.f32.mxu0 0.0
        %1376 = vmatmul.mubr.f32.gmra.mrb[0].mxu0 %v732
        %v1377 = vpop.f32.mrb[0].mxu0
        %v1378 = vadd.f32 %v434, %v1377
        %v1379 = vpop.f32.mrb[0].mxu0
        %1380 = vmatprep.mubr.f32.mxu0 0.0
        %1381 = vmatmul.mubr.f32.gmra.mrb[0].mxu0 %v735
        %v1382 = vpop.f32.mrb[0].mxu0
        %v1383 = vadd.f32 %v434, %v1382
        %v1384 = vpop.f32.mrb[0].mxu0
        %1385 = vmatprep.mubr.f32.mxu0 0.0
        %1386 = vmatmul.mubr.f32.gmra.mrb[0].mxu0 %v738
        %v1387 = vpop.f32.mrb[0].mxu0
        %v1388 = vadd.f32 %v434, %v1387
        %v1389 = vpop.f32.mrb[0].mxu0
        %1390 = vmatprep.mubr.f32.mxu0 0.0
        %1391 = vmatmul.mubr.f32.gmra.mrb[0].mxu0 %v741
        %v1392 = vpop.f32.mrb[0].mxu0
        %v1393 = vadd.f32 %v434, %v1392
        %v1394 = vpop.f32.mrb[0].mxu0
        %1395 = vmatprep.mubr.f32.mxu0 0.0
        %1396 = vmatmul.mubr.f32.gmra.mrb[0].mxu0 %v744
        %v1397 = vpop.f32.mrb[0].mxu0
        %v1398 = vadd.f32 %v434, %v1397
        %v1399 = vpop.f32.mrb[0].mxu0
        %1400 = vmatprep.mubr.f32.mxu0 0.0
        %1401 = vmatmul.mubr.f32.gmra.mrb[0].mxu0 %v747
        %v1402 = vpop.f32.mrb[0].mxu0
        %v1403 = vadd.f32 %v434, %v1402
        %v1404 = vpop.f32.mrb[0].mxu0
        %1405 = vmatprep.mubr.f32.mxu0 0.0
        %1406 = vmatmul.mubr.f32.gmra.mrb[0].mxu0 %v750
        %v1407 = vpop.f32.mrb[0].mxu0
        %v1408 = vadd.f32 %v434, %v1407
        %v1409 = vpop.f32.mrb[0].mxu0
        %1410 = vmatprep.mubr.f32.mxu0 0.0
        %1411 = vmatmul.mubr.f32.gmra.mrb[0].mxu0 %v753
        %v1412 = vpop.f32.mrb[0].mxu0
        %v1413 = vadd.f32 %v434, %v1412
        %v1414 = vpop.f32.mrb[0].mxu0
        %1415 = vmatprep.mubr.f32.mxu0 0.0
        %1416 = vmatmul.mubr.f32.gmra.mrb[0].mxu0 %v756
        %v1417 = vpop.f32.mrb[0].mxu0
        %v1418 = vadd.f32 %v434, %v1417
        %v1419 = vpop.f32.mrb[0].mxu0
        %1420 = vmatprep.mubr.f32.mxu0 0.0
        %1421 = vmatmul.mubr.f32.gmra.mrb[0].mxu0 %v759
        %v1422 = vpop.f32.mrb[0].mxu0
        %v1423 = vadd.f32 %v434, %v1422
        %v1424 = vpop.f32.mrb[0].mxu0
        %1425 = vmatprep.mubr.f32.mxu0 0.0
        %1426 = vmatmul.mubr.f32.gmra.mrb[0].mxu0 %v762
        %v1427 = vpop.f32.mrb[0].mxu0
        %v1428 = vadd.f32 %v434, %v1427
        %v1429 = vpop.f32.mrb[0].mxu0
        %1430 = vmatprep.mubr.f32.mxu0 0.0
        %1431 = vmatmul.mubr.f32.gmra.mrb[0].mxu0 %v765
        %v1432 = vpop.f32.mrb[0].mxu0
        %v1433 = vadd.f32 %v434, %v1432
        %v1434 = vpop.f32.mrb[0].mxu0
        %1435 = vmatprep.mubr.f32.mxu0 0.0
        %1436 = vmatmul.mubr.f32.gmra.mrb[0].mxu0 %v768
        %v1437 = vpop.f32.mrb[0].mxu0
        %v1438 = vadd.f32 %v434, %v1437
        %v1439 = vpop.f32.mrb[0].mxu0
        %1440 = vmatprep.mubr.f32.mxu0 0.0
        %1441 = vmatmul.mubr.f32.gmra.mrb[0].mxu0 %v771
        %v1442 = vpop.f32.mrb[0].mxu0
        %v1443 = vadd.f32 %v434, %v1442
        %v1444 = vpop.f32.mrb[0].mxu0
        %1445 = vmatprep.mubr.f32.mxu0 0.0
        %1446 = vmatmul.mubr.f32.gmra.mrb[0].mxu0 %v774
        %v1447 = vpop.f32.mrb[0].mxu0
        %v1448 = vadd.f32 %v434, %v1447
        %v1449 = vpop.f32.mrb[0].mxu0
        %1450 = vmatprep.mubr.f32.mxu0 0.0
        %1451 = vmatmul.mubr.f32.gmra.mrb[0].mxu0 %v777
        %v1452 = vpop.f32.mrb[0].mxu0
        %v1453 = vadd.f32 %v434, %v1452
        %v1454 = vpop.f32.mrb[0].mxu0
        %1455 = vmatprep.mubr.f32.mxu0 0.0
        %1456 = vmatmul.mubr.f32.gmra.mrb[0].mxu0 %v780
        %v1457 = vpop.f32.mrb[0].mxu0
        %v1458 = vadd.f32 %v434, %v1457
        %v1459 = vpop.f32.mrb[0].mxu0
        %1460 = vmatprep.mubr.f32.mxu0 0.0
        %1461 = vmatmul.mubr.f32.gmra.mrb[0].mxu0 %v783
        %v1462 = vpop.f32.mrb[0].mxu0
        %v1463 = vadd.f32 %v434, %v1462
        %v1464 = vpop.f32.mrb[0].mxu0
        %1465 = vmatprep.mubr.f32.mxu0 0.0
        %1466 = vmatmul.mubr.f32.gmra.mrb[0].mxu0 %v786
        %v1467 = vpop.f32.mrb[0].mxu0
        %v1468 = vadd.f32 %v434, %v1467
        %v1469 = vpop.f32.mrb[0].mxu0
        %1470 = vmatprep.mubr.f32.mxu0 0.0
        %1471 = vmatmul.mubr.f32.gmra.mrb[0].mxu0 %v789
        %v1472 = vpop.f32.mrb[0].mxu0
        %v1473 = vadd.f32 %v434, %v1472
        %v1474 = vpop.f32.mrb[0].mxu0
        %1475 = vmatprep.mubr.f32.mxu0 0.0
        %1476 = vmatmul.mubr.f32.gmra.mrb[0].mxu0 %v792
        %v1477 = vpop.f32.mrb[0].mxu0
        %v1478 = vadd.f32 %v434, %v1477
        %v1479 = vpop.f32.mrb[0].mxu0
        %1480 = vmatprep.mubr.f32.mxu0 0.0
        %1481 = vmatmul.mubr.f32.gmra.mrb[0].mxu0 %v795
        %v1482 = vpop.f32.mrb[0].mxu0
        %v1483 = vadd.f32 %v434, %v1482
        %v1484 = vpop.f32.mrb[0].mxu0
        %1485 = vmatprep.mubr.f32.mxu0 0.0
        %1486 = vmatmul.mubr.f32.gmra.mrb[0].mxu0 %v798
        %v1487 = vpop.f32.mrb[0].mxu0
        %v1488 = vadd.f32 %v434, %v1487
        %v1489 = vpop.f32.mrb[0].mxu0
        %1490 = vmatprep.mubr.f32.mxu0 0.0
        %1491 = vmatmul.mubr.f32.gmra.mrb[0].mxu0 %v801
        %v1492 = vpop.f32.mrb[0].mxu0
        %v1493 = vadd.f32 %v434, %v1492
        %v1494 = vpop.f32.mrb[0].mxu0
        %1495 = vmatprep.mubr.f32.mxu0 0.0
        %1496 = vmatmul.mubr.f32.gmra.mrb[0].mxu0 %v804
        %v1497 = vpop.f32.mrb[0].mxu0
        %v1498 = vadd.f32 %v434, %v1497
        %v1499 = vpop.f32.mrb[0].mxu0
        %1500 = vmatprep.mubr.f32.mxu0 0.0
        %1501 = vmatmul.mubr.f32.gmra.mrb[0].mxu0 %v807
        %v1502 = vpop.f32.mrb[0].mxu0
        %v1503 = vadd.f32 %v434, %v1502
        %v1504 = vpop.f32.mrb[0].mxu0
        %1505 = vmatprep.mubr.f32.mxu0 0.0
        %1506 = vmatmul.mubr.f32.gmra.mrb[0].mxu0 %v810
        %v1507 = vpop.f32.mrb[0].mxu0
        %v1508 = vadd.f32 %v434, %v1507
        %v1509 = vpop.f32.mrb[0].mxu0
        %1510 = vmatprep.mubr.f32.mxu0 0.0
        %1511 = vmatmul.mubr.f32.gmra.mrb[0].mxu0 %v813
        %v1512 = vpop.f32.mrb[0].mxu0
        %v1513 = vadd.f32 %v434, %v1512
        %v1514 = vpop.f32.mrb[0].mxu0
        %1515 = vmatprep.mubr.f32.mxu0 0.0
        %1516 = vmatmul.mubr.f32.gmra.mrb[0].mxu0 %v816
        %v1517 = vpop.f32.mrb[0].mxu0
        %v1518 = vadd.f32 %v434, %v1517
        %v1519 = vpop.f32.mrb[0].mxu0
        %1520 = vmatprep.mubr.f32.mxu0 0.0
        %1521 = vmatmul.mubr.f32.gmra.mrb[0].mxu0 %v819
        %v1522 = vpop.f32.mrb[0].mxu0
        %v1523 = vadd.f32 %v434, %v1522
        %v1524 = vpop.f32.mrb[0].mxu0
        %1525 = vdwg.mxu0
        %v1526 = vmax.f32 %v888, 0.0
        %v1527 = vmax.f32 %v893, 0.0
        %v1528 = vmax.f32 %v898, 0.0
        %v1529 = vmax.f32 %v903, 0.0
        %v1530 = vmax.f32 %v908, 0.0
        %v1531 = vmax.f32 %v913, 0.0
        %v1532 = vmax.f32 %v918, 0.0
        %v1533 = vmax.f32 %v923, 0.0
        %v1534 = vmax.f32 %v928, 0.0
        %v1535 = vmax.f32 %v933, 0.0
        %v1536 = vmax.f32 %v938, 0.0
        %v1537 = vmax.f32 %v943, 0.0
        %v1538 = vmax.f32 %v948, 0.0
        %v1539 = vmax.f32 %v953, 0.0
        %v1540 = vmax.f32 %v958, 0.0
        %v1541 = vmax.f32 %v963, 0.0
        %v1542 = vmax.f32 %v968, 0.0
        %v1543 = vmax.f32 %v973, 0.0
        %v1544 = vmax.f32 %v978, 0.0
        %v1545 = vmax.f32 %v983, 0.0
        %v1546 = vmax.f32 %v988, 0.0
        %v1547 = vmax.f32 %v993, 0.0
        %v1548 = vmax.f32 %v998, 0.0
        %v1549 = vmax.f32 %v1003, 0.0
        %v1550 = vmax.f32 %v1008, 0.0
        %v1551 = vmax.f32 %v1013, 0.0
        %v1552 = vmax.f32 %v1018, 0.0
        %v1553 = vmax.f32 %v1023, 0.0
        %v1554 = vmax.f32 %v1028, 0.0
        %v1555 = vmax.f32 %v1033, 0.0
        %v1556 = vmax.f32 %v1038, 0.0
        %v1557 = vmax.f32 %v1043, 0.0
        %v1558 = vmax.f32 %v1048, 0.0
        %v1559 = vmax.f32 %v1053, 0.0
        %v1560 = vmax.f32 %v1058, 0.0
        %v1561 = vmax.f32 %v1063, 0.0
        %v1562 = vmax.f32 %v1068, 0.0
        %v1563 = vmax.f32 %v1073, 0.0
        %v1564 = vmax.f32 %v1078, 0.0
        %v1565 = vmax.f32 %v1083, 0.0
        %v1566 = vmax.f32 %v1088, 0.0
        %v1567 = vmax.f32 %v1093, 0.0
        %v1568 = vmax.f32 %v1098, 0.0
        %v1569 = vmax.f32 %v1103, 0.0
        %v1570 = vmax.f32 %v1108, 0.0
        %v1571 = vmax.f32 %v1113, 0.0
        %v1572 = vmax.f32 %v1118, 0.0
        %v1573 = vmax.f32 %v1123, 0.0
        %v1574 = vmax.f32 %v1128, 0.0
        %v1575 = vmax.f32 %v1133, 0.0
        %v1576 = vmax.f32 %v1138, 0.0
        %v1577 = vmax.f32 %v1143, 0.0
        %v1578 = vmax.f32 %v1148, 0.0
        %v1579 = vmax.f32 %v1153, 0.0
        %v1580 = vmax.f32 %v1158, 0.0
        %v1581 = vmax.f32 %v1163, 0.0
        %v1582 = vmax.f32 %v1168, 0.0
        %v1583 = vmax.f32 %v1173, 0.0
        %v1584 = vmax.f32 %v1178, 0.0
        %v1585 = vmax.f32 %v1183, 0.0
        %v1586 = vmax.f32 %v1188, 0.0
        %v1587 = vmax.f32 %v1193, 0.0
        %v1588 = vmax.f32 %v1198, 0.0
        %v1589 = vmax.f32 %v1203, 0.0
        %v1590 = vmax.f32 %v1208, 0.0
        %v1591 = vmax.f32 %v1213, 0.0
        %v1592 = vmax.f32 %v1218, 0.0
        %v1593 = vmax.f32 %v1223, 0.0
        %v1594 = vmax.f32 %v1228, 0.0
        %v1595 = vmax.f32 %v1233, 0.0
        %v1596 = vmax.f32 %v1238, 0.0
        %v1597 = vmax.f32 %v1243, 0.0
        %v1598 = vmax.f32 %v1248, 0.0
        %v1599 = vmax.f32 %v1253, 0.0
        %v1600 = vmax.f32 %v1258, 0.0
        %v1601 = vmax.f32 %v1263, 0.0
        %v1602 = vmax.f32 %v1268, 0.0
        %v1603 = vmax.f32 %v1273, 0.0
        %v1604 = vmax.f32 %v1278, 0.0
        %v1605 = vmax.f32 %v1283, 0.0
        %v1606 = vmax.f32 %v1288, 0.0
        %v1607 = vmax.f32 %v1293, 0.0
        %v1608 = vmax.f32 %v1298, 0.0
        %v1609 = vmax.f32 %v1303, 0.0
        %v1610 = vmax.f32 %v1308, 0.0
        %v1611 = vmax.f32 %v1313, 0.0
        %v1612 = vmax.f32 %v1318, 0.0
        %v1613 = vmax.f32 %v1323, 0.0
        %v1614 = vmax.f32 %v1328, 0.0
        %v1615 = vmax.f32 %v1333, 0.0
        %v1616 = vmax.f32 %v1338, 0.0
        %v1617 = vmax.f32 %v1343, 0.0
        %v1618 = vmax.f32 %v1348, 0.0
        %v1619 = vmax.f32 %v1353, 0.0
        %v1620 = vmax.f32 %v1358, 0.0
        %v1621 = vmax.f32 %v1363, 0.0
        %v1622 = vmax.f32 %v1368, 0.0
        %v1623 = vmax.f32 %v1373, 0.0
        %v1624 = vmax.f32 %v1378, 0.0
        %v1625 = vmax.f32 %v1383, 0.0
        %v1626 = vmax.f32 %v1388, 0.0
        %v1627 = vmax.f32 %v1393, 0.0
        %v1628 = vmax.f32 %v1398, 0.0
        %v1629 = vmax.f32 %v1403, 0.0
        %v1630 = vmax.f32 %v1408, 0.0
        %v1631 = vmax.f32 %v1413, 0.0
        %v1632 = vmax.f32 %v1418, 0.0
        %v1633 = vmax.f32 %v1423, 0.0
        %v1634 = vmax.f32 %v1428, 0.0
        %v1635 = vmax.f32 %v1433, 0.0
        %v1636 = vmax.f32 %v1438, 0.0
        %v1637 = vmax.f32 %v1443, 0.0
        %v1638 = vmax.f32 %v1448, 0.0
        %v1639 = vmax.f32 %v1453, 0.0
        %v1640 = vmax.f32 %v1458, 0.0
        %v1641 = vmax.f32 %v1463, 0.0
        %v1642 = vmax.f32 %v1468, 0.0
        %v1643 = vmax.f32 %v1473, 0.0
        %v1644 = vmax.f32 %v1478, 0.0
        %v1645 = vmax.f32 %v1483, 0.0
        %v1646 = vmax.f32 %v1488, 0.0
        %v1647 = vmax.f32 %v1493, 0.0
        %v1648 = vmax.f32 %v1498, 0.0
        %v1649 = vmax.f32 %v1503, 0.0
        %v1650 = vmax.f32 %v1508, 0.0
        %v1651 = vmax.f32 %v1513, 0.0
        %v1652 = vmax.f32 %v1518, 0.0
        %v1653 = vmax.f32 %v1523, 0.0
        %v1654 = vld [vmem:[%s3] sm:$0xff]
        %v1655 = vld [vmem:[%s3 + $0x8] sm:$0xff]
        %v1656 = vld [vmem:[%s3 + $0x10] sm:$0xff]
        %v1657 = vld [vmem:[%s3 + $0x18] sm:$0xff]
        %v1658 = vld [vmem:[%s3 + $0x20] sm:$0xff]
        %v1659 = vld [vmem:[%s3 + $0x28] sm:$0xff]
        %v1660 = vld [vmem:[%s3 + $0x30] sm:$0xff]
        %v1661 = vld [vmem:[%s3 + $0x38] sm:$0xff]
        %v1662 = vld [vmem:[%s3 + $0x40] sm:$0xff]
        %v1663 = vld [vmem:[%s3 + $0x48] sm:$0xff]
        %v1664 = vld [vmem:[%s3 + $0x50] sm:$0xff]
        %v1665 = vld [vmem:[%s3 + $0x58] sm:$0xff]
        %v1666 = vld [vmem:[%s3 + $0x60] sm:$0xff]
        %v1667 = vld [vmem:[%s3 + $0x68] sm:$0xff]
        %v1668 = vld [vmem:[%s3 + $0x70] sm:$0xff]
        %v1669 = vld [vmem:[%s3 + $0x78] sm:$0xff]
        %v1670 = vld [vmem:[%s4] sm:$0x1]
        %v1672 = vlaneseq
        %v1673 = vshrl.u32 %v1672, 7
        %v1674 = vsub.s32 0, %v1673
        %v1675 = vrot.slane %v1670, %v1674
        %1677 = vmatprep.subr.mxu0 0.0
        %1678 = vmatpush1.msra.mxu0 %v1654
        %1679 = vmatprep.subr.mxu0 0.0
        %1680 = vmatpush1.msra.mxu0 %v1655
        %1681 = vmatprep.subr.mxu0 0.0
        %1682 = vmatpush1.msra.mxu0 %v1656
        %1683 = vmatprep.subr.mxu0 0.0
        %1684 = vmatpush1.msra.mxu0 %v1657
        %1685 = vmatprep.subr.mxu0 0.0
        %1686 = vmatpush1.msra.mxu0 %v1658
        %1687 = vmatprep.subr.mxu0 0.0
        %1688 = vmatpush1.msra.mxu0 %v1659
        %1689 = vmatprep.subr.mxu0 0.0
        %1690 = vmatpush1.msra.mxu0 %v1660
        %1691 = vmatprep.subr.mxu0 0.0
        %1692 = vmatpush1.msra.mxu0 %v1661
        %1693 = vmatprep.subr.mxu0 0.0
        %1694 = vmatpush1.msra.mxu0 %v1662
        %1695 = vmatprep.subr.mxu0 0.0
        %1696 = vmatpush1.msra.mxu0 %v1663
        %1697 = vmatprep.subr.mxu0 0.0
        %1698 = vmatpush1.msra.mxu0 %v1664
        %1699 = vmatprep.subr.mxu0 0.0
        %1700 = vmatpush1.msra.mxu0 %v1665
        %1701 = vmatprep.subr.mxu0 0.0
        %1702 = vmatpush1.msra.mxu0 %v1666
        %1703 = vmatprep.subr.mxu0 0.0
        %1704 = vmatpush1.msra.mxu0 %v1667
        %1705 = vmatprep.subr.mxu0 0.0
        %1706 = vmatpush1.msra.mxu0 %v1668
        %1707 = vmatprep.subr.mxu0 0.0
        %1708 = vmatpush1.msra.mxu0 %v1669
        %1709 = vmatprep.subr.mxu0 0.0
        %1710 = vmatpush1.msra.mxu0 0.0
        %1711 = vmatprep.subr.mxu0 0.0
        %1712 = vmatpush1.msra.mxu0 0.0
        %1713 = vmatprep.subr.mxu0 0.0
        %1714 = vmatpush1.msra.mxu0 0.0
        %1715 = vmatprep.subr.mxu0 0.0
        %1716 = vmatpush1.msra.mxu0 0.0
        %1717 = vmatprep.subr.mxu0 0.0
        %1718 = vmatpush1.msra.mxu0 0.0
        %1719 = vmatprep.subr.mxu0 0.0
        %1720 = vmatpush1.msra.mxu0 0.0
        %1721 = vmatprep.subr.mxu0 0.0
        %1722 = vmatpush1.msra.mxu0 0.0
        %1723 = vmatprep.subr.mxu0 0.0
        %1724 = vmatpush1.msra.mxu0 0.0
        %1725 = vmatprep.subr.mxu0 0.0
        %1726 = vmatpush1.msra.mxu0 0.0
        %1727 = vmatprep.subr.mxu0 0.0
        %1728 = vmatpush1.msra.mxu0 0.0
        %1729 = vmatprep.subr.mxu0 0.0
        %1730 = vmatpush1.msra.mxu0 0.0
        %1731 = vmatprep.subr.mxu0 0.0
        %1732 = vmatpush1.msra.mxu0 0.0
        %1733 = vmatprep.subr.mxu0 0.0
        %1734 = vmatpush1.msra.mxu0 0.0
        %1735 = vmatprep.subr.mxu0 0.0
        %1736 = vmatpush1.msra.mxu0 0.0
        %1737 = vmatprep.subr.mxu0 0.0
        %1738 = vmatpush1.msra.mxu0 0.0
        %1739 = vmatprep.subr.mxu0 0.0
        %1740 = vmatpush1.msra.mxu0 0.0
        %1741 = vmatprep.mubr.f32.mxu0 0.0
        %1742 = vmatmul.mubr.f32.gmra.mrb[0].mxu0 %v1526
        %v1743 = vpop.f32.mrb[0].mxu0
        %v1744 = vadd.f32 %v1675, %v1743
        %v1745 = vpop.f32.mrb[0].mxu0
        %1746 = vmatprep.mubr.f32.mxu0 0.0
        %1747 = vmatmul.mubr.f32.gmra.mrb[0].mxu0 %v1527
        %v1748 = vpop.f32.mrb[0].mxu0
        %v1749 = vadd.f32 %v1675, %v1748
        %v1750 = vpop.f32.mrb[0].mxu0
        %1751 = vmatprep.mubr.f32.mxu0 0.0
        %1752 = vmatmul.mubr.f32.gmra.mrb[0].mxu0 %v1528
        %v1753 = vpop.f32.mrb[0].mxu0
        %v1754 = vadd.f32 %v1675, %v1753
        %v1755 = vpop.f32.mrb[0].mxu0
        %1756 = vmatprep.mubr.f32.mxu0 0.0
        %1757 = vmatmul.mubr.f32.gmra.mrb[0].mxu0 %v1529
        %v1758 = vpop.f32.mrb[0].mxu0
        %v1759 = vadd.f32 %v1675, %v1758
        %v1760 = vpop.f32.mrb[0].mxu0
        %1761 = vmatprep.mubr.f32.mxu0 0.0
        %1762 = vmatmul.mubr.f32.gmra.mrb[0].mxu0 %v1530
        %v1763 = vpop.f32.mrb[0].mxu0
        %v1764 = vadd.f32 %v1675, %v1763
        %v1765 = vpop.f32.mrb[0].mxu0
        %1766 = vmatprep.mubr.f32.mxu0 0.0
        %1767 = vmatmul.mubr.f32.gmra.mrb[0].mxu0 %v1531
        %v1768 = vpop.f32.mrb[0].mxu0
        %v1769 = vadd.f32 %v1675, %v1768
        %v1770 = vpop.f32.mrb[0].mxu0
        %1771 = vmatprep.mubr.f32.mxu0 0.0
        %1772 = vmatmul.mubr.f32.gmra.mrb[0].mxu0 %v1532
        %v1773 = vpop.f32.mrb[0].mxu0
        %v1774 = vadd.f32 %v1675, %v1773
        %v1775 = vpop.f32.mrb[0].mxu0
        %1776 = vmatprep.mubr.f32.mxu0 0.0
        %1777 = vmatmul.mubr.f32.gmra.mrb[0].mxu0 %v1533
        %v1778 = vpop.f32.mrb[0].mxu0
        %v1779 = vadd.f32 %v1675, %v1778
        %v1780 = vpop.f32.mrb[0].mxu0
        %1781 = vmatprep.mubr.f32.mxu0 0.0
        %1782 = vmatmul.mubr.f32.gmra.mrb[0].mxu0 %v1534
        %v1783 = vpop.f32.mrb[0].mxu0
        %v1784 = vadd.f32 %v1675, %v1783
        %v1785 = vpop.f32.mrb[0].mxu0
        %1786 = vmatprep.mubr.f32.mxu0 0.0
        %1787 = vmatmul.mubr.f32.gmra.mrb[0].mxu0 %v1535
        %v1788 = vpop.f32.mrb[0].mxu0
        %v1789 = vadd.f32 %v1675, %v1788
        %v1790 = vpop.f32.mrb[0].mxu0
        %1791 = vmatprep.mubr.f32.mxu0 0.0
        %1792 = vmatmul.mubr.f32.gmra.mrb[0].mxu0 %v1536
        %v1793 = vpop.f32.mrb[0].mxu0
        %v1794 = vadd.f32 %v1675, %v1793
        %v1795 = vpop.f32.mrb[0].mxu0
        %1796 = vmatprep.mubr.f32.mxu0 0.0
        %1797 = vmatmul.mubr.f32.gmra.mrb[0].mxu0 %v1537
        %v1798 = vpop.f32.mrb[0].mxu0
        %v1799 = vadd.f32 %v1675, %v1798
        %v1800 = vpop.f32.mrb[0].mxu0
        %1801 = vmatprep.mubr.f32.mxu0 0.0
        %1802 = vmatmul.mubr.f32.gmra.mrb[0].mxu0 %v1538
        %v1803 = vpop.f32.mrb[0].mxu0
        %v1804 = vadd.f32 %v1675, %v1803
        %v1805 = vpop.f32.mrb[0].mxu0
        %1806 = vmatprep.mubr.f32.mxu0 0.0
        %1807 = vmatmul.mubr.f32.gmra.mrb[0].mxu0 %v1539
        %v1808 = vpop.f32.mrb[0].mxu0
        %v1809 = vadd.f32 %v1675, %v1808
        %v1810 = vpop.f32.mrb[0].mxu0
        %1811 = vmatprep.mubr.f32.mxu0 0.0
        %1812 = vmatmul.mubr.f32.gmra.mrb[0].mxu0 %v1540
        %v1813 = vpop.f32.mrb[0].mxu0
        %v1814 = vadd.f32 %v1675, %v1813
        %v1815 = vpop.f32.mrb[0].mxu0
        %1816 = vmatprep.mubr.f32.mxu0 0.0
        %1817 = vmatmul.mubr.f32.gmra.mrb[0].mxu0 %v1541
        %v1818 = vpop.f32.mrb[0].mxu0
        %v1819 = vadd.f32 %v1675, %v1818
        %v1820 = vpop.f32.mrb[0].mxu0
        %1821 = vmatprep.mubr.f32.mxu0 0.0
        %1822 = vmatmul.mubr.f32.gmra.mrb[0].mxu0 %v1542
        %v1823 = vpop.f32.mrb[0].mxu0
        %v1824 = vadd.f32 %v1675, %v1823
        %v1825 = vpop.f32.mrb[0].mxu0
        %1826 = vmatprep.mubr.f32.mxu0 0.0
        %1827 = vmatmul.mubr.f32.gmra.mrb[0].mxu0 %v1543
        %v1828 = vpop.f32.mrb[0].mxu0
        %v1829 = vadd.f32 %v1675, %v1828
        %v1830 = vpop.f32.mrb[0].mxu0
        %1831 = vmatprep.mubr.f32.mxu0 0.0
        %1832 = vmatmul.mubr.f32.gmra.mrb[0].mxu0 %v1544
        %v1833 = vpop.f32.mrb[0].mxu0
        %v1834 = vadd.f32 %v1675, %v1833
        %v1835 = vpop.f32.mrb[0].mxu0
        %1836 = vmatprep.mubr.f32.mxu0 0.0
        %1837 = vmatmul.mubr.f32.gmra.mrb[0].mxu0 %v1545
        %v1838 = vpop.f32.mrb[0].mxu0
        %v1839 = vadd.f32 %v1675, %v1838
        %v1840 = vpop.f32.mrb[0].mxu0
        %1841 = vmatprep.mubr.f32.mxu0 0.0
        %1842 = vmatmul.mubr.f32.gmra.mrb[0].mxu0 %v1546
        %v1843 = vpop.f32.mrb[0].mxu0
        %v1844 = vadd.f32 %v1675, %v1843
        %v1845 = vpop.f32.mrb[0].mxu0
        %1846 = vmatprep.mubr.f32.mxu0 0.0
        %1847 = vmatmul.mubr.f32.gmra.mrb[0].mxu0 %v1547
        %v1848 = vpop.f32.mrb[0].mxu0
        %v1849 = vadd.f32 %v1675, %v1848
        %v1850 = vpop.f32.mrb[0].mxu0
        %1851 = vmatprep.mubr.f32.mxu0 0.0
        %1852 = vmatmul.mubr.f32.gmra.mrb[0].mxu0 %v1548
        %v1853 = vpop.f32.mrb[0].mxu0
        %v1854 = vadd.f32 %v1675, %v1853
        %v1855 = vpop.f32.mrb[0].mxu0
        %1856 = vmatprep.mubr.f32.mxu0 0.0
        %1857 = vmatmul.mubr.f32.gmra.mrb[0].mxu0 %v1549
        %v1858 = vpop.f32.mrb[0].mxu0
        %v1859 = vadd.f32 %v1675, %v1858
        %v1860 = vpop.f32.mrb[0].mxu0
        %1861 = vmatprep.mubr.f32.mxu0 0.0
        %1862 = vmatmul.mubr.f32.gmra.mrb[0].mxu0 %v1550
        %v1863 = vpop.f32.mrb[0].mxu0
        %v1864 = vadd.f32 %v1675, %v1863
        %v1865 = vpop.f32.mrb[0].mxu0
        %1866 = vmatprep.mubr.f32.mxu0 0.0
        %1867 = vmatmul.mubr.f32.gmra.mrb[0].mxu0 %v1551
        %v1868 = vpop.f32.mrb[0].mxu0
        %v1869 = vadd.f32 %v1675, %v1868
        %v1870 = vpop.f32.mrb[0].mxu0
        %1871 = vmatprep.mubr.f32.mxu0 0.0
        %1872 = vmatmul.mubr.f32.gmra.mrb[0].mxu0 %v1552
        %v1873 = vpop.f32.mrb[0].mxu0
        %v1874 = vadd.f32 %v1675, %v1873
        %v1875 = vpop.f32.mrb[0].mxu0
        %1876 = vmatprep.mubr.f32.mxu0 0.0
        %1877 = vmatmul.mubr.f32.gmra.mrb[0].mxu0 %v1553
        %v1878 = vpop.f32.mrb[0].mxu0
        %v1879 = vadd.f32 %v1675, %v1878
        %v1880 = vpop.f32.mrb[0].mxu0
        %1881 = vmatprep.mubr.f32.mxu0 0.0
        %1882 = vmatmul.mubr.f32.gmra.mrb[0].mxu0 %v1554
        %v1883 = vpop.f32.mrb[0].mxu0
        %v1884 = vadd.f32 %v1675, %v1883
        %v1885 = vpop.f32.mrb[0].mxu0
        %1886 = vmatprep.mubr.f32.mxu0 0.0
        %1887 = vmatmul.mubr.f32.gmra.mrb[0].mxu0 %v1555
        %v1888 = vpop.f32.mrb[0].mxu0
        %v1889 = vadd.f32 %v1675, %v1888
        %v1890 = vpop.f32.mrb[0].mxu0
        %1891 = vmatprep.mubr.f32.mxu0 0.0
        %1892 = vmatmul.mubr.f32.gmra.mrb[0].mxu0 %v1556
        %v1893 = vpop.f32.mrb[0].mxu0
        %v1894 = vadd.f32 %v1675, %v1893
        %v1895 = vpop.f32.mrb[0].mxu0
        %1896 = vmatprep.mubr.f32.mxu0 0.0
        %1897 = vmatmul.mubr.f32.gmra.mrb[0].mxu0 %v1557
        %v1898 = vpop.f32.mrb[0].mxu0
        %v1899 = vadd.f32 %v1675, %v1898
        %v1900 = vpop.f32.mrb[0].mxu0
        %1901 = vmatprep.mubr.f32.mxu0 0.0
        %1902 = vmatmul.mubr.f32.gmra.mrb[0].mxu0 %v1558
        %v1903 = vpop.f32.mrb[0].mxu0
        %v1904 = vadd.f32 %v1675, %v1903
        %v1905 = vpop.f32.mrb[0].mxu0
        %1906 = vmatprep.mubr.f32.mxu0 0.0
        %1907 = vmatmul.mubr.f32.gmra.mrb[0].mxu0 %v1559
        %v1908 = vpop.f32.mrb[0].mxu0
        %v1909 = vadd.f32 %v1675, %v1908
        %v1910 = vpop.f32.mrb[0].mxu0
        %1911 = vmatprep.mubr.f32.mxu0 0.0
        %1912 = vmatmul.mubr.f32.gmra.mrb[0].mxu0 %v1560
        %v1913 = vpop.f32.mrb[0].mxu0
        %v1914 = vadd.f32 %v1675, %v1913
        %v1915 = vpop.f32.mrb[0].mxu0
        %1916 = vmatprep.mubr.f32.mxu0 0.0
        %1917 = vmatmul.mubr.f32.gmra.mrb[0].mxu0 %v1561
        %v1918 = vpop.f32.mrb[0].mxu0
        %v1919 = vadd.f32 %v1675, %v1918
        %v1920 = vpop.f32.mrb[0].mxu0
        %1921 = vmatprep.mubr.f32.mxu0 0.0
        %1922 = vmatmul.mubr.f32.gmra.mrb[0].mxu0 %v1562
        %v1923 = vpop.f32.mrb[0].mxu0
        %v1924 = vadd.f32 %v1675, %v1923
        %v1925 = vpop.f32.mrb[0].mxu0
        %1926 = vmatprep.mubr.f32.mxu0 0.0
        %1927 = vmatmul.mubr.f32.gmra.mrb[0].mxu0 %v1563
        %v1928 = vpop.f32.mrb[0].mxu0
        %v1929 = vadd.f32 %v1675, %v1928
        %v1930 = vpop.f32.mrb[0].mxu0
        %1931 = vmatprep.mubr.f32.mxu0 0.0
        %1932 = vmatmul.mubr.f32.gmra.mrb[0].mxu0 %v1564
        %v1933 = vpop.f32.mrb[0].mxu0
        %v1934 = vadd.f32 %v1675, %v1933
        %v1935 = vpop.f32.mrb[0].mxu0
        %1936 = vmatprep.mubr.f32.mxu0 0.0
        %1937 = vmatmul.mubr.f32.gmra.mrb[0].mxu0 %v1565
        %v1938 = vpop.f32.mrb[0].mxu0
        %v1939 = vadd.f32 %v1675, %v1938
        %v1940 = vpop.f32.mrb[0].mxu0
        %1941 = vmatprep.mubr.f32.mxu0 0.0
        %1942 = vmatmul.mubr.f32.gmra.mrb[0].mxu0 %v1566
        %v1943 = vpop.f32.mrb[0].mxu0
        %v1944 = vadd.f32 %v1675, %v1943
        %v1945 = vpop.f32.mrb[0].mxu0
        %1946 = vmatprep.mubr.f32.mxu0 0.0
        %1947 = vmatmul.mubr.f32.gmra.mrb[0].mxu0 %v1567
        %v1948 = vpop.f32.mrb[0].mxu0
        %v1949 = vadd.f32 %v1675, %v1948
        %v1950 = vpop.f32.mrb[0].mxu0
        %1951 = vmatprep.mubr.f32.mxu0 0.0
        %1952 = vmatmul.mubr.f32.gmra.mrb[0].mxu0 %v1568
        %v1953 = vpop.f32.mrb[0].mxu0
        %v1954 = vadd.f32 %v1675, %v1953
        %v1955 = vpop.f32.mrb[0].mxu0
        %1956 = vmatprep.mubr.f32.mxu0 0.0
        %1957 = vmatmul.mubr.f32.gmra.mrb[0].mxu0 %v1569
        %v1958 = vpop.f32.mrb[0].mxu0
        %v1959 = vadd.f32 %v1675, %v1958
        %v1960 = vpop.f32.mrb[0].mxu0
        %1961 = vmatprep.mubr.f32.mxu0 0.0
        %1962 = vmatmul.mubr.f32.gmra.mrb[0].mxu0 %v1570
        %v1963 = vpop.f32.mrb[0].mxu0
        %v1964 = vadd.f32 %v1675, %v1963
        %v1965 = vpop.f32.mrb[0].mxu0
        %1966 = vmatprep.mubr.f32.mxu0 0.0
        %1967 = vmatmul.mubr.f32.gmra.mrb[0].mxu0 %v1571
        %v1968 = vpop.f32.mrb[0].mxu0
        %v1969 = vadd.f32 %v1675, %v1968
        %v1970 = vpop.f32.mrb[0].mxu0
        %1971 = vmatprep.mubr.f32.mxu0 0.0
        %1972 = vmatmul.mubr.f32.gmra.mrb[0].mxu0 %v1572
        %v1973 = vpop.f32.mrb[0].mxu0
        %v1974 = vadd.f32 %v1675, %v1973
        %v1975 = vpop.f32.mrb[0].mxu0
        %1976 = vmatprep.mubr.f32.mxu0 0.0
        %1977 = vmatmul.mubr.f32.gmra.mrb[0].mxu0 %v1573
        %v1978 = vpop.f32.mrb[0].mxu0
        %v1979 = vadd.f32 %v1675, %v1978
        %v1980 = vpop.f32.mrb[0].mxu0
        %1981 = vmatprep.mubr.f32.mxu0 0.0
        %1982 = vmatmul.mubr.f32.gmra.mrb[0].mxu0 %v1574
        %v1983 = vpop.f32.mrb[0].mxu0
        %v1984 = vadd.f32 %v1675, %v1983
        %v1985 = vpop.f32.mrb[0].mxu0
        %1986 = vmatprep.mubr.f32.mxu0 0.0
        %1987 = vmatmul.mubr.f32.gmra.mrb[0].mxu0 %v1575
        %v1988 = vpop.f32.mrb[0].mxu0
        %v1989 = vadd.f32 %v1675, %v1988
        %v1990 = vpop.f32.mrb[0].mxu0
        %1991 = vmatprep.mubr.f32.mxu0 0.0
        %1992 = vmatmul.mubr.f32.gmra.mrb[0].mxu0 %v1576
        %v1993 = vpop.f32.mrb[0].mxu0
        %v1994 = vadd.f32 %v1675, %v1993
        %v1995 = vpop.f32.mrb[0].mxu0
        %1996 = vmatprep.mubr.f32.mxu0 0.0
        %1997 = vmatmul.mubr.f32.gmra.mrb[0].mxu0 %v1577
        %v1998 = vpop.f32.mrb[0].mxu0
        %v1999 = vadd.f32 %v1675, %v1998
        %v2000 = vpop.f32.mrb[0].mxu0
        %2001 = vmatprep.mubr.f32.mxu0 0.0
        %2002 = vmatmul.mubr.f32.gmra.mrb[0].mxu0 %v1578
        %v2003 = vpop.f32.mrb[0].mxu0
        %v2004 = vadd.f32 %v1675, %v2003
        %v2005 = vpop.f32.mrb[0].mxu0
        %2006 = vmatprep.mubr.f32.mxu0 0.0
        %2007 = vmatmul.mubr.f32.gmra.mrb[0].mxu0 %v1579
        %v2008 = vpop.f32.mrb[0].mxu0
        %v2009 = vadd.f32 %v1675, %v2008
        %v2010 = vpop.f32.mrb[0].mxu0
        %2011 = vmatprep.mubr.f32.mxu0 0.0
        %2012 = vmatmul.mubr.f32.gmra.mrb[0].mxu0 %v1580
        %v2013 = vpop.f32.mrb[0].mxu0
        %v2014 = vadd.f32 %v1675, %v2013
        %v2015 = vpop.f32.mrb[0].mxu0
        %2016 = vmatprep.mubr.f32.mxu0 0.0
        %2017 = vmatmul.mubr.f32.gmra.mrb[0].mxu0 %v1581
        %v2018 = vpop.f32.mrb[0].mxu0
        %v2019 = vadd.f32 %v1675, %v2018
        %v2020 = vpop.f32.mrb[0].mxu0
        %2021 = vmatprep.mubr.f32.mxu0 0.0
        %2022 = vmatmul.mubr.f32.gmra.mrb[0].mxu0 %v1582
        %v2023 = vpop.f32.mrb[0].mxu0
        %v2024 = vadd.f32 %v1675, %v2023
        %v2025 = vpop.f32.mrb[0].mxu0
        %2026 = vmatprep.mubr.f32.mxu0 0.0
        %2027 = vmatmul.mubr.f32.gmra.mrb[0].mxu0 %v1583
        %v2028 = vpop.f32.mrb[0].mxu0
        %v2029 = vadd.f32 %v1675, %v2028
        %v2030 = vpop.f32.mrb[0].mxu0
        %2031 = vmatprep.mubr.f32.mxu0 0.0
        %2032 = vmatmul.mubr.f32.gmra.mrb[0].mxu0 %v1584
        %v2033 = vpop.f32.mrb[0].mxu0
        %v2034 = vadd.f32 %v1675, %v2033
        %v2035 = vpop.f32.mrb[0].mxu0
        %2036 = vmatprep.mubr.f32.mxu0 0.0
        %2037 = vmatmul.mubr.f32.gmra.mrb[0].mxu0 %v1585
        %v2038 = vpop.f32.mrb[0].mxu0
        %v2039 = vadd.f32 %v1675, %v2038
        %v2040 = vpop.f32.mrb[0].mxu0
        %2041 = vmatprep.mubr.f32.mxu0 0.0
        %2042 = vmatmul.mubr.f32.gmra.mrb[0].mxu0 %v1586
        %v2043 = vpop.f32.mrb[0].mxu0
        %v2044 = vadd.f32 %v1675, %v2043
        %v2045 = vpop.f32.mrb[0].mxu0
        %2046 = vmatprep.mubr.f32.mxu0 0.0
        %2047 = vmatmul.mubr.f32.gmra.mrb[0].mxu0 %v1587
        %v2048 = vpop.f32.mrb[0].mxu0
        %v2049 = vadd.f32 %v1675, %v2048
        %v2050 = vpop.f32.mrb[0].mxu0
        %2051 = vmatprep.mubr.f32.mxu0 0.0
        %2052 = vmatmul.mubr.f32.gmra.mrb[0].mxu0 %v1588
        %v2053 = vpop.f32.mrb[0].mxu0
        %v2054 = vadd.f32 %v1675, %v2053
        %v2055 = vpop.f32.mrb[0].mxu0
        %2056 = vmatprep.mubr.f32.mxu0 0.0
        %2057 = vmatmul.mubr.f32.gmra.mrb[0].mxu0 %v1589
        %v2058 = vpop.f32.mrb[0].mxu0
        %v2059 = vadd.f32 %v1675, %v2058
        %v2060 = vpop.f32.mrb[0].mxu0
        %2061 = vmatprep.mubr.f32.mxu0 0.0
        %2062 = vmatmul.mubr.f32.gmra.mrb[0].mxu0 %v1590
        %v2063 = vpop.f32.mrb[0].mxu0
        %v2064 = vadd.f32 %v1675, %v2063
        %v2065 = vpop.f32.mrb[0].mxu0
        %2066 = vmatprep.mubr.f32.mxu0 0.0
        %2067 = vmatmul.mubr.f32.gmra.mrb[0].mxu0 %v1591
        %v2068 = vpop.f32.mrb[0].mxu0
        %v2069 = vadd.f32 %v1675, %v2068
        %v2070 = vpop.f32.mrb[0].mxu0
        %2071 = vmatprep.mubr.f32.mxu0 0.0
        %2072 = vmatmul.mubr.f32.gmra.mrb[0].mxu0 %v1592
        %v2073 = vpop.f32.mrb[0].mxu0
        %v2074 = vadd.f32 %v1675, %v2073
        %v2075 = vpop.f32.mrb[0].mxu0
        %2076 = vmatprep.mubr.f32.mxu0 0.0
        %2077 = vmatmul.mubr.f32.gmra.mrb[0].mxu0 %v1593
        %v2078 = vpop.f32.mrb[0].mxu0
        %v2079 = vadd.f32 %v1675, %v2078
        %v2080 = vpop.f32.mrb[0].mxu0
        %2081 = vmatprep.mubr.f32.mxu0 0.0
        %2082 = vmatmul.mubr.f32.gmra.mrb[0].mxu0 %v1594
        %v2083 = vpop.f32.mrb[0].mxu0
        %v2084 = vadd.f32 %v1675, %v2083
        %v2085 = vpop.f32.mrb[0].mxu0
        %2086 = vmatprep.mubr.f32.mxu0 0.0
        %2087 = vmatmul.mubr.f32.gmra.mrb[0].mxu0 %v1595
        %v2088 = vpop.f32.mrb[0].mxu0
        %v2089 = vadd.f32 %v1675, %v2088
        %v2090 = vpop.f32.mrb[0].mxu0
        %2091 = vmatprep.mubr.f32.mxu0 0.0
        %2092 = vmatmul.mubr.f32.gmra.mrb[0].mxu0 %v1596
        %v2093 = vpop.f32.mrb[0].mxu0
        %v2094 = vadd.f32 %v1675, %v2093
        %v2095 = vpop.f32.mrb[0].mxu0
        %2096 = vmatprep.mubr.f32.mxu0 0.0
        %2097 = vmatmul.mubr.f32.gmra.mrb[0].mxu0 %v1597
        %v2098 = vpop.f32.mrb[0].mxu0
        %v2099 = vadd.f32 %v1675, %v2098
        %v2100 = vpop.f32.mrb[0].mxu0
        %2101 = vmatprep.mubr.f32.mxu0 0.0
        %2102 = vmatmul.mubr.f32.gmra.mrb[0].mxu0 %v1598
        %v2103 = vpop.f32.mrb[0].mxu0
        %v2104 = vadd.f32 %v1675, %v2103
        %v2105 = vpop.f32.mrb[0].mxu0
        %2106 = vmatprep.mubr.f32.mxu0 0.0
        %2107 = vmatmul.mubr.f32.gmra.mrb[0].mxu0 %v1599
        %v2108 = vpop.f32.mrb[0].mxu0
        %v2109 = vadd.f32 %v1675, %v2108
        %v2110 = vpop.f32.mrb[0].mxu0
        %2111 = vmatprep.mubr.f32.mxu0 0.0
        %2112 = vmatmul.mubr.f32.gmra.mrb[0].mxu0 %v1600
        %v2113 = vpop.f32.mrb[0].mxu0
        %v2114 = vadd.f32 %v1675, %v2113
        %v2115 = vpop.f32.mrb[0].mxu0
        %2116 = vmatprep.mubr.f32.mxu0 0.0
        %2117 = vmatmul.mubr.f32.gmra.mrb[0].mxu0 %v1601
        %v2118 = vpop.f32.mrb[0].mxu0
        %v2119 = vadd.f32 %v1675, %v2118
        %v2120 = vpop.f32.mrb[0].mxu0
        %2121 = vmatprep.mubr.f32.mxu0 0.0
        %2122 = vmatmul.mubr.f32.gmra.mrb[0].mxu0 %v1602
        %v2123 = vpop.f32.mrb[0].mxu0
        %v2124 = vadd.f32 %v1675, %v2123
        %v2125 = vpop.f32.mrb[0].mxu0
        %2126 = vmatprep.mubr.f32.mxu0 0.0
        %2127 = vmatmul.mubr.f32.gmra.mrb[0].mxu0 %v1603
        %v2128 = vpop.f32.mrb[0].mxu0
        %v2129 = vadd.f32 %v1675, %v2128
        %v2130 = vpop.f32.mrb[0].mxu0
        %2131 = vmatprep.mubr.f32.mxu0 0.0
        %2132 = vmatmul.mubr.f32.gmra.mrb[0].mxu0 %v1604
        %v2133 = vpop.f32.mrb[0].mxu0
        %v2134 = vadd.f32 %v1675, %v2133
        %v2135 = vpop.f32.mrb[0].mxu0
        %2136 = vmatprep.mubr.f32.mxu0 0.0
        %2137 = vmatmul.mubr.f32.gmra.mrb[0].mxu0 %v1605
        %v2138 = vpop.f32.mrb[0].mxu0
        %v2139 = vadd.f32 %v1675, %v2138
        %v2140 = vpop.f32.mrb[0].mxu0
        %2141 = vmatprep.mubr.f32.mxu0 0.0
        %2142 = vmatmul.mubr.f32.gmra.mrb[0].mxu0 %v1606
        %v2143 = vpop.f32.mrb[0].mxu0
        %v2144 = vadd.f32 %v1675, %v2143
        %v2145 = vpop.f32.mrb[0].mxu0
        %2146 = vmatprep.mubr.f32.mxu0 0.0
        %2147 = vmatmul.mubr.f32.gmra.mrb[0].mxu0 %v1607
        %v2148 = vpop.f32.mrb[0].mxu0
        %v2149 = vadd.f32 %v1675, %v2148
        %v2150 = vpop.f32.mrb[0].mxu0
        %2151 = vmatprep.mubr.f32.mxu0 0.0
        %2152 = vmatmul.mubr.f32.gmra.mrb[0].mxu0 %v1608
        %v2153 = vpop.f32.mrb[0].mxu0
        %v2154 = vadd.f32 %v1675, %v2153
        %v2155 = vpop.f32.mrb[0].mxu0
        %2156 = vmatprep.mubr.f32.mxu0 0.0
        %2157 = vmatmul.mubr.f32.gmra.mrb[0].mxu0 %v1609
        %v2158 = vpop.f32.mrb[0].mxu0
        %v2159 = vadd.f32 %v1675, %v2158
        %v2160 = vpop.f32.mrb[0].mxu0
        %2161 = vmatprep.mubr.f32.mxu0 0.0
        %2162 = vmatmul.mubr.f32.gmra.mrb[0].mxu0 %v1610
        %v2163 = vpop.f32.mrb[0].mxu0
        %v2164 = vadd.f32 %v1675, %v2163
        %v2165 = vpop.f32.mrb[0].mxu0
        %2166 = vmatprep.mubr.f32.mxu0 0.0
        %2167 = vmatmul.mubr.f32.gmra.mrb[0].mxu0 %v1611
        %v2168 = vpop.f32.mrb[0].mxu0
        %v2169 = vadd.f32 %v1675, %v2168
        %v2170 = vpop.f32.mrb[0].mxu0
        %2171 = vmatprep.mubr.f32.mxu0 0.0
        %2172 = vmatmul.mubr.f32.gmra.mrb[0].mxu0 %v1612
        %v2173 = vpop.f32.mrb[0].mxu0
        %v2174 = vadd.f32 %v1675, %v2173
        %v2175 = vpop.f32.mrb[0].mxu0
        %2176 = vmatprep.mubr.f32.mxu0 0.0
        %2177 = vmatmul.mubr.f32.gmra.mrb[0].mxu0 %v1613
        %v2178 = vpop.f32.mrb[0].mxu0
        %v2179 = vadd.f32 %v1675, %v2178
        %v2180 = vpop.f32.mrb[0].mxu0
        %2181 = vmatprep.mubr.f32.mxu0 0.0
        %2182 = vmatmul.mubr.f32.gmra.mrb[0].mxu0 %v1614
        %v2183 = vpop.f32.mrb[0].mxu0
        %v2184 = vadd.f32 %v1675, %v2183
        %v2185 = vpop.f32.mrb[0].mxu0
        %2186 = vmatprep.mubr.f32.mxu0 0.0
        %2187 = vmatmul.mubr.f32.gmra.mrb[0].mxu0 %v1615
        %v2188 = vpop.f32.mrb[0].mxu0
        %v2189 = vadd.f32 %v1675, %v2188
        %v2190 = vpop.f32.mrb[0].mxu0
        %2191 = vmatprep.mubr.f32.mxu0 0.0
        %2192 = vmatmul.mubr.f32.gmra.mrb[0].mxu0 %v1616
        %v2193 = vpop.f32.mrb[0].mxu0
        %v2194 = vadd.f32 %v1675, %v2193
        %v2195 = vpop.f32.mrb[0].mxu0
        %2196 = vmatprep.mubr.f32.mxu0 0.0
        %2197 = vmatmul.mubr.f32.gmra.mrb[0].mxu0 %v1617
        %v2198 = vpop.f32.mrb[0].mxu0
        %v2199 = vadd.f32 %v1675, %v2198
        %v2200 = vpop.f32.mrb[0].mxu0
        %2201 = vmatprep.mubr.f32.mxu0 0.0
        %2202 = vmatmul.mubr.f32.gmra.mrb[0].mxu0 %v1618
        %v2203 = vpop.f32.mrb[0].mxu0
        %v2204 = vadd.f32 %v1675, %v2203
        %v2205 = vpop.f32.mrb[0].mxu0
        %2206 = vmatprep.mubr.f32.mxu0 0.0
        %2207 = vmatmul.mubr.f32.gmra.mrb[0].mxu0 %v1619
        %v2208 = vpop.f32.mrb[0].mxu0
        %v2209 = vadd.f32 %v1675, %v2208
        %v2210 = vpop.f32.mrb[0].mxu0
        %2211 = vmatprep.mubr.f32.mxu0 0.0
        %2212 = vmatmul.mubr.f32.gmra.mrb[0].mxu0 %v1620
        %v2213 = vpop.f32.mrb[0].mxu0
        %v2214 = vadd.f32 %v1675, %v2213
        %v2215 = vpop.f32.mrb[0].mxu0
        %2216 = vmatprep.mubr.f32.mxu0 0.0
        %2217 = vmatmul.mubr.f32.gmra.mrb[0].mxu0 %v1621
        %v2218 = vpop.f32.mrb[0].mxu0
        %v2219 = vadd.f32 %v1675, %v2218
        %v2220 = vpop.f32.mrb[0].mxu0
        %2221 = vmatprep.mubr.f32.mxu0 0.0
        %2222 = vmatmul.mubr.f32.gmra.mrb[0].mxu0 %v1622
        %v2223 = vpop.f32.mrb[0].mxu0
        %v2224 = vadd.f32 %v1675, %v2223
        %v2225 = vpop.f32.mrb[0].mxu0
        %2226 = vmatprep.mubr.f32.mxu0 0.0
        %2227 = vmatmul.mubr.f32.gmra.mrb[0].mxu0 %v1623
        %v2228 = vpop.f32.mrb[0].mxu0
        %v2229 = vadd.f32 %v1675, %v2228
        %v2230 = vpop.f32.mrb[0].mxu0
        %2231 = vmatprep.mubr.f32.mxu0 0.0
        %2232 = vmatmul.mubr.f32.gmra.mrb[0].mxu0 %v1624
        %v2233 = vpop.f32.mrb[0].mxu0
        %v2234 = vadd.f32 %v1675, %v2233
        %v2235 = vpop.f32.mrb[0].mxu0
        %2236 = vmatprep.mubr.f32.mxu0 0.0
        %2237 = vmatmul.mubr.f32.gmra.mrb[0].mxu0 %v1625
        %v2238 = vpop.f32.mrb[0].mxu0
        %v2239 = vadd.f32 %v1675, %v2238
        %v2240 = vpop.f32.mrb[0].mxu0
        %2241 = vmatprep.mubr.f32.mxu0 0.0
        %2242 = vmatmul.mubr.f32.gmra.mrb[0].mxu0 %v1626
        %v2243 = vpop.f32.mrb[0].mxu0
        %v2244 = vadd.f32 %v1675, %v2243
        %v2245 = vpop.f32.mrb[0].mxu0
        %2246 = vmatprep.mubr.f32.mxu0 0.0
        %2247 = vmatmul.mubr.f32.gmra.mrb[0].mxu0 %v1627
        %v2248 = vpop.f32.mrb[0].mxu0
        %v2249 = vadd.f32 %v1675, %v2248
        %v2250 = vpop.f32.mrb[0].mxu0
        %2251 = vmatprep.mubr.f32.mxu0 0.0
        %2252 = vmatmul.mubr.f32.gmra.mrb[0].mxu0 %v1628
        %v2253 = vpop.f32.mrb[0].mxu0
        %v2254 = vadd.f32 %v1675, %v2253
        %v2255 = vpop.f32.mrb[0].mxu0
        %2256 = vmatprep.mubr.f32.mxu0 0.0
        %2257 = vmatmul.mubr.f32.gmra.mrb[0].mxu0 %v1629
        %v2258 = vpop.f32.mrb[0].mxu0
        %v2259 = vadd.f32 %v1675, %v2258
        %v2260 = vpop.f32.mrb[0].mxu0
        %2261 = vmatprep.mubr.f32.mxu0 0.0
        %2262 = vmatmul.mubr.f32.gmra.mrb[0].mxu0 %v1630
        %v2263 = vpop.f32.mrb[0].mxu0
        %v2264 = vadd.f32 %v1675, %v2263
        %v2265 = vpop.f32.mrb[0].mxu0
        %2266 = vmatprep.mubr.f32.mxu0 0.0
        %2267 = vmatmul.mubr.f32.gmra.mrb[0].mxu0 %v1631
        %v2268 = vpop.f32.mrb[0].mxu0
        %v2269 = vadd.f32 %v1675, %v2268
        %v2270 = vpop.f32.mrb[0].mxu0
        %2271 = vmatprep.mubr.f32.mxu0 0.0
        %2272 = vmatmul.mubr.f32.gmra.mrb[0].mxu0 %v1632
        %v2273 = vpop.f32.mrb[0].mxu0
        %v2274 = vadd.f32 %v1675, %v2273
        %v2275 = vpop.f32.mrb[0].mxu0
        %2276 = vmatprep.mubr.f32.mxu0 0.0
        %2277 = vmatmul.mubr.f32.gmra.mrb[0].mxu0 %v1633
        %v2278 = vpop.f32.mrb[0].mxu0
        %v2279 = vadd.f32 %v1675, %v2278
        %v2280 = vpop.f32.mrb[0].mxu0
        %2281 = vmatprep.mubr.f32.mxu0 0.0
        %2282 = vmatmul.mubr.f32.gmra.mrb[0].mxu0 %v1634
        %v2283 = vpop.f32.mrb[0].mxu0
        %v2284 = vadd.f32 %v1675, %v2283
        %v2285 = vpop.f32.mrb[0].mxu0
        %2286 = vmatprep.mubr.f32.mxu0 0.0
        %2287 = vmatmul.mubr.f32.gmra.mrb[0].mxu0 %v1635
        %v2288 = vpop.f32.mrb[0].mxu0
        %v2289 = vadd.f32 %v1675, %v2288
        %v2290 = vpop.f32.mrb[0].mxu0
        %2291 = vmatprep.mubr.f32.mxu0 0.0
        %2292 = vmatmul.mubr.f32.gmra.mrb[0].mxu0 %v1636
        %v2293 = vpop.f32.mrb[0].mxu0
        %v2294 = vadd.f32 %v1675, %v2293
        %v2295 = vpop.f32.mrb[0].mxu0
        %2296 = vmatprep.mubr.f32.mxu0 0.0
        %2297 = vmatmul.mubr.f32.gmra.mrb[0].mxu0 %v1637
        %v2298 = vpop.f32.mrb[0].mxu0
        %v2299 = vadd.f32 %v1675, %v2298
        %v2300 = vpop.f32.mrb[0].mxu0
        %2301 = vmatprep.mubr.f32.mxu0 0.0
        %2302 = vmatmul.mubr.f32.gmra.mrb[0].mxu0 %v1638
        %v2303 = vpop.f32.mrb[0].mxu0
        %v2304 = vadd.f32 %v1675, %v2303
        %v2305 = vpop.f32.mrb[0].mxu0
        %2306 = vmatprep.mubr.f32.mxu0 0.0
        %2307 = vmatmul.mubr.f32.gmra.mrb[0].mxu0 %v1639
        %v2308 = vpop.f32.mrb[0].mxu0
        %v2309 = vadd.f32 %v1675, %v2308
        %v2310 = vpop.f32.mrb[0].mxu0
        %2311 = vmatprep.mubr.f32.mxu0 0.0
        %2312 = vmatmul.mubr.f32.gmra.mrb[0].mxu0 %v1640
        %v2313 = vpop.f32.mrb[0].mxu0
        %v2314 = vadd.f32 %v1675, %v2313
        %v2315 = vpop.f32.mrb[0].mxu0
        %2316 = vmatprep.mubr.f32.mxu0 0.0
        %2317 = vmatmul.mubr.f32.gmra.mrb[0].mxu0 %v1641
        %v2318 = vpop.f32.mrb[0].mxu0
        %v2319 = vadd.f32 %v1675, %v2318
        %v2320 = vpop.f32.mrb[0].mxu0
        %2321 = vmatprep.mubr.f32.mxu0 0.0
        %2322 = vmatmul.mubr.f32.gmra.mrb[0].mxu0 %v1642
        %v2323 = vpop.f32.mrb[0].mxu0
        %v2324 = vadd.f32 %v1675, %v2323
        %v2325 = vpop.f32.mrb[0].mxu0
        %2326 = vmatprep.mubr.f32.mxu0 0.0
        %2327 = vmatmul.mubr.f32.gmra.mrb[0].mxu0 %v1643
        %v2328 = vpop.f32.mrb[0].mxu0
        %v2329 = vadd.f32 %v1675, %v2328
        %v2330 = vpop.f32.mrb[0].mxu0
        %2331 = vmatprep.mubr.f32.mxu0 0.0
        %2332 = vmatmul.mubr.f32.gmra.mrb[0].mxu0 %v1644
        %v2333 = vpop.f32.mrb[0].mxu0
        %v2334 = vadd.f32 %v1675, %v2333
        %v2335 = vpop.f32.mrb[0].mxu0
        %2336 = vmatprep.mubr.f32.mxu0 0.0
        %2337 = vmatmul.mubr.f32.gmra.mrb[0].mxu0 %v1645
        %v2338 = vpop.f32.mrb[0].mxu0
        %v2339 = vadd.f32 %v1675, %v2338
        %v2340 = vpop.f32.mrb[0].mxu0
        %2341 = vmatprep.mubr.f32.mxu0 0.0
        %2342 = vmatmul.mubr.f32.gmra.mrb[0].mxu0 %v1646
        %v2343 = vpop.f32.mrb[0].mxu0
        %v2344 = vadd.f32 %v1675, %v2343
        %v2345 = vpop.f32.mrb[0].mxu0
        %2346 = vmatprep.mubr.f32.mxu0 0.0
        %2347 = vmatmul.mubr.f32.gmra.mrb[0].mxu0 %v1647
        %v2348 = vpop.f32.mrb[0].mxu0
        %v2349 = vadd.f32 %v1675, %v2348
        %v2350 = vpop.f32.mrb[0].mxu0
        %2351 = vmatprep.mubr.f32.mxu0 0.0
        %2352 = vmatmul.mubr.f32.gmra.mrb[0].mxu0 %v1648
        %v2353 = vpop.f32.mrb[0].mxu0
        %v2354 = vadd.f32 %v1675, %v2353
        %v2355 = vpop.f32.mrb[0].mxu0
        %2356 = vmatprep.mubr.f32.mxu0 0.0
        %2357 = vmatmul.mubr.f32.gmra.mrb[0].mxu0 %v1649
        %v2358 = vpop.f32.mrb[0].mxu0
        %v2359 = vadd.f32 %v1675, %v2358
        %v2360 = vpop.f32.mrb[0].mxu0
        %2361 = vmatprep.mubr.f32.mxu0 0.0
        %2362 = vmatmul.mubr.f32.gmra.mrb[0].mxu0 %v1650
        %v2363 = vpop.f32.mrb[0].mxu0
        %v2364 = vadd.f32 %v1675, %v2363
        %v2365 = vpop.f32.mrb[0].mxu0
        %2366 = vmatprep.mubr.f32.mxu0 0.0
        %2367 = vmatmul.mubr.f32.gmra.mrb[0].mxu0 %v1651
        %v2368 = vpop.f32.mrb[0].mxu0
        %v2369 = vadd.f32 %v1675, %v2368
        %v2370 = vpop.f32.mrb[0].mxu0
        %2371 = vmatprep.mubr.f32.mxu0 0.0
        %2372 = vmatmul.mubr.f32.gmra.mrb[0].mxu0 %v1652
        %v2373 = vpop.f32.mrb[0].mxu0
        %v2374 = vadd.f32 %v1675, %v2373
        %v2375 = vpop.f32.mrb[0].mxu0
        %2376 = vmatprep.mubr.f32.mxu0 0.0
        %2377 = vmatmul.mubr.f32.gmra.mrb[0].mxu0 %v1653
        %v2378 = vpop.f32.mrb[0].mxu0
        %v2379 = vadd.f32 %v1675, %v2378
        %v2380 = vpop.f32.mrb[0].mxu0
        %2381 = vdwg.mxu0
        %v2382 = vmax.f32 %v1744, 0.0
        %v2383 = vmax.f32 %v1749, 0.0
        %v2384 = vmax.f32 %v1754, 0.0
        %v2385 = vmax.f32 %v1759, 0.0
        %v2386 = vmax.f32 %v1764, 0.0
        %v2387 = vmax.f32 %v1769, 0.0
        %v2388 = vmax.f32 %v1774, 0.0
        %v2389 = vmax.f32 %v1779, 0.0
        %v2390 = vmax.f32 %v1784, 0.0
        %v2391 = vmax.f32 %v1789, 0.0
        %v2392 = vmax.f32 %v1794, 0.0
        %v2393 = vmax.f32 %v1799, 0.0
        %v2394 = vmax.f32 %v1804, 0.0
        %v2395 = vmax.f32 %v1809, 0.0
        %v2396 = vmax.f32 %v1814, 0.0
        %v2397 = vmax.f32 %v1819, 0.0
        %v2398 = vmax.f32 %v1824, 0.0
        %v2399 = vmax.f32 %v1829, 0.0
        %v2400 = vmax.f32 %v1834, 0.0
        %v2401 = vmax.f32 %v1839, 0.0
        %v2402 = vmax.f32 %v1844, 0.0
        %v2403 = vmax.f32 %v1849, 0.0
        %v2404 = vmax.f32 %v1854, 0.0
        %v2405 = vmax.f32 %v1859, 0.0
        %v2406 = vmax.f32 %v1864, 0.0
        %v2407 = vmax.f32 %v1869, 0.0
        %v2408 = vmax.f32 %v1874, 0.0
        %v2409 = vmax.f32 %v1879, 0.0
        %v2410 = vmax.f32 %v1884, 0.0
        %v2411 = vmax.f32 %v1889, 0.0
        %v2412 = vmax.f32 %v1894, 0.0
        %v2413 = vmax.f32 %v1899, 0.0
        %v2414 = vmax.f32 %v1904, 0.0
        %v2415 = vmax.f32 %v1909, 0.0
        %v2416 = vmax.f32 %v1914, 0.0
        %v2417 = vmax.f32 %v1919, 0.0
        %v2418 = vmax.f32 %v1924, 0.0
        %v2419 = vmax.f32 %v1929, 0.0
        %v2420 = vmax.f32 %v1934, 0.0
        %v2421 = vmax.f32 %v1939, 0.0
        %v2422 = vmax.f32 %v1944, 0.0
        %v2423 = vmax.f32 %v1949, 0.0
        %v2424 = vmax.f32 %v1954, 0.0
        %v2425 = vmax.f32 %v1959, 0.0
        %v2426 = vmax.f32 %v1964, 0.0
        %v2427 = vmax.f32 %v1969, 0.0
        %v2428 = vmax.f32 %v1974, 0.0
        %v2429 = vmax.f32 %v1979, 0.0
        %v2430 = vmax.f32 %v1984, 0.0
        %v2431 = vmax.f32 %v1989, 0.0
        %v2432 = vmax.f32 %v1994, 0.0
        %v2433 = vmax.f32 %v1999, 0.0
        %v2434 = vmax.f32 %v2004, 0.0
        %v2435 = vmax.f32 %v2009, 0.0
        %v2436 = vmax.f32 %v2014, 0.0
        %v2437 = vmax.f32 %v2019, 0.0
        %v2438 = vmax.f32 %v2024, 0.0
        %v2439 = vmax.f32 %v2029, 0.0
        %v2440 = vmax.f32 %v2034, 0.0
        %v2441 = vmax.f32 %v2039, 0.0
        %v2442 = vmax.f32 %v2044, 0.0
        %v2443 = vmax.f32 %v2049, 0.0
        %v2444 = vmax.f32 %v2054, 0.0
        %v2445 = vmax.f32 %v2059, 0.0
        %v2446 = vmax.f32 %v2064, 0.0
        %v2447 = vmax.f32 %v2069, 0.0
        %v2448 = vmax.f32 %v2074, 0.0
        %v2449 = vmax.f32 %v2079, 0.0
        %v2450 = vmax.f32 %v2084, 0.0
        %v2451 = vmax.f32 %v2089, 0.0
        %v2452 = vmax.f32 %v2094, 0.0
        %v2453 = vmax.f32 %v2099, 0.0
        %v2454 = vmax.f32 %v2104, 0.0
        %v2455 = vmax.f32 %v2109, 0.0
        %v2456 = vmax.f32 %v2114, 0.0
        %v2457 = vmax.f32 %v2119, 0.0
        %v2458 = vmax.f32 %v2124, 0.0
        %v2459 = vmax.f32 %v2129, 0.0
        %v2460 = vmax.f32 %v2134, 0.0
        %v2461 = vmax.f32 %v2139, 0.0
        %v2462 = vmax.f32 %v2144, 0.0
        %v2463 = vmax.f32 %v2149, 0.0
        %v2464 = vmax.f32 %v2154, 0.0
        %v2465 = vmax.f32 %v2159, 0.0
        %v2466 = vmax.f32 %v2164, 0.0
        %v2467 = vmax.f32 %v2169, 0.0
        %v2468 = vmax.f32 %v2174, 0.0
        %v2469 = vmax.f32 %v2179, 0.0
        %v2470 = vmax.f32 %v2184, 0.0
        %v2471 = vmax.f32 %v2189, 0.0
        %v2472 = vmax.f32 %v2194, 0.0
        %v2473 = vmax.f32 %v2199, 0.0
        %v2474 = vmax.f32 %v2204, 0.0
        %v2475 = vmax.f32 %v2209, 0.0
        %v2476 = vmax.f32 %v2214, 0.0
        %v2477 = vmax.f32 %v2219, 0.0
        %v2478 = vmax.f32 %v2224, 0.0
        %v2479 = vmax.f32 %v2229, 0.0
        %v2480 = vmax.f32 %v2234, 0.0
        %v2481 = vmax.f32 %v2239, 0.0
        %v2482 = vmax.f32 %v2244, 0.0
        %v2483 = vmax.f32 %v2249, 0.0
        %v2484 = vmax.f32 %v2254, 0.0
        %v2485 = vmax.f32 %v2259, 0.0
        %v2486 = vmax.f32 %v2264, 0.0
        %v2487 = vmax.f32 %v2269, 0.0
        %v2488 = vmax.f32 %v2274, 0.0
        %v2489 = vmax.f32 %v2279, 0.0
        %v2490 = vmax.f32 %v2284, 0.0
        %v2491 = vmax.f32 %v2289, 0.0
        %v2492 = vmax.f32 %v2294, 0.0
        %v2493 = vmax.f32 %v2299, 0.0
        %v2494 = vmax.f32 %v2304, 0.0
        %v2495 = vmax.f32 %v2309, 0.0
        %v2496 = vmax.f32 %v2314, 0.0
        %v2497 = vmax.f32 %v2319, 0.0
        %v2498 = vmax.f32 %v2324, 0.0
        %v2499 = vmax.f32 %v2329, 0.0
        %v2500 = vmax.f32 %v2334, 0.0
        %v2501 = vmax.f32 %v2339, 0.0
        %v2502 = vmax.f32 %v2344, 0.0
        %v2503 = vmax.f32 %v2349, 0.0
        %v2504 = vmax.f32 %v2354, 0.0
        %v2505 = vmax.f32 %v2359, 0.0
        %v2506 = vmax.f32 %v2364, 0.0
        %v2507 = vmax.f32 %v2369, 0.0
        %v2508 = vmax.f32 %v2374, 0.0
        %v2509 = vmax.f32 %v2379, 0.0
        %v2510 = vld [vmem:[%s5] sm:$0xff]
        %v2511 = vld [vmem:[%s5 + $0x8] sm:$0xff]
        %v2512 = vld [vmem:[%s5 + $0x10] sm:$0xff]
        %v2513 = vld [vmem:[%s5 + $0x18] sm:$0xff]
        %v2514 = vld [vmem:[%s5 + $0x20] sm:$0xff]
        %v2515 = vld [vmem:[%s5 + $0x28] sm:$0xff]
        %v2516 = vld [vmem:[%s5 + $0x30] sm:$0xff]
        %v2517 = vld [vmem:[%s5 + $0x38] sm:$0xff]
        %v2518 = vld [vmem:[%s5 + $0x40] sm:$0xff]
        %v2519 = vld [vmem:[%s5 + $0x48] sm:$0xff]
        %v2520 = vld [vmem:[%s5 + $0x50] sm:$0xff]
        %v2521 = vld [vmem:[%s5 + $0x58] sm:$0xff]
        %v2522 = vld [vmem:[%s5 + $0x60] sm:$0xff]
        %v2523 = vld [vmem:[%s5 + $0x68] sm:$0xff]
        %v2524 = vld [vmem:[%s5 + $0x70] sm:$0xff]
        %v2525 = vld [vmem:[%s5 + $0x78] sm:$0xff]
        %v2526 = vld [vmem:[%s6] sm:$0x1]
        %v2528 = vlaneseq
        %v2529 = vshrl.u32 %v2528, 7
        %v2530 = vsub.s32 0, %v2529
        %v2531 = vrot.slane %v2526, %v2530
        %2533 = vmatprep.subr.mxu0 0.0
        %2534 = vmatpush1.msra.mxu0 %v2510
        %2535 = vmatprep.subr.mxu0 0.0
        %2536 = vmatpush1.msra.mxu0 %v2511
        %2537 = vmatprep.subr.mxu0 0.0
        %2538 = vmatpush1.msra.mxu0 %v2512
        %2539 = vmatprep.subr.mxu0 0.0
        %2540 = vmatpush1.msra.mxu0 %v2513
        %2541 = vmatprep.subr.mxu0 0.0
        %2542 = vmatpush1.msra.mxu0 %v2514
        %2543 = vmatprep.subr.mxu0 0.0
        %2544 = vmatpush1.msra.mxu0 %v2515
        %2545 = vmatprep.subr.mxu0 0.0
        %2546 = vmatpush1.msra.mxu0 %v2516
        %2547 = vmatprep.subr.mxu0 0.0
        %2548 = vmatpush1.msra.mxu0 %v2517
        %2549 = vmatprep.subr.mxu0 0.0
        %2550 = vmatpush1.msra.mxu0 %v2518
        %2551 = vmatprep.subr.mxu0 0.0
        %2552 = vmatpush1.msra.mxu0 %v2519
        %2553 = vmatprep.subr.mxu0 0.0
        %2554 = vmatpush1.msra.mxu0 %v2520
        %2555 = vmatprep.subr.mxu0 0.0
        %2556 = vmatpush1.msra.mxu0 %v2521
        %2557 = vmatprep.subr.mxu0 0.0
        %2558 = vmatpush1.msra.mxu0 %v2522
        %2559 = vmatprep.subr.mxu0 0.0
        %2560 = vmatpush1.msra.mxu0 %v2523
        %2561 = vmatprep.subr.mxu0 0.0
        %2562 = vmatpush1.msra.mxu0 %v2524
        %2563 = vmatprep.subr.mxu0 0.0
        %2564 = vmatpush1.msra.mxu0 %v2525
        %2565 = vmatprep.subr.mxu0 0.0
        %2566 = vmatpush1.msra.mxu0 0.0
        %2567 = vmatprep.subr.mxu0 0.0
        %2568 = vmatpush1.msra.mxu0 0.0
        %2569 = vmatprep.subr.mxu0 0.0
        %2570 = vmatpush1.msra.mxu0 0.0
        %2571 = vmatprep.subr.mxu0 0.0
        %2572 = vmatpush1.msra.mxu0 0.0
        %2573 = vmatprep.subr.mxu0 0.0
        %2574 = vmatpush1.msra.mxu0 0.0
        %2575 = vmatprep.subr.mxu0 0.0
        %2576 = vmatpush1.msra.mxu0 0.0
        %2577 = vmatprep.subr.mxu0 0.0
        %2578 = vmatpush1.msra.mxu0 0.0
        %2579 = vmatprep.subr.mxu0 0.0
        %2580 = vmatpush1.msra.mxu0 0.0
        %2581 = vmatprep.subr.mxu0 0.0
        %2582 = vmatpush1.msra.mxu0 0.0
        %2583 = vmatprep.subr.mxu0 0.0
        %2584 = vmatpush1.msra.mxu0 0.0
        %2585 = vmatprep.subr.mxu0 0.0
        %2586 = vmatpush1.msra.mxu0 0.0
        %2587 = vmatprep.subr.mxu0 0.0
        %2588 = vmatpush1.msra.mxu0 0.0
        %2589 = vmatprep.subr.mxu0 0.0
        %2590 = vmatpush1.msra.mxu0 0.0
        %2591 = vmatprep.subr.mxu0 0.0
        %2592 = vmatpush1.msra.mxu0 0.0
        %2593 = vmatprep.subr.mxu0 0.0
        %2594 = vmatpush1.msra.mxu0 0.0
        %2595 = vmatprep.subr.mxu0 0.0
        %2596 = vmatpush1.msra.mxu0 0.0
        %2597 = vmatprep.mubr.f32.mxu0 0.0
        %2598 = vmatmul.mubr.f32.gmra.mrb[0].mxu0 %v2382
        %v2599 = vpop.f32.mrb[0].mxu0
        %v2600 = vadd.f32 %v2531, %v2599
        %v2601 = vpop.f32.mrb[0].mxu0
        %2602 = vmatprep.mubr.f32.mxu0 0.0
        %2603 = vmatmul.mubr.f32.gmra.mrb[0].mxu0 %v2383
        %v2604 = vpop.f32.mrb[0].mxu0
        %v2605 = vadd.f32 %v2531, %v2604
        %v2606 = vpop.f32.mrb[0].mxu0
        %2607 = vmatprep.mubr.f32.mxu0 0.0
        %2608 = vmatmul.mubr.f32.gmra.mrb[0].mxu0 %v2384
        %v2609 = vpop.f32.mrb[0].mxu0
        %v2610 = vadd.f32 %v2531, %v2609
        %v2611 = vpop.f32.mrb[0].mxu0
        %2612 = vmatprep.mubr.f32.mxu0 0.0
        %2613 = vmatmul.mubr.f32.gmra.mrb[0].mxu0 %v2385
        %v2614 = vpop.f32.mrb[0].mxu0
        %v2615 = vadd.f32 %v2531, %v2614
        %v2616 = vpop.f32.mrb[0].mxu0
        %2617 = vmatprep.mubr.f32.mxu0 0.0
        %2618 = vmatmul.mubr.f32.gmra.mrb[0].mxu0 %v2386
        %v2619 = vpop.f32.mrb[0].mxu0
        %v2620 = vadd.f32 %v2531, %v2619
        %v2621 = vpop.f32.mrb[0].mxu0
        %2622 = vmatprep.mubr.f32.mxu0 0.0
        %2623 = vmatmul.mubr.f32.gmra.mrb[0].mxu0 %v2387
        %v2624 = vpop.f32.mrb[0].mxu0
        %v2625 = vadd.f32 %v2531, %v2624
        %v2626 = vpop.f32.mrb[0].mxu0
        %2627 = vmatprep.mubr.f32.mxu0 0.0
        %2628 = vmatmul.mubr.f32.gmra.mrb[0].mxu0 %v2388
        %v2629 = vpop.f32.mrb[0].mxu0
        %v2630 = vadd.f32 %v2531, %v2629
        %v2631 = vpop.f32.mrb[0].mxu0
        %2632 = vmatprep.mubr.f32.mxu0 0.0
        %2633 = vmatmul.mubr.f32.gmra.mrb[0].mxu0 %v2389
        %v2634 = vpop.f32.mrb[0].mxu0
        %v2635 = vadd.f32 %v2531, %v2634
        %v2636 = vpop.f32.mrb[0].mxu0
        %2637 = vmatprep.mubr.f32.mxu0 0.0
        %2638 = vmatmul.mubr.f32.gmra.mrb[0].mxu0 %v2390
        %v2639 = vpop.f32.mrb[0].mxu0
        %v2640 = vadd.f32 %v2531, %v2639
        %v2641 = vpop.f32.mrb[0].mxu0
        %2642 = vmatprep.mubr.f32.mxu0 0.0
        %2643 = vmatmul.mubr.f32.gmra.mrb[0].mxu0 %v2391
        %v2644 = vpop.f32.mrb[0].mxu0
        %v2645 = vadd.f32 %v2531, %v2644
        %v2646 = vpop.f32.mrb[0].mxu0
        %2647 = vmatprep.mubr.f32.mxu0 0.0
        %2648 = vmatmul.mubr.f32.gmra.mrb[0].mxu0 %v2392
        %v2649 = vpop.f32.mrb[0].mxu0
        %v2650 = vadd.f32 %v2531, %v2649
        %v2651 = vpop.f32.mrb[0].mxu0
        %2652 = vmatprep.mubr.f32.mxu0 0.0
        %2653 = vmatmul.mubr.f32.gmra.mrb[0].mxu0 %v2393
        %v2654 = vpop.f32.mrb[0].mxu0
        %v2655 = vadd.f32 %v2531, %v2654
        %v2656 = vpop.f32.mrb[0].mxu0
        %2657 = vmatprep.mubr.f32.mxu0 0.0
        %2658 = vmatmul.mubr.f32.gmra.mrb[0].mxu0 %v2394
        %v2659 = vpop.f32.mrb[0].mxu0
        %v2660 = vadd.f32 %v2531, %v2659
        %v2661 = vpop.f32.mrb[0].mxu0
        %2662 = vmatprep.mubr.f32.mxu0 0.0
        %2663 = vmatmul.mubr.f32.gmra.mrb[0].mxu0 %v2395
        %v2664 = vpop.f32.mrb[0].mxu0
        %v2665 = vadd.f32 %v2531, %v2664
        %v2666 = vpop.f32.mrb[0].mxu0
        %2667 = vmatprep.mubr.f32.mxu0 0.0
        %2668 = vmatmul.mubr.f32.gmra.mrb[0].mxu0 %v2396
        %v2669 = vpop.f32.mrb[0].mxu0
        %v2670 = vadd.f32 %v2531, %v2669
        %v2671 = vpop.f32.mrb[0].mxu0
        %2672 = vmatprep.mubr.f32.mxu0 0.0
        %2673 = vmatmul.mubr.f32.gmra.mrb[0].mxu0 %v2397
        %v2674 = vpop.f32.mrb[0].mxu0
        %v2675 = vadd.f32 %v2531, %v2674
        %v2676 = vpop.f32.mrb[0].mxu0
        %2677 = vmatprep.mubr.f32.mxu0 0.0
        %2678 = vmatmul.mubr.f32.gmra.mrb[0].mxu0 %v2398
        %v2679 = vpop.f32.mrb[0].mxu0
        %v2680 = vadd.f32 %v2531, %v2679
        %v2681 = vpop.f32.mrb[0].mxu0
        %2682 = vmatprep.mubr.f32.mxu0 0.0
        %2683 = vmatmul.mubr.f32.gmra.mrb[0].mxu0 %v2399
        %v2684 = vpop.f32.mrb[0].mxu0
        %v2685 = vadd.f32 %v2531, %v2684
        %v2686 = vpop.f32.mrb[0].mxu0
        %2687 = vmatprep.mubr.f32.mxu0 0.0
        %2688 = vmatmul.mubr.f32.gmra.mrb[0].mxu0 %v2400
        %v2689 = vpop.f32.mrb[0].mxu0
        %v2690 = vadd.f32 %v2531, %v2689
        %v2691 = vpop.f32.mrb[0].mxu0
        %2692 = vmatprep.mubr.f32.mxu0 0.0
        %2693 = vmatmul.mubr.f32.gmra.mrb[0].mxu0 %v2401
        %v2694 = vpop.f32.mrb[0].mxu0
        %v2695 = vadd.f32 %v2531, %v2694
        %v2696 = vpop.f32.mrb[0].mxu0
        %2697 = vmatprep.mubr.f32.mxu0 0.0
        %2698 = vmatmul.mubr.f32.gmra.mrb[0].mxu0 %v2402
        %v2699 = vpop.f32.mrb[0].mxu0
        %v2700 = vadd.f32 %v2531, %v2699
        %v2701 = vpop.f32.mrb[0].mxu0
        %2702 = vmatprep.mubr.f32.mxu0 0.0
        %2703 = vmatmul.mubr.f32.gmra.mrb[0].mxu0 %v2403
        %v2704 = vpop.f32.mrb[0].mxu0
        %v2705 = vadd.f32 %v2531, %v2704
        %v2706 = vpop.f32.mrb[0].mxu0
        %2707 = vmatprep.mubr.f32.mxu0 0.0
        %2708 = vmatmul.mubr.f32.gmra.mrb[0].mxu0 %v2404
        %v2709 = vpop.f32.mrb[0].mxu0
        %v2710 = vadd.f32 %v2531, %v2709
        %v2711 = vpop.f32.mrb[0].mxu0
        %2712 = vmatprep.mubr.f32.mxu0 0.0
        %2713 = vmatmul.mubr.f32.gmra.mrb[0].mxu0 %v2405
        %v2714 = vpop.f32.mrb[0].mxu0
        %v2715 = vadd.f32 %v2531, %v2714
        %v2716 = vpop.f32.mrb[0].mxu0
        %2717 = vmatprep.mubr.f32.mxu0 0.0
        %2718 = vmatmul.mubr.f32.gmra.mrb[0].mxu0 %v2406
        %v2719 = vpop.f32.mrb[0].mxu0
        %v2720 = vadd.f32 %v2531, %v2719
        %v2721 = vpop.f32.mrb[0].mxu0
        %2722 = vmatprep.mubr.f32.mxu0 0.0
        %2723 = vmatmul.mubr.f32.gmra.mrb[0].mxu0 %v2407
        %v2724 = vpop.f32.mrb[0].mxu0
        %v2725 = vadd.f32 %v2531, %v2724
        %v2726 = vpop.f32.mrb[0].mxu0
        %2727 = vmatprep.mubr.f32.mxu0 0.0
        %2728 = vmatmul.mubr.f32.gmra.mrb[0].mxu0 %v2408
        %v2729 = vpop.f32.mrb[0].mxu0
        %v2730 = vadd.f32 %v2531, %v2729
        %v2731 = vpop.f32.mrb[0].mxu0
        %2732 = vmatprep.mubr.f32.mxu0 0.0
        %2733 = vmatmul.mubr.f32.gmra.mrb[0].mxu0 %v2409
        %v2734 = vpop.f32.mrb[0].mxu0
        %v2735 = vadd.f32 %v2531, %v2734
        %v2736 = vpop.f32.mrb[0].mxu0
        %2737 = vmatprep.mubr.f32.mxu0 0.0
        %2738 = vmatmul.mubr.f32.gmra.mrb[0].mxu0 %v2410
        %v2739 = vpop.f32.mrb[0].mxu0
        %v2740 = vadd.f32 %v2531, %v2739
        %v2741 = vpop.f32.mrb[0].mxu0
        %2742 = vmatprep.mubr.f32.mxu0 0.0
        %2743 = vmatmul.mubr.f32.gmra.mrb[0].mxu0 %v2411
        %v2744 = vpop.f32.mrb[0].mxu0
        %v2745 = vadd.f32 %v2531, %v2744
        %v2746 = vpop.f32.mrb[0].mxu0
        %2747 = vmatprep.mubr.f32.mxu0 0.0
        %2748 = vmatmul.mubr.f32.gmra.mrb[0].mxu0 %v2412
        %v2749 = vpop.f32.mrb[0].mxu0
        %v2750 = vadd.f32 %v2531, %v2749
        %v2751 = vpop.f32.mrb[0].mxu0
        %2752 = vmatprep.mubr.f32.mxu0 0.0
        %2753 = vmatmul.mubr.f32.gmra.mrb[0].mxu0 %v2413
        %v2754 = vpop.f32.mrb[0].mxu0
        %v2755 = vadd.f32 %v2531, %v2754
        %v2756 = vpop.f32.mrb[0].mxu0
        %2757 = vmatprep.mubr.f32.mxu0 0.0
        %2758 = vmatmul.mubr.f32.gmra.mrb[0].mxu0 %v2414
        %v2759 = vpop.f32.mrb[0].mxu0
        %v2760 = vadd.f32 %v2531, %v2759
        %v2761 = vpop.f32.mrb[0].mxu0
        %2762 = vmatprep.mubr.f32.mxu0 0.0
        %2763 = vmatmul.mubr.f32.gmra.mrb[0].mxu0 %v2415
        %v2764 = vpop.f32.mrb[0].mxu0
        %v2765 = vadd.f32 %v2531, %v2764
        %v2766 = vpop.f32.mrb[0].mxu0
        %2767 = vmatprep.mubr.f32.mxu0 0.0
        %2768 = vmatmul.mubr.f32.gmra.mrb[0].mxu0 %v2416
        %v2769 = vpop.f32.mrb[0].mxu0
        %v2770 = vadd.f32 %v2531, %v2769
        %v2771 = vpop.f32.mrb[0].mxu0
        %2772 = vmatprep.mubr.f32.mxu0 0.0
        %2773 = vmatmul.mubr.f32.gmra.mrb[0].mxu0 %v2417
        %v2774 = vpop.f32.mrb[0].mxu0
        %v2775 = vadd.f32 %v2531, %v2774
        %v2776 = vpop.f32.mrb[0].mxu0
        %2777 = vmatprep.mubr.f32.mxu0 0.0
        %2778 = vmatmul.mubr.f32.gmra.mrb[0].mxu0 %v2418
        %v2779 = vpop.f32.mrb[0].mxu0
        %v2780 = vadd.f32 %v2531, %v2779
        %v2781 = vpop.f32.mrb[0].mxu0
        %2782 = vmatprep.mubr.f32.mxu0 0.0
        %2783 = vmatmul.mubr.f32.gmra.mrb[0].mxu0 %v2419
        %v2784 = vpop.f32.mrb[0].mxu0
        %v2785 = vadd.f32 %v2531, %v2784
        %v2786 = vpop.f32.mrb[0].mxu0
        %2787 = vmatprep.mubr.f32.mxu0 0.0
        %2788 = vmatmul.mubr.f32.gmra.mrb[0].mxu0 %v2420
        %v2789 = vpop.f32.mrb[0].mxu0
        %v2790 = vadd.f32 %v2531, %v2789
        %v2791 = vpop.f32.mrb[0].mxu0
        %2792 = vmatprep.mubr.f32.mxu0 0.0
        %2793 = vmatmul.mubr.f32.gmra.mrb[0].mxu0 %v2421
        %v2794 = vpop.f32.mrb[0].mxu0
        %v2795 = vadd.f32 %v2531, %v2794
        %v2796 = vpop.f32.mrb[0].mxu0
        %2797 = vmatprep.mubr.f32.mxu0 0.0
        %2798 = vmatmul.mubr.f32.gmra.mrb[0].mxu0 %v2422
        %v2799 = vpop.f32.mrb[0].mxu0
        %v2800 = vadd.f32 %v2531, %v2799
        %v2801 = vpop.f32.mrb[0].mxu0
        %2802 = vmatprep.mubr.f32.mxu0 0.0
        %2803 = vmatmul.mubr.f32.gmra.mrb[0].mxu0 %v2423
        %v2804 = vpop.f32.mrb[0].mxu0
        %v2805 = vadd.f32 %v2531, %v2804
        %v2806 = vpop.f32.mrb[0].mxu0
        %2807 = vmatprep.mubr.f32.mxu0 0.0
        %2808 = vmatmul.mubr.f32.gmra.mrb[0].mxu0 %v2424
        %v2809 = vpop.f32.mrb[0].mxu0
        %v2810 = vadd.f32 %v2531, %v2809
        %v2811 = vpop.f32.mrb[0].mxu0
        %2812 = vmatprep.mubr.f32.mxu0 0.0
        %2813 = vmatmul.mubr.f32.gmra.mrb[0].mxu0 %v2425
        %v2814 = vpop.f32.mrb[0].mxu0
        %v2815 = vadd.f32 %v2531, %v2814
        %v2816 = vpop.f32.mrb[0].mxu0
        %2817 = vmatprep.mubr.f32.mxu0 0.0
        %2818 = vmatmul.mubr.f32.gmra.mrb[0].mxu0 %v2426
        %v2819 = vpop.f32.mrb[0].mxu0
        %v2820 = vadd.f32 %v2531, %v2819
        %v2821 = vpop.f32.mrb[0].mxu0
        %2822 = vmatprep.mubr.f32.mxu0 0.0
        %2823 = vmatmul.mubr.f32.gmra.mrb[0].mxu0 %v2427
        %v2824 = vpop.f32.mrb[0].mxu0
        %v2825 = vadd.f32 %v2531, %v2824
        %v2826 = vpop.f32.mrb[0].mxu0
        %2827 = vmatprep.mubr.f32.mxu0 0.0
        %2828 = vmatmul.mubr.f32.gmra.mrb[0].mxu0 %v2428
        %v2829 = vpop.f32.mrb[0].mxu0
        %v2830 = vadd.f32 %v2531, %v2829
        %v2831 = vpop.f32.mrb[0].mxu0
        %2832 = vmatprep.mubr.f32.mxu0 0.0
        %2833 = vmatmul.mubr.f32.gmra.mrb[0].mxu0 %v2429
        %v2834 = vpop.f32.mrb[0].mxu0
        %v2835 = vadd.f32 %v2531, %v2834
        %v2836 = vpop.f32.mrb[0].mxu0
        %2837 = vmatprep.mubr.f32.mxu0 0.0
        %2838 = vmatmul.mubr.f32.gmra.mrb[0].mxu0 %v2430
        %v2839 = vpop.f32.mrb[0].mxu0
        %v2840 = vadd.f32 %v2531, %v2839
        %v2841 = vpop.f32.mrb[0].mxu0
        %2842 = vmatprep.mubr.f32.mxu0 0.0
        %2843 = vmatmul.mubr.f32.gmra.mrb[0].mxu0 %v2431
        %v2844 = vpop.f32.mrb[0].mxu0
        %v2845 = vadd.f32 %v2531, %v2844
        %v2846 = vpop.f32.mrb[0].mxu0
        %2847 = vmatprep.mubr.f32.mxu0 0.0
        %2848 = vmatmul.mubr.f32.gmra.mrb[0].mxu0 %v2432
        %v2849 = vpop.f32.mrb[0].mxu0
        %v2850 = vadd.f32 %v2531, %v2849
        %v2851 = vpop.f32.mrb[0].mxu0
        %2852 = vmatprep.mubr.f32.mxu0 0.0
        %2853 = vmatmul.mubr.f32.gmra.mrb[0].mxu0 %v2433
        %v2854 = vpop.f32.mrb[0].mxu0
        %v2855 = vadd.f32 %v2531, %v2854
        %v2856 = vpop.f32.mrb[0].mxu0
        %2857 = vmatprep.mubr.f32.mxu0 0.0
        %2858 = vmatmul.mubr.f32.gmra.mrb[0].mxu0 %v2434
        %v2859 = vpop.f32.mrb[0].mxu0
        %v2860 = vadd.f32 %v2531, %v2859
        %v2861 = vpop.f32.mrb[0].mxu0
        %2862 = vmatprep.mubr.f32.mxu0 0.0
        %2863 = vmatmul.mubr.f32.gmra.mrb[0].mxu0 %v2435
        %v2864 = vpop.f32.mrb[0].mxu0
        %v2865 = vadd.f32 %v2531, %v2864
        %v2866 = vpop.f32.mrb[0].mxu0
        %2867 = vmatprep.mubr.f32.mxu0 0.0
        %2868 = vmatmul.mubr.f32.gmra.mrb[0].mxu0 %v2436
        %v2869 = vpop.f32.mrb[0].mxu0
        %v2870 = vadd.f32 %v2531, %v2869
        %v2871 = vpop.f32.mrb[0].mxu0
        %2872 = vmatprep.mubr.f32.mxu0 0.0
        %2873 = vmatmul.mubr.f32.gmra.mrb[0].mxu0 %v2437
        %v2874 = vpop.f32.mrb[0].mxu0
        %v2875 = vadd.f32 %v2531, %v2874
        %v2876 = vpop.f32.mrb[0].mxu0
        %2877 = vmatprep.mubr.f32.mxu0 0.0
        %2878 = vmatmul.mubr.f32.gmra.mrb[0].mxu0 %v2438
        %v2879 = vpop.f32.mrb[0].mxu0
        %v2880 = vadd.f32 %v2531, %v2879
        %v2881 = vpop.f32.mrb[0].mxu0
        %2882 = vmatprep.mubr.f32.mxu0 0.0
        %2883 = vmatmul.mubr.f32.gmra.mrb[0].mxu0 %v2439
        %v2884 = vpop.f32.mrb[0].mxu0
        %v2885 = vadd.f32 %v2531, %v2884
        %v2886 = vpop.f32.mrb[0].mxu0
        %2887 = vmatprep.mubr.f32.mxu0 0.0
        %2888 = vmatmul.mubr.f32.gmra.mrb[0].mxu0 %v2440
        %v2889 = vpop.f32.mrb[0].mxu0
        %v2890 = vadd.f32 %v2531, %v2889
        %v2891 = vpop.f32.mrb[0].mxu0
        %2892 = vmatprep.mubr.f32.mxu0 0.0
        %2893 = vmatmul.mubr.f32.gmra.mrb[0].mxu0 %v2441
        %v2894 = vpop.f32.mrb[0].mxu0
        %v2895 = vadd.f32 %v2531, %v2894
        %v2896 = vpop.f32.mrb[0].mxu0
        %2897 = vmatprep.mubr.f32.mxu0 0.0
        %2898 = vmatmul.mubr.f32.gmra.mrb[0].mxu0 %v2442
        %v2899 = vpop.f32.mrb[0].mxu0
        %v2900 = vadd.f32 %v2531, %v2899
        %v2901 = vpop.f32.mrb[0].mxu0
        %2902 = vmatprep.mubr.f32.mxu0 0.0
        %2903 = vmatmul.mubr.f32.gmra.mrb[0].mxu0 %v2443
        %v2904 = vpop.f32.mrb[0].mxu0
        %v2905 = vadd.f32 %v2531, %v2904
        %v2906 = vpop.f32.mrb[0].mxu0
        %2907 = vmatprep.mubr.f32.mxu0 0.0
        %2908 = vmatmul.mubr.f32.gmra.mrb[0].mxu0 %v2444
        %v2909 = vpop.f32.mrb[0].mxu0
        %v2910 = vadd.f32 %v2531, %v2909
        %v2911 = vpop.f32.mrb[0].mxu0
        %2912 = vmatprep.mubr.f32.mxu0 0.0
        %2913 = vmatmul.mubr.f32.gmra.mrb[0].mxu0 %v2445
        %v2914 = vpop.f32.mrb[0].mxu0
        %v2915 = vadd.f32 %v2531, %v2914
        %v2916 = vpop.f32.mrb[0].mxu0
        %2917 = vmatprep.mubr.f32.mxu0 0.0
        %2918 = vmatmul.mubr.f32.gmra.mrb[0].mxu0 %v2446
        %v2919 = vpop.f32.mrb[0].mxu0
        %v2920 = vadd.f32 %v2531, %v2919
        %v2921 = vpop.f32.mrb[0].mxu0
        %2922 = vmatprep.mubr.f32.mxu0 0.0
        %2923 = vmatmul.mubr.f32.gmra.mrb[0].mxu0 %v2447
        %v2924 = vpop.f32.mrb[0].mxu0
        %v2925 = vadd.f32 %v2531, %v2924
        %v2926 = vpop.f32.mrb[0].mxu0
        %2927 = vmatprep.mubr.f32.mxu0 0.0
        %2928 = vmatmul.mubr.f32.gmra.mrb[0].mxu0 %v2448
        %v2929 = vpop.f32.mrb[0].mxu0
        %v2930 = vadd.f32 %v2531, %v2929
        %v2931 = vpop.f32.mrb[0].mxu0
        %2932 = vmatprep.mubr.f32.mxu0 0.0
        %2933 = vmatmul.mubr.f32.gmra.mrb[0].mxu0 %v2449
        %v2934 = vpop.f32.mrb[0].mxu0
        %v2935 = vadd.f32 %v2531, %v2934
        %v2936 = vpop.f32.mrb[0].mxu0
        %2937 = vmatprep.mubr.f32.mxu0 0.0
        %2938 = vmatmul.mubr.f32.gmra.mrb[0].mxu0 %v2450
        %v2939 = vpop.f32.mrb[0].mxu0
        %v2940 = vadd.f32 %v2531, %v2939
        %v2941 = vpop.f32.mrb[0].mxu0
        %2942 = vmatprep.mubr.f32.mxu0 0.0
        %2943 = vmatmul.mubr.f32.gmra.mrb[0].mxu0 %v2451
        %v2944 = vpop.f32.mrb[0].mxu0
        %v2945 = vadd.f32 %v2531, %v2944
        %v2946 = vpop.f32.mrb[0].mxu0
        %2947 = vmatprep.mubr.f32.mxu0 0.0
        %2948 = vmatmul.mubr.f32.gmra.mrb[0].mxu0 %v2452
        %v2949 = vpop.f32.mrb[0].mxu0
        %v2950 = vadd.f32 %v2531, %v2949
        %v2951 = vpop.f32.mrb[0].mxu0
        %2952 = vmatprep.mubr.f32.mxu0 0.0
        %2953 = vmatmul.mubr.f32.gmra.mrb[0].mxu0 %v2453
        %v2954 = vpop.f32.mrb[0].mxu0
        %v2955 = vadd.f32 %v2531, %v2954
        %v2956 = vpop.f32.mrb[0].mxu0
        %2957 = vmatprep.mubr.f32.mxu0 0.0
        %2958 = vmatmul.mubr.f32.gmra.mrb[0].mxu0 %v2454
        %v2959 = vpop.f32.mrb[0].mxu0
        %v2960 = vadd.f32 %v2531, %v2959
        %v2961 = vpop.f32.mrb[0].mxu0
        %2962 = vmatprep.mubr.f32.mxu0 0.0
        %2963 = vmatmul.mubr.f32.gmra.mrb[0].mxu0 %v2455
        %v2964 = vpop.f32.mrb[0].mxu0
        %v2965 = vadd.f32 %v2531, %v2964
        %v2966 = vpop.f32.mrb[0].mxu0
        %2967 = vmatprep.mubr.f32.mxu0 0.0
        %2968 = vmatmul.mubr.f32.gmra.mrb[0].mxu0 %v2456
        %v2969 = vpop.f32.mrb[0].mxu0
        %v2970 = vadd.f32 %v2531, %v2969
        %v2971 = vpop.f32.mrb[0].mxu0
        %2972 = vmatprep.mubr.f32.mxu0 0.0
        %2973 = vmatmul.mubr.f32.gmra.mrb[0].mxu0 %v2457
        %v2974 = vpop.f32.mrb[0].mxu0
        %v2975 = vadd.f32 %v2531, %v2974
        %v2976 = vpop.f32.mrb[0].mxu0
        %2977 = vmatprep.mubr.f32.mxu0 0.0
        %2978 = vmatmul.mubr.f32.gmra.mrb[0].mxu0 %v2458
        %v2979 = vpop.f32.mrb[0].mxu0
        %v2980 = vadd.f32 %v2531, %v2979
        %v2981 = vpop.f32.mrb[0].mxu0
        %2982 = vmatprep.mubr.f32.mxu0 0.0
        %2983 = vmatmul.mubr.f32.gmra.mrb[0].mxu0 %v2459
        %v2984 = vpop.f32.mrb[0].mxu0
        %v2985 = vadd.f32 %v2531, %v2984
        %v2986 = vpop.f32.mrb[0].mxu0
        %2987 = vmatprep.mubr.f32.mxu0 0.0
        %2988 = vmatmul.mubr.f32.gmra.mrb[0].mxu0 %v2460
        %v2989 = vpop.f32.mrb[0].mxu0
        %v2990 = vadd.f32 %v2531, %v2989
        %v2991 = vpop.f32.mrb[0].mxu0
        %2992 = vmatprep.mubr.f32.mxu0 0.0
        %2993 = vmatmul.mubr.f32.gmra.mrb[0].mxu0 %v2461
        %v2994 = vpop.f32.mrb[0].mxu0
        %v2995 = vadd.f32 %v2531, %v2994
        %v2996 = vpop.f32.mrb[0].mxu0
        %2997 = vmatprep.mubr.f32.mxu0 0.0
        %2998 = vmatmul.mubr.f32.gmra.mrb[0].mxu0 %v2462
        %v2999 = vpop.f32.mrb[0].mxu0
        %v3000 = vadd.f32 %v2531, %v2999
        %v3001 = vpop.f32.mrb[0].mxu0
        %3002 = vmatprep.mubr.f32.mxu0 0.0
        %3003 = vmatmul.mubr.f32.gmra.mrb[0].mxu0 %v2463
        %v3004 = vpop.f32.mrb[0].mxu0
        %v3005 = vadd.f32 %v2531, %v3004
        %v3006 = vpop.f32.mrb[0].mxu0
        %3007 = vmatprep.mubr.f32.mxu0 0.0
        %3008 = vmatmul.mubr.f32.gmra.mrb[0].mxu0 %v2464
        %v3009 = vpop.f32.mrb[0].mxu0
        %v3010 = vadd.f32 %v2531, %v3009
        %v3011 = vpop.f32.mrb[0].mxu0
        %3012 = vmatprep.mubr.f32.mxu0 0.0
        %3013 = vmatmul.mubr.f32.gmra.mrb[0].mxu0 %v2465
        %v3014 = vpop.f32.mrb[0].mxu0
        %v3015 = vadd.f32 %v2531, %v3014
        %v3016 = vpop.f32.mrb[0].mxu0
        %3017 = vmatprep.mubr.f32.mxu0 0.0
        %3018 = vmatmul.mubr.f32.gmra.mrb[0].mxu0 %v2466
        %v3019 = vpop.f32.mrb[0].mxu0
        %v3020 = vadd.f32 %v2531, %v3019
        %v3021 = vpop.f32.mrb[0].mxu0
        %3022 = vmatprep.mubr.f32.mxu0 0.0
        %3023 = vmatmul.mubr.f32.gmra.mrb[0].mxu0 %v2467
        %v3024 = vpop.f32.mrb[0].mxu0
        %v3025 = vadd.f32 %v2531, %v3024
        %v3026 = vpop.f32.mrb[0].mxu0
        %3027 = vmatprep.mubr.f32.mxu0 0.0
        %3028 = vmatmul.mubr.f32.gmra.mrb[0].mxu0 %v2468
        %v3029 = vpop.f32.mrb[0].mxu0
        %v3030 = vadd.f32 %v2531, %v3029
        %v3031 = vpop.f32.mrb[0].mxu0
        %3032 = vmatprep.mubr.f32.mxu0 0.0
        %3033 = vmatmul.mubr.f32.gmra.mrb[0].mxu0 %v2469
        %v3034 = vpop.f32.mrb[0].mxu0
        %v3035 = vadd.f32 %v2531, %v3034
        %v3036 = vpop.f32.mrb[0].mxu0
        %3037 = vmatprep.mubr.f32.mxu0 0.0
        %3038 = vmatmul.mubr.f32.gmra.mrb[0].mxu0 %v2470
        %v3039 = vpop.f32.mrb[0].mxu0
        %v3040 = vadd.f32 %v2531, %v3039
        %v3041 = vpop.f32.mrb[0].mxu0
        %3042 = vmatprep.mubr.f32.mxu0 0.0
        %3043 = vmatmul.mubr.f32.gmra.mrb[0].mxu0 %v2471
        %v3044 = vpop.f32.mrb[0].mxu0
        %v3045 = vadd.f32 %v2531, %v3044
        %v3046 = vpop.f32.mrb[0].mxu0
        %3047 = vmatprep.mubr.f32.mxu0 0.0
        %3048 = vmatmul.mubr.f32.gmra.mrb[0].mxu0 %v2472
        %v3049 = vpop.f32.mrb[0].mxu0
        %v3050 = vadd.f32 %v2531, %v3049
        %v3051 = vpop.f32.mrb[0].mxu0
        %3052 = vmatprep.mubr.f32.mxu0 0.0
        %3053 = vmatmul.mubr.f32.gmra.mrb[0].mxu0 %v2473
        %v3054 = vpop.f32.mrb[0].mxu0
        %v3055 = vadd.f32 %v2531, %v3054
        %v3056 = vpop.f32.mrb[0].mxu0
        %3057 = vmatprep.mubr.f32.mxu0 0.0
        %3058 = vmatmul.mubr.f32.gmra.mrb[0].mxu0 %v2474
        %v3059 = vpop.f32.mrb[0].mxu0
        %v3060 = vadd.f32 %v2531, %v3059
        %v3061 = vpop.f32.mrb[0].mxu0
        %3062 = vmatprep.mubr.f32.mxu0 0.0
        %3063 = vmatmul.mubr.f32.gmra.mrb[0].mxu0 %v2475
        %v3064 = vpop.f32.mrb[0].mxu0
        %v3065 = vadd.f32 %v2531, %v3064
        %v3066 = vpop.f32.mrb[0].mxu0
        %3067 = vmatprep.mubr.f32.mxu0 0.0
        %3068 = vmatmul.mubr.f32.gmra.mrb[0].mxu0 %v2476
        %v3069 = vpop.f32.mrb[0].mxu0
        %v3070 = vadd.f32 %v2531, %v3069
        %v3071 = vpop.f32.mrb[0].mxu0
        %3072 = vmatprep.mubr.f32.mxu0 0.0
        %3073 = vmatmul.mubr.f32.gmra.mrb[0].mxu0 %v2477
        %v3074 = vpop.f32.mrb[0].mxu0
        %v3075 = vadd.f32 %v2531, %v3074
        %v3076 = vpop.f32.mrb[0].mxu0
        %3077 = vmatprep.mubr.f32.mxu0 0.0
        %3078 = vmatmul.mubr.f32.gmra.mrb[0].mxu0 %v2478
        %v3079 = vpop.f32.mrb[0].mxu0
        %v3080 = vadd.f32 %v2531, %v3079
        %v3081 = vpop.f32.mrb[0].mxu0
        %3082 = vmatprep.mubr.f32.mxu0 0.0
        %3083 = vmatmul.mubr.f32.gmra.mrb[0].mxu0 %v2479
        %v3084 = vpop.f32.mrb[0].mxu0
        %v3085 = vadd.f32 %v2531, %v3084
        %v3086 = vpop.f32.mrb[0].mxu0
        %3087 = vmatprep.mubr.f32.mxu0 0.0
        %3088 = vmatmul.mubr.f32.gmra.mrb[0].mxu0 %v2480
        %v3089 = vpop.f32.mrb[0].mxu0
        %v3090 = vadd.f32 %v2531, %v3089
        %v3091 = vpop.f32.mrb[0].mxu0
        %3092 = vmatprep.mubr.f32.mxu0 0.0
        %3093 = vmatmul.mubr.f32.gmra.mrb[0].mxu0 %v2481
        %v3094 = vpop.f32.mrb[0].mxu0
        %v3095 = vadd.f32 %v2531, %v3094
        %v3096 = vpop.f32.mrb[0].mxu0
        %3097 = vmatprep.mubr.f32.mxu0 0.0
        %3098 = vmatmul.mubr.f32.gmra.mrb[0].mxu0 %v2482
        %v3099 = vpop.f32.mrb[0].mxu0
        %v3100 = vadd.f32 %v2531, %v3099
        %v3101 = vpop.f32.mrb[0].mxu0
        %3102 = vmatprep.mubr.f32.mxu0 0.0
        %3103 = vmatmul.mubr.f32.gmra.mrb[0].mxu0 %v2483
        %v3104 = vpop.f32.mrb[0].mxu0
        %v3105 = vadd.f32 %v2531, %v3104
        %v3106 = vpop.f32.mrb[0].mxu0
        %3107 = vmatprep.mubr.f32.mxu0 0.0
        %3108 = vmatmul.mubr.f32.gmra.mrb[0].mxu0 %v2484
        %v3109 = vpop.f32.mrb[0].mxu0
        %v3110 = vadd.f32 %v2531, %v3109
        %v3111 = vpop.f32.mrb[0].mxu0
        %3112 = vmatprep.mubr.f32.mxu0 0.0
        %3113 = vmatmul.mubr.f32.gmra.mrb[0].mxu0 %v2485
        %v3114 = vpop.f32.mrb[0].mxu0
        %v3115 = vadd.f32 %v2531, %v3114
        %v3116 = vpop.f32.mrb[0].mxu0
        %3117 = vmatprep.mubr.f32.mxu0 0.0
        %3118 = vmatmul.mubr.f32.gmra.mrb[0].mxu0 %v2486
        %v3119 = vpop.f32.mrb[0].mxu0
        %v3120 = vadd.f32 %v2531, %v3119
        %v3121 = vpop.f32.mrb[0].mxu0
        %3122 = vmatprep.mubr.f32.mxu0 0.0
        %3123 = vmatmul.mubr.f32.gmra.mrb[0].mxu0 %v2487
        %v3124 = vpop.f32.mrb[0].mxu0
        %v3125 = vadd.f32 %v2531, %v3124
        %v3126 = vpop.f32.mrb[0].mxu0
        %3127 = vmatprep.mubr.f32.mxu0 0.0
        %3128 = vmatmul.mubr.f32.gmra.mrb[0].mxu0 %v2488
        %v3129 = vpop.f32.mrb[0].mxu0
        %v3130 = vadd.f32 %v2531, %v3129
        %v3131 = vpop.f32.mrb[0].mxu0
        %3132 = vmatprep.mubr.f32.mxu0 0.0
        %3133 = vmatmul.mubr.f32.gmra.mrb[0].mxu0 %v2489
        %v3134 = vpop.f32.mrb[0].mxu0
        %v3135 = vadd.f32 %v2531, %v3134
        %v3136 = vpop.f32.mrb[0].mxu0
        %3137 = vmatprep.mubr.f32.mxu0 0.0
        %3138 = vmatmul.mubr.f32.gmra.mrb[0].mxu0 %v2490
        %v3139 = vpop.f32.mrb[0].mxu0
        %v3140 = vadd.f32 %v2531, %v3139
        %v3141 = vpop.f32.mrb[0].mxu0
        %3142 = vmatprep.mubr.f32.mxu0 0.0
        %3143 = vmatmul.mubr.f32.gmra.mrb[0].mxu0 %v2491
        %v3144 = vpop.f32.mrb[0].mxu0
        %v3145 = vadd.f32 %v2531, %v3144
        %v3146 = vpop.f32.mrb[0].mxu0
        %3147 = vmatprep.mubr.f32.mxu0 0.0
        %3148 = vmatmul.mubr.f32.gmra.mrb[0].mxu0 %v2492
        %v3149 = vpop.f32.mrb[0].mxu0
        %v3150 = vadd.f32 %v2531, %v3149
        %v3151 = vpop.f32.mrb[0].mxu0
        %3152 = vmatprep.mubr.f32.mxu0 0.0
        %3153 = vmatmul.mubr.f32.gmra.mrb[0].mxu0 %v2493
        %v3154 = vpop.f32.mrb[0].mxu0
        %v3155 = vadd.f32 %v2531, %v3154
        %v3156 = vpop.f32.mrb[0].mxu0
        %3157 = vmatprep.mubr.f32.mxu0 0.0
        %3158 = vmatmul.mubr.f32.gmra.mrb[0].mxu0 %v2494
        %v3159 = vpop.f32.mrb[0].mxu0
        %v3160 = vadd.f32 %v2531, %v3159
        %v3161 = vpop.f32.mrb[0].mxu0
        %3162 = vmatprep.mubr.f32.mxu0 0.0
        %3163 = vmatmul.mubr.f32.gmra.mrb[0].mxu0 %v2495
        %v3164 = vpop.f32.mrb[0].mxu0
        %v3165 = vadd.f32 %v2531, %v3164
        %v3166 = vpop.f32.mrb[0].mxu0
        %3167 = vmatprep.mubr.f32.mxu0 0.0
        %3168 = vmatmul.mubr.f32.gmra.mrb[0].mxu0 %v2496
        %v3169 = vpop.f32.mrb[0].mxu0
        %v3170 = vadd.f32 %v2531, %v3169
        %v3171 = vpop.f32.mrb[0].mxu0
        %3172 = vmatprep.mubr.f32.mxu0 0.0
        %3173 = vmatmul.mubr.f32.gmra.mrb[0].mxu0 %v2497
        %v3174 = vpop.f32.mrb[0].mxu0
        %v3175 = vadd.f32 %v2531, %v3174
        %v3176 = vpop.f32.mrb[0].mxu0
        %3177 = vmatprep.mubr.f32.mxu0 0.0
        %3178 = vmatmul.mubr.f32.gmra.mrb[0].mxu0 %v2498
        %v3179 = vpop.f32.mrb[0].mxu0
        %v3180 = vadd.f32 %v2531, %v3179
        %v3181 = vpop.f32.mrb[0].mxu0
        %3182 = vmatprep.mubr.f32.mxu0 0.0
        %3183 = vmatmul.mubr.f32.gmra.mrb[0].mxu0 %v2499
        %v3184 = vpop.f32.mrb[0].mxu0
        %v3185 = vadd.f32 %v2531, %v3184
        %v3186 = vpop.f32.mrb[0].mxu0
        %3187 = vmatprep.mubr.f32.mxu0 0.0
        %3188 = vmatmul.mubr.f32.gmra.mrb[0].mxu0 %v2500
        %v3189 = vpop.f32.mrb[0].mxu0
        %v3190 = vadd.f32 %v2531, %v3189
        %v3191 = vpop.f32.mrb[0].mxu0
        %3192 = vmatprep.mubr.f32.mxu0 0.0
        %3193 = vmatmul.mubr.f32.gmra.mrb[0].mxu0 %v2501
        %v3194 = vpop.f32.mrb[0].mxu0
        %v3195 = vadd.f32 %v2531, %v3194
        %v3196 = vpop.f32.mrb[0].mxu0
        %3197 = vmatprep.mubr.f32.mxu0 0.0
        %3198 = vmatmul.mubr.f32.gmra.mrb[0].mxu0 %v2502
        %v3199 = vpop.f32.mrb[0].mxu0
        %v3200 = vadd.f32 %v2531, %v3199
        %v3201 = vpop.f32.mrb[0].mxu0
        %3202 = vmatprep.mubr.f32.mxu0 0.0
        %3203 = vmatmul.mubr.f32.gmra.mrb[0].mxu0 %v2503
        %v3204 = vpop.f32.mrb[0].mxu0
        %v3205 = vadd.f32 %v2531, %v3204
        %v3206 = vpop.f32.mrb[0].mxu0
        %3207 = vmatprep.mubr.f32.mxu0 0.0
        %3208 = vmatmul.mubr.f32.gmra.mrb[0].mxu0 %v2504
        %v3209 = vpop.f32.mrb[0].mxu0
        %v3210 = vadd.f32 %v2531, %v3209
        %v3211 = vpop.f32.mrb[0].mxu0
        %3212 = vmatprep.mubr.f32.mxu0 0.0
        %3213 = vmatmul.mubr.f32.gmra.mrb[0].mxu0 %v2505
        %v3214 = vpop.f32.mrb[0].mxu0
        %v3215 = vadd.f32 %v2531, %v3214
        %v3216 = vpop.f32.mrb[0].mxu0
        %3217 = vmatprep.mubr.f32.mxu0 0.0
        %3218 = vmatmul.mubr.f32.gmra.mrb[0].mxu0 %v2506
        %v3219 = vpop.f32.mrb[0].mxu0
        %v3220 = vadd.f32 %v2531, %v3219
        %v3221 = vpop.f32.mrb[0].mxu0
        %3222 = vmatprep.mubr.f32.mxu0 0.0
        %3223 = vmatmul.mubr.f32.gmra.mrb[0].mxu0 %v2507
        %v3224 = vpop.f32.mrb[0].mxu0
        %v3225 = vadd.f32 %v2531, %v3224
        %v3226 = vpop.f32.mrb[0].mxu0
        %3227 = vmatprep.mubr.f32.mxu0 0.0
        %3228 = vmatmul.mubr.f32.gmra.mrb[0].mxu0 %v2508
        %v3229 = vpop.f32.mrb[0].mxu0
        %v3230 = vadd.f32 %v2531, %v3229
        %v3231 = vpop.f32.mrb[0].mxu0
        %3232 = vmatprep.mubr.f32.mxu0 0.0
        %3233 = vmatmul.mubr.f32.gmra.mrb[0].mxu0 %v2509
        %v3234 = vpop.f32.mrb[0].mxu0
        %v3235 = vadd.f32 %v2531, %v3234
        %v3236 = vpop.f32.mrb[0].mxu0
        %3237 = vdwg.mxu0
        %3238 = vst [vmem:[%s280] sm:$0xff] %v2600
        %3239 = vst [vmem:[%s280 + $0x8] sm:$0xff] %v2605
        %3240 = vst [vmem:[%s280 + $0x10] sm:$0xff] %v2610
        %3241 = vst [vmem:[%s280 + $0x18] sm:$0xff] %v2615
        %3242 = vst [vmem:[%s280 + $0x20] sm:$0xff] %v2620
        %3243 = vst [vmem:[%s280 + $0x28] sm:$0xff] %v2625
        %3244 = vst [vmem:[%s280 + $0x30] sm:$0xff] %v2630
        %3245 = vst [vmem:[%s280 + $0x38] sm:$0xff] %v2635
        %3246 = vst [vmem:[%s280 + $0x40] sm:$0xff] %v2640
        %3247 = vst [vmem:[%s280 + $0x48] sm:$0xff] %v2645
        %3248 = vst [vmem:[%s280 + $0x50] sm:$0xff] %v2650
        %3249 = vst [vmem:[%s280 + $0x58] sm:$0xff] %v2655
        %3250 = vst [vmem:[%s280 + $0x60] sm:$0xff] %v2660
        %3251 = vst [vmem:[%s280 + $0x68] sm:$0xff] %v2665
        %3252 = vst [vmem:[%s280 + $0x70] sm:$0xff] %v2670
        %3253 = vst [vmem:[%s280 + $0x78] sm:$0xff] %v2675
        %3254 = vst [vmem:[%s280 + $0x80] sm:$0xff] %v2680
        %3255 = vst [vmem:[%s280 + $0x88] sm:$0xff] %v2685
        %3256 = vst [vmem:[%s280 + $0x90] sm:$0xff] %v2690
        %3257 = vst [vmem:[%s280 + $0x98] sm:$0xff] %v2695
        %3258 = vst [vmem:[%s280 + $0xa0] sm:$0xff] %v2700
        %3259 = vst [vmem:[%s280 + $0xa8] sm:$0xff] %v2705
        %3260 = vst [vmem:[%s280 + $0xb0] sm:$0xff] %v2710
        %3261 = vst [vmem:[%s280 + $0xb8] sm:$0xff] %v2715
        %3262 = vst [vmem:[%s280 + $0xc0] sm:$0xff] %v2720
        %3263 = vst [vmem:[%s280 + $0xc8] sm:$0xff] %v2725
        %3264 = vst [vmem:[%s280 + $0xd0] sm:$0xff] %v2730
        %3265 = vst [vmem:[%s280 + $0xd8] sm:$0xff] %v2735
        %3266 = vst [vmem:[%s280 + $0xe0] sm:$0xff] %v2740
        %3267 = vst [vmem:[%s280 + $0xe8] sm:$0xff] %v2745
        %3268 = vst [vmem:[%s280 + $0xf0] sm:$0xff] %v2750
        %3269 = vst [vmem:[%s280 + $0xf8] sm:$0xff] %v2755
        %3270 = vst [vmem:[%s280 + $0x100] sm:$0xff] %v2760
        %3271 = vst [vmem:[%s280 + $0x108] sm:$0xff] %v2765
        %3272 = vst [vmem:[%s280 + $0x110] sm:$0xff] %v2770
        %3273 = vst [vmem:[%s280 + $0x118] sm:$0xff] %v2775
        %3274 = vst [vmem:[%s280 + $0x120] sm:$0xff] %v2780
        %3275 = vst [vmem:[%s280 + $0x128] sm:$0xff] %v2785
        %3276 = vst [vmem:[%s280 + $0x130] sm:$0xff] %v2790
        %3277 = vst [vmem:[%s280 + $0x138] sm:$0xff] %v2795
        %3278 = vst [vmem:[%s280 + $0x140] sm:$0xff] %v2800
        %3279 = vst [vmem:[%s280 + $0x148] sm:$0xff] %v2805
        %3280 = vst [vmem:[%s280 + $0x150] sm:$0xff] %v2810
        %3281 = vst [vmem:[%s280 + $0x158] sm:$0xff] %v2815
        %3282 = vst [vmem:[%s280 + $0x160] sm:$0xff] %v2820
        %3283 = vst [vmem:[%s280 + $0x168] sm:$0xff] %v2825
        %3284 = vst [vmem:[%s280 + $0x170] sm:$0xff] %v2830
        %3285 = vst [vmem:[%s280 + $0x178] sm:$0xff] %v2835
        %3286 = vst [vmem:[%s280 + $0x180] sm:$0xff] %v2840
        %3287 = vst [vmem:[%s280 + $0x188] sm:$0xff] %v2845
        %3288 = vst [vmem:[%s280 + $0x190] sm:$0xff] %v2850
        %3289 = vst [vmem:[%s280 + $0x198] sm:$0xff] %v2855
        %3290 = vst [vmem:[%s280 + $0x1a0] sm:$0xff] %v2860
        %3291 = vst [vmem:[%s280 + $0x1a8] sm:$0xff] %v2865
        %3292 = vst [vmem:[%s280 + $0x1b0] sm:$0xff] %v2870
        %3293 = vst [vmem:[%s280 + $0x1b8] sm:$0xff] %v2875
        %3294 = vst [vmem:[%s280 + $0x1c0] sm:$0xff] %v2880
        %3295 = vst [vmem:[%s280 + $0x1c8] sm:$0xff] %v2885
        %3296 = vst [vmem:[%s280 + $0x1d0] sm:$0xff] %v2890
        %3297 = vst [vmem:[%s280 + $0x1d8] sm:$0xff] %v2895
        %3298 = vst [vmem:[%s280 + $0x1e0] sm:$0xff] %v2900
        %3299 = vst [vmem:[%s280 + $0x1e8] sm:$0xff] %v2905
        %3300 = vst [vmem:[%s280 + $0x1f0] sm:$0xff] %v2910
        %3301 = vst [vmem:[%s280 + $0x1f8] sm:$0xff] %v2915
        %3302 = vst [vmem:[%s280 + $0x200] sm:$0xff] %v2920
        %3303 = vst [vmem:[%s280 + $0x208] sm:$0xff] %v2925
        %3304 = vst [vmem:[%s280 + $0x210] sm:$0xff] %v2930
        %3305 = vst [vmem:[%s280 + $0x218] sm:$0xff] %v2935
        %3306 = vst [vmem:[%s280 + $0x220] sm:$0xff] %v2940
        %3307 = vst [vmem:[%s280 + $0x228] sm:$0xff] %v2945
        %3308 = vst [vmem:[%s280 + $0x230] sm:$0xff] %v2950
        %3309 = vst [vmem:[%s280 + $0x238] sm:$0xff] %v2955
        %3310 = vst [vmem:[%s280 + $0x240] sm:$0xff] %v2960
        %3311 = vst [vmem:[%s280 + $0x248] sm:$0xff] %v2965
        %3312 = vst [vmem:[%s280 + $0x250] sm:$0xff] %v2970
        %3313 = vst [vmem:[%s280 + $0x258] sm:$0xff] %v2975
        %3314 = vst [vmem:[%s280 + $0x260] sm:$0xff] %v2980
        %3315 = vst [vmem:[%s280 + $0x268] sm:$0xff] %v2985
        %3316 = vst [vmem:[%s280 + $0x270] sm:$0xff] %v2990
        %3317 = vst [vmem:[%s280 + $0x278] sm:$0xff] %v2995
        %3318 = vst [vmem:[%s280 + $0x280] sm:$0xff] %v3000
        %3319 = vst [vmem:[%s280 + $0x288] sm:$0xff] %v3005
        %3320 = vst [vmem:[%s280 + $0x290] sm:$0xff] %v3010
        %3321 = vst [vmem:[%s280 + $0x298] sm:$0xff] %v3015
        %3322 = vst [vmem:[%s280 + $0x2a0] sm:$0xff] %v3020
        %3323 = vst [vmem:[%s280 + $0x2a8] sm:$0xff] %v3025
        %3324 = vst [vmem:[%s280 + $0x2b0] sm:$0xff] %v3030
        %3325 = vst [vmem:[%s280 + $0x2b8] sm:$0xff] %v3035
        %3326 = vst [vmem:[%s280 + $0x2c0] sm:$0xff] %v3040
        %3327 = vst [vmem:[%s280 + $0x2c8] sm:$0xff] %v3045
        %3328 = vst [vmem:[%s280 + $0x2d0] sm:$0xff] %v3050
        %3329 = vst [vmem:[%s280 + $0x2d8] sm:$0xff] %v3055
        %3330 = vst [vmem:[%s280 + $0x2e0] sm:$0xff] %v3060
        %3331 = vst [vmem:[%s280 + $0x2e8] sm:$0xff] %v3065
        %3332 = vst [vmem:[%s280 + $0x2f0] sm:$0xff] %v3070
        %3333 = vst [vmem:[%s280 + $0x2f8] sm:$0xff] %v3075
        %3334 = vst [vmem:[%s280 + $0x300] sm:$0xff] %v3080
        %3335 = vst [vmem:[%s280 + $0x308] sm:$0xff] %v3085
        %3336 = vst [vmem:[%s280 + $0x310] sm:$0xff] %v3090
        %3337 = vst [vmem:[%s280 + $0x318] sm:$0xff] %v3095
        %3338 = vst [vmem:[%s280 + $0x320] sm:$0xff] %v3100
        %3339 = vst [vmem:[%s280 + $0x328] sm:$0xff] %v3105
        %3340 = vst [vmem:[%s280 + $0x330] sm:$0xff] %v3110
        %3341 = vst [vmem:[%s280 + $0x338] sm:$0xff] %v3115
        %3342 = vst [vmem:[%s280 + $0x340] sm:$0xff] %v3120
        %3343 = vst [vmem:[%s280 + $0x348] sm:$0xff] %v3125
        %3344 = vst [vmem:[%s280 + $0x350] sm:$0xff] %v3130
        %3345 = vst [vmem:[%s280 + $0x358] sm:$0xff] %v3135
        %3346 = vst [vmem:[%s280 + $0x360] sm:$0xff] %v3140
        %3347 = vst [vmem:[%s280 + $0x368] sm:$0xff] %v3145
        %3348 = vst [vmem:[%s280 + $0x370] sm:$0xff] %v3150
        %3349 = vst [vmem:[%s280 + $0x378] sm:$0xff] %v3155
        %3350 = vst [vmem:[%s280 + $0x380] sm:$0xff] %v3160
        %3351 = vst [vmem:[%s280 + $0x388] sm:$0xff] %v3165
        %3352 = vst [vmem:[%s280 + $0x390] sm:$0xff] %v3170
        %3353 = vst [vmem:[%s280 + $0x398] sm:$0xff] %v3175
        %3354 = vst [vmem:[%s280 + $0x3a0] sm:$0xff] %v3180
        %3355 = vst [vmem:[%s280 + $0x3a8] sm:$0xff] %v3185
        %3356 = vst [vmem:[%s280 + $0x3b0] sm:$0xff] %v3190
        %3357 = vst [vmem:[%s280 + $0x3b8] sm:$0xff] %v3195
        %3358 = vst [vmem:[%s280 + $0x3c0] sm:$0xff] %v3200
        %3359 = vst [vmem:[%s280 + $0x3c8] sm:$0xff] %v3205
        %3360 = vst [vmem:[%s280 + $0x3d0] sm:$0xff] %v3210
        %3361 = vst [vmem:[%s280 + $0x3d8] sm:$0xff] %v3215
        %3362 = vst [vmem:[%s280 + $0x3e0] sm:$0xff] %v3220
        %3363 = vst [vmem:[%s280 + $0x3e8] sm:$0xff] %v3225
        %3364 = vst [vmem:[%s280 + $0x3f0] sm:$0xff] %v3230
        %3365 = vst [vmem:[%s280 + $0x3f8] sm:$0xff] %v3235
        %s3366 = sand.u32 %s178, 1
        %s3367 = sand.u32 %s178, 1
        %s3368 = smul.addr %s3367, 1024
        %s3369 = scalar_lea.vmem [#allocation2], %s3368
        // Predicated region
        $region49: #{qnetwork_forward.1} parent=47 // pred_check
          %p3370 = pneg %p188
        $region50: #{qnetwork_forward.1} parent=47 // pred_check_branch
          %3372 = sbr.rel (%p3370) target = $region52
        $region51: #{qnetwork_forward.1} parent=47 // pred_region
          %s3373 = smul.u32 128, %s18
          %s3374 = ssub.s32 313, %s3373
          %p3375 = scmp.lt.s32.totalorder %s3374, 128
          %s3376 = scalar_select %p3375, %s3374, 128
          %s3377 = smul.u32 128, %s3376
          %p3378 = scmp.ne.s32.totalorder 0, %s3377
          %s3379 = smul.addr %s3373, 8
          %s3380 = scalar_lea.vmem %s7, %s3379
          // Predicated region
          $region53: #{qnetwork_forward.1} parent=51 // pred_check
            %p3381 = pneg %p3378
          $region54: #{qnetwork_forward.1} parent=51 // pred_check_branch
            %3383 = sbr.rel (%p3381) target = $region56
          $region55: #{qnetwork_forward.1} parent=51 // pred_region
            // Predicated region
            $region57: #{qnetwork_forward.1} parent=55 // pred_check
              _
            $region58: #{qnetwork_forward.1} parent=55 // pred_check_branch
              %3385 = sbr.rel (0) target = $region60
            $region59: #{qnetwork_forward.1} parent=55 // pred_region
              // Predicated region
              $region79: #{qnetwork_forward.1} parent=59 // pred_check
                _
              $region80: #{qnetwork_forward.1} parent=59 // pred_check_branch
                %3560 = sbr.rel (0) target = $region82
              $region81: #{qnetwork_forward.1} parent=59 // pred_region
                %s3561 = sshrl.u32 %s3376, 6
                // While loop
                $region83: #{qnetwork_forward.1} parent=81 // loop_pre_header
                  _
                $region84: #{qnetwork_forward.1} parent=81 // loop_header
                  %s3563 = sphi 0, %s3565
                  %p3564 = scmp.ge.s32.totalorder %s3563, %s3561
                  %s3568 = sphi 0, %s3701
                  %s3569 = sphi %s3369, %s3704
                  %s3570 = sphi %s3380, %s3705
                $region85: #{qnetwork_forward.1} parent=81 // loop_header_branch
                  %3567 = sbr.rel (%p3564) target = $region89
                $region86: #{qnetwork_forward.1} parent=81 // loop_body
                  %v3571 = vld [vmem:[%s3569] sm:$0xff]
                  %3572 = vst [vmem:[%s3570] sm:$0xff] %v3571
                  %v3573 = vld [vmem:[%s3569 + $0x8] sm:$0xff]
                  %3574 = vst [vmem:[%s3570 + $0x8] sm:$0xff] %v3573
                  %v3575 = vld [vmem:[%s3569 + $0x10] sm:$0xff]
                  %3576 = vst [vmem:[%s3570 + $0x10] sm:$0xff] %v3575
                  %v3577 = vld [vmem:[%s3569 + $0x18] sm:$0xff]
                  %3578 = vst [vmem:[%s3570 + $0x18] sm:$0xff] %v3577
                  %v3579 = vld [vmem:[%s3569 + $0x20] sm:$0xff]
                  %3580 = vst [vmem:[%s3570 + $0x20] sm:$0xff] %v3579
                  %v3581 = vld [vmem:[%s3569 + $0x28] sm:$0xff]
                  %3582 = vst [vmem:[%s3570 + $0x28] sm:$0xff] %v3581
                  %v3583 = vld [vmem:[%s3569 + $0x30] sm:$0xff]
                  %3584 = vst [vmem:[%s3570 + $0x30] sm:$0xff] %v3583
                  %v3585 = vld [vmem:[%s3569 + $0x38] sm:$0xff]
                  %3586 = vst [vmem:[%s3570 + $0x38] sm:$0xff] %v3585
                  %v3587 = vld [vmem:[%s3569 + $0x40] sm:$0xff]
                  %3588 = vst [vmem:[%s3570 + $0x40] sm:$0xff] %v3587
                  %v3589 = vld [vmem:[%s3569 + $0x48] sm:$0xff]
                  %3590 = vst [vmem:[%s3570 + $0x48] sm:$0xff] %v3589
                  %v3591 = vld [vmem:[%s3569 + $0x50] sm:$0xff]
                  %3592 = vst [vmem:[%s3570 + $0x50] sm:$0xff] %v3591
                  %v3593 = vld [vmem:[%s3569 + $0x58] sm:$0xff]
                  %3594 = vst [vmem:[%s3570 + $0x58] sm:$0xff] %v3593
                  %v3595 = vld [vmem:[%s3569 + $0x60] sm:$0xff]
                  %3596 = vst [vmem:[%s3570 + $0x60] sm:$0xff] %v3595
                  %v3597 = vld [vmem:[%s3569 + $0x68] sm:$0xff]
                  %3598 = vst [vmem:[%s3570 + $0x68] sm:$0xff] %v3597
                  %v3599 = vld [vmem:[%s3569 + $0x70] sm:$0xff]
                  %3600 = vst [vmem:[%s3570 + $0x70] sm:$0xff] %v3599
                  %v3601 = vld [vmem:[%s3569 + $0x78] sm:$0xff]
                  %3602 = vst [vmem:[%s3570 + $0x78] sm:$0xff] %v3601
                  %v3603 = vld [vmem:[%s3569 + $0x80] sm:$0xff]
                  %3604 = vst [vmem:[%s3570 + $0x80] sm:$0xff] %v3603
                  %v3605 = vld [vmem:[%s3569 + $0x88] sm:$0xff]
                  %3606 = vst [vmem:[%s3570 + $0x88] sm:$0xff] %v3605
                  %v3607 = vld [vmem:[%s3569 + $0x90] sm:$0xff]
                  %3608 = vst [vmem:[%s3570 + $0x90] sm:$0xff] %v3607
                  %v3609 = vld [vmem:[%s3569 + $0x98] sm:$0xff]
                  %3610 = vst [vmem:[%s3570 + $0x98] sm:$0xff] %v3609
                  %v3611 = vld [vmem:[%s3569 + $0xa0] sm:$0xff]
                  %3612 = vst [vmem:[%s3570 + $0xa0] sm:$0xff] %v3611
                  %v3613 = vld [vmem:[%s3569 + $0xa8] sm:$0xff]
                  %3614 = vst [vmem:[%s3570 + $0xa8] sm:$0xff] %v3613
                  %v3615 = vld [vmem:[%s3569 + $0xb0] sm:$0xff]
                  %3616 = vst [vmem:[%s3570 + $0xb0] sm:$0xff] %v3615
                  %v3617 = vld [vmem:[%s3569 + $0xb8] sm:$0xff]
                  %3618 = vst [vmem:[%s3570 + $0xb8] sm:$0xff] %v3617
                  %v3619 = vld [vmem:[%s3569 + $0xc0] sm:$0xff]
                  %3620 = vst [vmem:[%s3570 + $0xc0] sm:$0xff] %v3619
                  %v3621 = vld [vmem:[%s3569 + $0xc8] sm:$0xff]
                  %3622 = vst [vmem:[%s3570 + $0xc8] sm:$0xff] %v3621
                  %v3623 = vld [vmem:[%s3569 + $0xd0] sm:$0xff]
                  %3624 = vst [vmem:[%s3570 + $0xd0] sm:$0xff] %v3623
                  %v3625 = vld [vmem:[%s3569 + $0xd8] sm:$0xff]
                  %3626 = vst [vmem:[%s3570 + $0xd8] sm:$0xff] %v3625
                  %v3627 = vld [vmem:[%s3569 + $0xe0] sm:$0xff]
                  %3628 = vst [vmem:[%s3570 + $0xe0] sm:$0xff] %v3627
                  %v3629 = vld [vmem:[%s3569 + $0xe8] sm:$0xff]
                  %3630 = vst [vmem:[%s3570 + $0xe8] sm:$0xff] %v3629
                  %v3631 = vld [vmem:[%s3569 + $0xf0] sm:$0xff]
                  %3632 = vst [vmem:[%s3570 + $0xf0] sm:$0xff] %v3631
                  %v3633 = vld [vmem:[%s3569 + $0xf8] sm:$0xff]
                  %3634 = vst [vmem:[%s3570 + $0xf8] sm:$0xff] %v3633
                  %v3635 = vld [vmem:[%s3569 + $0x100] sm:$0xff]
                  %3636 = vst [vmem:[%s3570 + $0x100] sm:$0xff] %v3635
                  %v3637 = vld [vmem:[%s3569 + $0x108] sm:$0xff]
                  %3638 = vst [vmem:[%s3570 + $0x108] sm:$0xff] %v3637
                  %v3639 = vld [vmem:[%s3569 + $0x110] sm:$0xff]
                  %3640 = vst [vmem:[%s3570 + $0x110] sm:$0xff] %v3639
                  %v3641 = vld [vmem:[%s3569 + $0x118] sm:$0xff]
                  %3642 = vst [vmem:[%s3570 + $0x118] sm:$0xff] %v3641
                  %v3643 = vld [vmem:[%s3569 + $0x120] sm:$0xff]
                  %3644 = vst [vmem:[%s3570 + $0x120] sm:$0xff] %v3643
                  %v3645 = vld [vmem:[%s3569 + $0x128] sm:$0xff]
                  %3646 = vst [vmem:[%s3570 + $0x128] sm:$0xff] %v3645
                  %v3647 = vld [vmem:[%s3569 + $0x130] sm:$0xff]
                  %3648 = vst [vmem:[%s3570 + $0x130] sm:$0xff] %v3647
                  %v3649 = vld [vmem:[%s3569 + $0x138] sm:$0xff]
                  %3650 = vst [vmem:[%s3570 + $0x138] sm:$0xff] %v3649
                  %v3651 = vld [vmem:[%s3569 + $0x140] sm:$0xff]
                  %3652 = vst [vmem:[%s3570 + $0x140] sm:$0xff] %v3651
                  %v3653 = vld [vmem:[%s3569 + $0x148] sm:$0xff]
                  %3654 = vst [vmem:[%s3570 + $0x148] sm:$0xff] %v3653
                  %v3655 = vld [vmem:[%s3569 + $0x150] sm:$0xff]
                  %3656 = vst [vmem:[%s3570 + $0x150] sm:$0xff] %v3655
                  %v3657 = vld [vmem:[%s3569 + $0x158] sm:$0xff]
                  %3658 = vst [vmem:[%s3570 + $0x158] sm:$0xff] %v3657
                  %v3659 = vld [vmem:[%s3569 + $0x160] sm:$0xff]
                  %3660 = vst [vmem:[%s3570 + $0x160] sm:$0xff] %v3659
                  %v3661 = vld [vmem:[%s3569 + $0x168] sm:$0xff]
                  %3662 = vst [vmem:[%s3570 + $0x168] sm:$0xff] %v3661
                  %v3663 = vld [vmem:[%s3569 + $0x170] sm:$0xff]
                  %3664 = vst [vmem:[%s3570 + $0x170] sm:$0xff] %v3663
                  %v3665 = vld [vmem:[%s3569 + $0x178] sm:$0xff]
                  %3666 = vst [vmem:[%s3570 + $0x178] sm:$0xff] %v3665
                  %v3667 = vld [vmem:[%s3569 + $0x180] sm:$0xff]
                  %3668 = vst [vmem:[%s3570 + $0x180] sm:$0xff] %v3667
                  %v3669 = vld [vmem:[%s3569 + $0x188] sm:$0xff]
                  %3670 = vst [vmem:[%s3570 + $0x188] sm:$0xff] %v3669
                  %v3671 = vld [vmem:[%s3569 + $0x190] sm:$0xff]
                  %3672 = vst [vmem:[%s3570 + $0x190] sm:$0xff] %v3671
                  %v3673 = vld [vmem:[%s3569 + $0x198] sm:$0xff]
                  %3674 = vst [vmem:[%s3570 + $0x198] sm:$0xff] %v3673
                  %v3675 = vld [vmem:[%s3569 + $0x1a0] sm:$0xff]
                  %3676 = vst [vmem:[%s3570 + $0x1a0] sm:$0xff] %v3675
                  %v3677 = vld [vmem:[%s3569 + $0x1a8] sm:$0xff]
                  %3678 = vst [vmem:[%s3570 + $0x1a8] sm:$0xff] %v3677
                  %v3679 = vld [vmem:[%s3569 + $0x1b0] sm:$0xff]
                  %3680 = vst [vmem:[%s3570 + $0x1b0] sm:$0xff] %v3679
                  %v3681 = vld [vmem:[%s3569 + $0x1b8] sm:$0xff]
                  %3682 = vst [vmem:[%s3570 + $0x1b8] sm:$0xff] %v3681
                  %v3683 = vld [vmem:[%s3569 + $0x1c0] sm:$0xff]
                  %3684 = vst [vmem:[%s3570 + $0x1c0] sm:$0xff] %v3683
                  %v3685 = vld [vmem:[%s3569 + $0x1c8] sm:$0xff]
                  %3686 = vst [vmem:[%s3570 + $0x1c8] sm:$0xff] %v3685
                  %v3687 = vld [vmem:[%s3569 + $0x1d0] sm:$0xff]
                  %3688 = vst [vmem:[%s3570 + $0x1d0] sm:$0xff] %v3687
                  %v3689 = vld [vmem:[%s3569 + $0x1d8] sm:$0xff]
                  %3690 = vst [vmem:[%s3570 + $0x1d8] sm:$0xff] %v3689
                  %v3691 = vld [vmem:[%s3569 + $0x1e0] sm:$0xff]
                  %3692 = vst [vmem:[%s3570 + $0x1e0] sm:$0xff] %v3691
                  %v3693 = vld [vmem:[%s3569 + $0x1e8] sm:$0xff]
                  %3694 = vst [vmem:[%s3570 + $0x1e8] sm:$0xff] %v3693
                  %v3695 = vld [vmem:[%s3569 + $0x1f0] sm:$0xff]
                  %3696 = vst [vmem:[%s3570 + $0x1f0] sm:$0xff] %v3695
                  %v3697 = vld [vmem:[%s3569 + $0x1f8] sm:$0xff]
                  %3698 = vst [vmem:[%s3570 + $0x1f8] sm:$0xff] %v3697
                  %s3699 = sadd.s32 1, %s3568
                  %p3700 = scmp.ge.s32.totalorder %s3699, %s3561
                  %s3701 = scalar_select %p3700, 0, %s3699
                  %s3702 = smul.u32 %s3701, 512
                  %s3703 = smul.u32 %s3701, 512
                  %s3704 = scalar_lea.vmem %s3369, %s3702 [#allocation2]
                  %s3705 = scalar_lea.vmem %s3380, %s3703
                $region87: #{qnetwork_forward.1} parent=81 // loop_footer
                  %s3565 = sadd.s32 %s3563, 1
                $region88: #{qnetwork_forward.1} parent=81 // loop_footer_branch
                  %3562 = sbr.rel target = $region84
                $region89: #{qnetwork_forward.1} parent=81 // loop_exit
                  _
                %s3706 = sshrl.u32 %s3376, 6
                %s3707 = sand.u32 %s3376, 63
                %s3708 = smul.u32 %s3706, 64
                %s3709 = smul.u32 8, %s3708
                %s3710 = scalar_lea.vmem %s3369, %s3709 [#allocation2]
                %s3711 = smul.u32 8, %s3708
                %s3712 = scalar_lea.vmem %s3380, %s3711
                // While loop
                $region90: #{qnetwork_forward.1} parent=81 // loop_pre_header
                  _
                $region91: #{qnetwork_forward.1} parent=81 // loop_header
                  %s3714 = sphi 0, %s3716
                  %p3715 = scmp.ge.s32.totalorder %s3714, %s3707
                  %s3719 = sphi 0, %s3726
                  %s3720 = sphi %s3710, %s3729
                  %s3721 = sphi %s3712, %s3730
                $region92: #{qnetwork_forward.1} parent=81 // loop_header_branch
                  %3718 = sbr.rel (%p3715) target = $region96
                $region93: #{qnetwork_forward.1} parent=81 // loop_body
                  %v3722 = vld [vmem:[%s3720] sm:$0xff]
                  %3723 = vst [vmem:[%s3721] sm:$0xff] %v3722
                  %s3724 = sadd.s32 1, %s3719
                  %p3725 = scmp.ge.s32.totalorder %s3724, %s3707
                  %s3726 = scalar_select %p3725, 0, %s3724
                  %s3727 = smul.u32 %s3726, 8
                  %s3728 = smul.u32 %s3726, 8
                  %s3729 = scalar_lea.vmem %s3710, %s3727 [#allocation2]
                  %s3730 = scalar_lea.vmem %s3712, %s3728
                $region94: #{qnetwork_forward.1} parent=81 // loop_footer
                  %s3716 = sadd.s32 %s3714, 1
                $region95: #{qnetwork_forward.1} parent=81 // loop_footer_branch
                  %3713 = sbr.rel target = $region91
                $region96: #{qnetwork_forward.1} parent=81 // loop_exit
                  _
              $region82: #{qnetwork_forward.1} parent=59 // pred_fallthru
                _
              // Predicated region
              $region97: #{qnetwork_forward.1} parent=59 // pred_check
                _
              $region98: #{qnetwork_forward.1} parent=59 // pred_check_branch
                %3732 = sbr.rel target = $region100
              $region99: #{qnetwork_forward.1} parent=59 // pred_region
                _
              $region100: #{qnetwork_forward.1} parent=59 // pred_fallthru
                _
            $region60: #{qnetwork_forward.1} parent=55 // pred_fallthru
              _
            // Predicated region
            $region61: #{qnetwork_forward.1} parent=55 // pred_check
              _
            $region62: #{qnetwork_forward.1} parent=55 // pred_check_branch
              %3387 = sbr.rel target = $region64
            $region63: #{qnetwork_forward.1} parent=55 // pred_region
              %s3389 = sshrl.u32 %s3376, 6
              // While loop
              $region65: #{qnetwork_forward.1} parent=63 // loop_pre_header
                _
              $region66: #{qnetwork_forward.1} parent=63 // loop_header
                %s3391 = sphi 0, %s3393
                %p3392 = scmp.ge.s32.totalorder %s3391, %s3389
                %s3396 = sphi 0, %s3529
                %s3397 = sphi %s3369, %s3532
                %s3398 = sphi %s3380, %s3533
              $region67: #{qnetwork_forward.1} parent=63 // loop_header_branch
                %3395 = sbr.rel (%p3392) target = $region71
              $region68: #{qnetwork_forward.1} parent=63 // loop_body
                %v3399 = vld [vmem:[%s3397] sm:$0xff]
                %3400 = vst [vmem:[%s3398] sm:$0xff] %v3399
                %v3401 = vld [vmem:[%s3397 + $0x8] sm:$0xff]
                %3402 = vst [vmem:[%s3398 + $0x8] sm:$0xff] %v3401
                %v3403 = vld [vmem:[%s3397 + $0x10] sm:$0xff]
                %3404 = vst [vmem:[%s3398 + $0x10] sm:$0xff] %v3403
                %v3405 = vld [vmem:[%s3397 + $0x18] sm:$0xff]
                %3406 = vst [vmem:[%s3398 + $0x18] sm:$0xff] %v3405
                %v3407 = vld [vmem:[%s3397 + $0x20] sm:$0xff]
                %3408 = vst [vmem:[%s3398 + $0x20] sm:$0xff] %v3407
                %v3409 = vld [vmem:[%s3397 + $0x28] sm:$0xff]
                %3410 = vst [vmem:[%s3398 + $0x28] sm:$0xff] %v3409
                %v3411 = vld [vmem:[%s3397 + $0x30] sm:$0xff]
                %3412 = vst [vmem:[%s3398 + $0x30] sm:$0xff] %v3411
                %v3413 = vld [vmem:[%s3397 + $0x38] sm:$0xff]
                %3414 = vst [vmem:[%s3398 + $0x38] sm:$0xff] %v3413
                %v3415 = vld [vmem:[%s3397 + $0x40] sm:$0xff]
                %3416 = vst [vmem:[%s3398 + $0x40] sm:$0xff] %v3415
                %v3417 = vld [vmem:[%s3397 + $0x48] sm:$0xff]
                %3418 = vst [vmem:[%s3398 + $0x48] sm:$0xff] %v3417
                %v3419 = vld [vmem:[%s3397 + $0x50] sm:$0xff]
                %3420 = vst [vmem:[%s3398 + $0x50] sm:$0xff] %v3419
                %v3421 = vld [vmem:[%s3397 + $0x58] sm:$0xff]
                %3422 = vst [vmem:[%s3398 + $0x58] sm:$0xff] %v3421
                %v3423 = vld [vmem:[%s3397 + $0x60] sm:$0xff]
                %3424 = vst [vmem:[%s3398 + $0x60] sm:$0xff] %v3423
                %v3425 = vld [vmem:[%s3397 + $0x68] sm:$0xff]
                %3426 = vst [vmem:[%s3398 + $0x68] sm:$0xff] %v3425
                %v3427 = vld [vmem:[%s3397 + $0x70] sm:$0xff]
                %3428 = vst [vmem:[%s3398 + $0x70] sm:$0xff] %v3427
                %v3429 = vld [vmem:[%s3397 + $0x78] sm:$0xff]
                %3430 = vst [vmem:[%s3398 + $0x78] sm:$0xff] %v3429
                %v3431 = vld [vmem:[%s3397 + $0x80] sm:$0xff]
                %3432 = vst [vmem:[%s3398 + $0x80] sm:$0xff] %v3431
                %v3433 = vld [vmem:[%s3397 + $0x88] sm:$0xff]
                %3434 = vst [vmem:[%s3398 + $0x88] sm:$0xff] %v3433
                %v3435 = vld [vmem:[%s3397 + $0x90] sm:$0xff]
                %3436 = vst [vmem:[%s3398 + $0x90] sm:$0xff] %v3435
                %v3437 = vld [vmem:[%s3397 + $0x98] sm:$0xff]
                %3438 = vst [vmem:[%s3398 + $0x98] sm:$0xff] %v3437
                %v3439 = vld [vmem:[%s3397 + $0xa0] sm:$0xff]
                %3440 = vst [vmem:[%s3398 + $0xa0] sm:$0xff] %v3439
                %v3441 = vld [vmem:[%s3397 + $0xa8] sm:$0xff]
                %3442 = vst [vmem:[%s3398 + $0xa8] sm:$0xff] %v3441
                %v3443 = vld [vmem:[%s3397 + $0xb0] sm:$0xff]
                %3444 = vst [vmem:[%s3398 + $0xb0] sm:$0xff] %v3443
                %v3445 = vld [vmem:[%s3397 + $0xb8] sm:$0xff]
                %3446 = vst [vmem:[%s3398 + $0xb8] sm:$0xff] %v3445
                %v3447 = vld [vmem:[%s3397 + $0xc0] sm:$0xff]
                %3448 = vst [vmem:[%s3398 + $0xc0] sm:$0xff] %v3447
                %v3449 = vld [vmem:[%s3397 + $0xc8] sm:$0xff]
                %3450 = vst [vmem:[%s3398 + $0xc8] sm:$0xff] %v3449
                %v3451 = vld [vmem:[%s3397 + $0xd0] sm:$0xff]
                %3452 = vst [vmem:[%s3398 + $0xd0] sm:$0xff] %v3451
                %v3453 = vld [vmem:[%s3397 + $0xd8] sm:$0xff]
                %3454 = vst [vmem:[%s3398 + $0xd8] sm:$0xff] %v3453
                %v3455 = vld [vmem:[%s3397 + $0xe0] sm:$0xff]
                %3456 = vst [vmem:[%s3398 + $0xe0] sm:$0xff] %v3455
                %v3457 = vld [vmem:[%s3397 + $0xe8] sm:$0xff]
                %3458 = vst [vmem:[%s3398 + $0xe8] sm:$0xff] %v3457
                %v3459 = vld [vmem:[%s3397 + $0xf0] sm:$0xff]
                %3460 = vst [vmem:[%s3398 + $0xf0] sm:$0xff] %v3459
                %v3461 = vld [vmem:[%s3397 + $0xf8] sm:$0xff]
                %3462 = vst [vmem:[%s3398 + $0xf8] sm:$0xff] %v3461
                %v3463 = vld [vmem:[%s3397 + $0x100] sm:$0xff]
                %3464 = vst [vmem:[%s3398 + $0x100] sm:$0xff] %v3463
                %v3465 = vld [vmem:[%s3397 + $0x108] sm:$0xff]
                %3466 = vst [vmem:[%s3398 + $0x108] sm:$0xff] %v3465
                %v3467 = vld [vmem:[%s3397 + $0x110] sm:$0xff]
                %3468 = vst [vmem:[%s3398 + $0x110] sm:$0xff] %v3467
                %v3469 = vld [vmem:[%s3397 + $0x118] sm:$0xff]
                %3470 = vst [vmem:[%s3398 + $0x118] sm:$0xff] %v3469
                %v3471 = vld [vmem:[%s3397 + $0x120] sm:$0xff]
                %3472 = vst [vmem:[%s3398 + $0x120] sm:$0xff] %v3471
                %v3473 = vld [vmem:[%s3397 + $0x128] sm:$0xff]
                %3474 = vst [vmem:[%s3398 + $0x128] sm:$0xff] %v3473
                %v3475 = vld [vmem:[%s3397 + $0x130] sm:$0xff]
                %3476 = vst [vmem:[%s3398 + $0x130] sm:$0xff] %v3475
                %v3477 = vld [vmem:[%s3397 + $0x138] sm:$0xff]
                %3478 = vst [vmem:[%s3398 + $0x138] sm:$0xff] %v3477
                %v3479 = vld [vmem:[%s3397 + $0x140] sm:$0xff]
                %3480 = vst [vmem:[%s3398 + $0x140] sm:$0xff] %v3479
                %v3481 = vld [vmem:[%s3397 + $0x148] sm:$0xff]
                %3482 = vst [vmem:[%s3398 + $0x148] sm:$0xff] %v3481
                %v3483 = vld [vmem:[%s3397 + $0x150] sm:$0xff]
                %3484 = vst [vmem:[%s3398 + $0x150] sm:$0xff] %v3483
                %v3485 = vld [vmem:[%s3397 + $0x158] sm:$0xff]
                %3486 = vst [vmem:[%s3398 + $0x158] sm:$0xff] %v3485
                %v3487 = vld [vmem:[%s3397 + $0x160] sm:$0xff]
                %3488 = vst [vmem:[%s3398 + $0x160] sm:$0xff] %v3487
                %v3489 = vld [vmem:[%s3397 + $0x168] sm:$0xff]
                %3490 = vst [vmem:[%s3398 + $0x168] sm:$0xff] %v3489
                %v3491 = vld [vmem:[%s3397 + $0x170] sm:$0xff]
                %3492 = vst [vmem:[%s3398 + $0x170] sm:$0xff] %v3491
                %v3493 = vld [vmem:[%s3397 + $0x178] sm:$0xff]
                %3494 = vst [vmem:[%s3398 + $0x178] sm:$0xff] %v3493
                %v3495 = vld [vmem:[%s3397 + $0x180] sm:$0xff]
                %3496 = vst [vmem:[%s3398 + $0x180] sm:$0xff] %v3495
                %v3497 = vld [vmem:[%s3397 + $0x188] sm:$0xff]
                %3498 = vst [vmem:[%s3398 + $0x188] sm:$0xff] %v3497
                %v3499 = vld [vmem:[%s3397 + $0x190] sm:$0xff]
                %3500 = vst [vmem:[%s3398 + $0x190] sm:$0xff] %v3499
                %v3501 = vld [vmem:[%s3397 + $0x198] sm:$0xff]
                %3502 = vst [vmem:[%s3398 + $0x198] sm:$0xff] %v3501
                %v3503 = vld [vmem:[%s3397 + $0x1a0] sm:$0xff]
                %3504 = vst [vmem:[%s3398 + $0x1a0] sm:$0xff] %v3503
                %v3505 = vld [vmem:[%s3397 + $0x1a8] sm:$0xff]
                %3506 = vst [vmem:[%s3398 + $0x1a8] sm:$0xff] %v3505
                %v3507 = vld [vmem:[%s3397 + $0x1b0] sm:$0xff]
                %3508 = vst [vmem:[%s3398 + $0x1b0] sm:$0xff] %v3507
                %v3509 = vld [vmem:[%s3397 + $0x1b8] sm:$0xff]
                %3510 = vst [vmem:[%s3398 + $0x1b8] sm:$0xff] %v3509
                %v3511 = vld [vmem:[%s3397 + $0x1c0] sm:$0xff]
                %3512 = vst [vmem:[%s3398 + $0x1c0] sm:$0xff] %v3511
                %v3513 = vld [vmem:[%s3397 + $0x1c8] sm:$0xff]
                %3514 = vst [vmem:[%s3398 + $0x1c8] sm:$0xff] %v3513
                %v3515 = vld [vmem:[%s3397 + $0x1d0] sm:$0xff]
                %3516 = vst [vmem:[%s3398 + $0x1d0] sm:$0xff] %v3515
                %v3517 = vld [vmem:[%s3397 + $0x1d8] sm:$0xff]
                %3518 = vst [vmem:[%s3398 + $0x1d8] sm:$0xff] %v3517
                %v3519 = vld [vmem:[%s3397 + $0x1e0] sm:$0xff]
                %3520 = vst [vmem:[%s3398 + $0x1e0] sm:$0xff] %v3519
                %v3521 = vld [vmem:[%s3397 + $0x1e8] sm:$0xff]
                %3522 = vst [vmem:[%s3398 + $0x1e8] sm:$0xff] %v3521
                %v3523 = vld [vmem:[%s3397 + $0x1f0] sm:$0xff]
                %3524 = vst [vmem:[%s3398 + $0x1f0] sm:$0xff] %v3523
                %v3525 = vld [vmem:[%s3397 + $0x1f8] sm:$0xff]
                %3526 = vst [vmem:[%s3398 + $0x1f8] sm:$0xff] %v3525
                %s3527 = sadd.s32 1, %s3396
                %p3528 = scmp.ge.s32.totalorder %s3527, %s3389
                %s3529 = scalar_select %p3528, 0, %s3527
                %s3530 = smul.u32 %s3529, 512
                %s3531 = smul.u32 %s3529, 512
                %s3532 = scalar_lea.vmem %s3369, %s3530 [#allocation2]
                %s3533 = scalar_lea.vmem %s3380, %s3531
              $region69: #{qnetwork_forward.1} parent=63 // loop_footer
                %s3393 = sadd.s32 %s3391, 1
              $region70: #{qnetwork_forward.1} parent=63 // loop_footer_branch
                %3390 = sbr.rel target = $region66
              $region71: #{qnetwork_forward.1} parent=63 // loop_exit
                _
              %s3534 = sshrl.u32 %s3376, 6
              %s3535 = sand.u32 %s3376, 63
              %s3536 = smul.u32 %s3534, 64
              %s3537 = smul.u32 8, %s3536
              %s3538 = scalar_lea.vmem %s3369, %s3537 [#allocation2]
              %s3539 = smul.u32 8, %s3536
              %s3540 = scalar_lea.vmem %s3380, %s3539
              // While loop
              $region72: #{qnetwork_forward.1} parent=63 // loop_pre_header
                _
              $region73: #{qnetwork_forward.1} parent=63 // loop_header
                %s3542 = sphi 0, %s3544
                %p3543 = scmp.ge.s32.totalorder %s3542, %s3535
                %s3547 = sphi 0, %s3554
                %s3548 = sphi %s3538, %s3557
                %s3549 = sphi %s3540, %s3558
              $region74: #{qnetwork_forward.1} parent=63 // loop_header_branch
                %3546 = sbr.rel (%p3543) target = $region78
              $region75: #{qnetwork_forward.1} parent=63 // loop_body
                %v3550 = vld [vmem:[%s3548] sm:$0xff]
                %3551 = vst [vmem:[%s3549] sm:$0xff] %v3550
                %s3552 = sadd.s32 1, %s3547
                %p3553 = scmp.ge.s32.totalorder %s3552, %s3535
                %s3554 = scalar_select %p3553, 0, %s3552
                %s3555 = smul.u32 %s3554, 8
                %s3556 = smul.u32 %s3554, 8
                %s3557 = scalar_lea.vmem %s3538, %s3555 [#allocation2]
                %s3558 = scalar_lea.vmem %s3540, %s3556
              $region76: #{qnetwork_forward.1} parent=63 // loop_footer
                %s3544 = sadd.s32 %s3542, 1
              $region77: #{qnetwork_forward.1} parent=63 // loop_footer_branch
                %3541 = sbr.rel target = $region73
              $region78: #{qnetwork_forward.1} parent=63 // loop_exit
                _
            $region64: #{qnetwork_forward.1} parent=55 // pred_fallthru
              _
          $region56: #{qnetwork_forward.1} parent=51 // pred_fallthru
            _
          %3733 = vnop
        $region52: #{qnetwork_forward.1} parent=47 // pred_fallthru
          _
      $region48: #{qnetwork_forward.1} parent=5 // pred_fallthru
        _
      %p3734 = scmp.le.s32.totalorder 2, %s13
      // Predicated region
      $region101: #{qnetwork_forward.1} parent=5 // pred_check
        %p3735 = pneg %p3734
      $region102: #{qnetwork_forward.1} parent=5 // pred_check_branch
        %3737 = sbr.rel (%p3735) target = $region104
      $region103: #{qnetwork_forward.1} parent=5 // pred_region
        %s3738 = ssub.s32 %s13, 2
        // Predicated region
        $region105: #{qnetwork_forward.1} parent=103 // pred_check
          %p3739 = pneg %p194
        $region106: #{qnetwork_forward.1} parent=103 // pred_check_branch
          %3741 = sbr.rel (%p3739) target = $region108
        $region107: #{qnetwork_forward.1} parent=103 // pred_region
          %s3742 = sand.u32 %s179, 1
          %s3743 = sand.u32 %s179, 1
          %s3744 = smul.addr %s3743, 1024
          %s3745 = scalar_lea.vmem [#allocation2], %s3744
        $region108: #{qnetwork_forward.1} parent=103 // pred_fallthru
          _
      $region104: #{qnetwork_forward.1} parent=5 // pred_fallthru
        _
    $region6: #{qnetwork_forward.1} parent=1 // loop_footer
      %s17 = sadd.s32 1, %s13
    $region7: #{qnetwork_forward.1} parent=1 // loop_footer_branch
      %12 = sbr.rel target = $region3
    $region8: #{qnetwork_forward.1} parent=1 // loop_exit
      _

</llo_original>
